<compile_context>
chip_gen: v7x
topology: tpu7x:2x2x1
jax: 0.10.0
libtpu: 0.0.40
codegen_flags: <defaults>
</compile_context>

<pallas_src>
import functools

import jax
import jax.numpy as jnp
from jax.experimental import pallas as pl
from jax.experimental.pallas import tpu as pltpu


def _round_up(x, m):
    return (x + m - 1) // m * m


# ----------------------------------------------------------------------------
# Pallas kernel: one (direction, time-chunk) grid step of a padded LSTM.
# Grid = (num_dir, nT): direction axis is "parallel" (megacore on v7x),
# time-chunk axis is "arbitrary" (sequential; h/c carried in VMEM scratch).
# ----------------------------------------------------------------------------
def _bidi_lstm_kernel(x_ref, lens_ref, wih_ref, whh_ref, b_ref,
                      y_ref, hn_ref, cn_ref,
                      gx_scr, h_scr, c_scr, *, Tc, Hp, nT, unroll):
    d = pl.program_id(0)            # 0 = forward, 1 = backward
    t = pl.program_id(1)            # time-chunk counter (index_map walks the
                                    # chunks back-to-front when d == 1)

    @pl.when(t == 0)
    def _init():
        h_scr[...] = jnp.zeros_like(h_scr)
        c_scr[...] = jnp.zeros_like(c_scr)

    # ---- per-chunk input projection (one MXU matmul per grid step) --------
    # gx = x_chunk @ W_ih^T + (b_ih + b_hh), accumulated in f32.
    _, Bp, E = x_ref.shape
    x2d = x_ref[...].reshape(Tc * Bp, E)                       # bf16
    gx = jnp.dot(x2d, wih_ref[...], preferred_element_type=jnp.float32)
    gx_scr[...] = gx.reshape(Tc, Bp, 4 * Hp) + b_ref[...]      # (Tc, Bp, 4Hp)

    # Original-order chunk index of this grid step (reversed for d == 1).
    chunk = t + d * (nT - 1 - 2 * t)
    base = chunk * Tc
    lens_v = lens_ref[...]                                     # (Bp, 1) int32

    def sig(z):                     # sigmoid via a single EUP tanh
        return 0.5 * jnp.tanh(0.5 * z) + 0.5

    def step(j, carry):
        # Local time index inside the chunk, in ORIGINAL time order.
        lt = j + d * (Tc - 1 - 2 * j)
        gx_t = gx_scr[lt]                                      # (Bp, 4Hp) f32
        h_prev = h_scr[...]                                    # (Bp, Hp)  f32
        c_prev = c_scr[...]

        # Recurrent projection only (input projection done above).
        gates = gx_t + jnp.dot(h_prev.astype(jnp.bfloat16), whh_ref[...],
                               preferred_element_type=jnp.float32)

        i_g = sig(gates[:, 0 * Hp:1 * Hp])
        f_g = sig(gates[:, 1 * Hp:2 * Hp])
        g_g = jnp.tanh(gates[:, 2 * Hp:3 * Hp])
        o_g = sig(gates[:, 3 * Hp:4 * Hp])

        c_new = f_g * c_prev + i_g * g_g
        h_new = o_g * jnp.tanh(c_new)

        # Packed-sequence semantics: frozen state past each sequence length,
        # zero output at padded positions.
        keep = (base + lt) < lens_v                            # (Bp, 1) bool
        h_scr[...] = jnp.where(keep, h_new, h_prev)
        c_scr[...] = jnp.where(keep, c_new, c_prev)
        y_ref[lt] = jnp.where(keep, h_new, 0.0).astype(y_ref.dtype)
        return carry

    jax.lax.fori_loop(0, Tc, step, 0, unroll=unroll)

    @pl.when(t == nT - 1)
    def _finalize():
        hn_ref[...] = h_scr[...]
        cn_ref[...] = c_scr[...]


def _choose_time_chunk(T, Bp, in_dim, Hp, budget_bytes=20 * 2**20):
    """Pick Tc from a VMEM budget (fits v7x 64 MiB as well as v5e/v6e)."""
    G = 4 * Hp

    def need(Tc):
        return (2 * Tc * Bp * max(in_dim, 128) * 2   # x blocks (bf16, x2 buf)
                + 2 * Tc * Bp * Hp * 2               # y blocks (bf16, x2 buf)
                + Tc * Bp * G * 4                    # gx scratch (f32)
                + 2 * in_dim * G * 2                 # W_ih blocks
                + 2 * Hp * G * 2                     # W_hh blocks
                + 8 * Bp * Hp * 4                    # h/c scratch + hn/cn
                + 512 * 1024)                        # bias/lens/padding slack

    t_cap = max(8, _round_up(T, 8))
    Tc = 8
    for cand in (8, 16, 32, 64, 128, 256):
        if cand <= t_cap and need(cand) <= budget_bytes:
            Tc = cand
    vmem_limit = int(min(max(2 * need(Tc), 32 * 2**20), 48 * 2**20))
    return Tc, vmem_limit


def lstm_layer(x, lens_col, wih_t, whh_t, b, *, Tc, Hp, vmem_limit_bytes):
    """Run all directions of one LSTM layer in a single pallas_call.

    x:        (Tp, Bp, E)           bf16  padded layer input
    lens_col: (Bp, 1)               int32 sequence lengths (0 for pad rows)
    wih_t:    (num_dir, E, 4Hp)     bf16  W_ih^T, gate-padded
    whh_t:    (num_dir, Hp, 4Hp)    bf16  W_hh^T, gate-padded
    b:        (num_dir, 1, 4Hp)     f32   b_ih + b_hh, gate-padded
    returns y (num_dir, Tp, Bp, Hp) bf16 (original time order for both dirs),
            h_n, c_n (num_dir, Bp, Hp) f32
    """
    Tp, Bp, E = x.shape
    num_dir = wih_t.shape[0]
    G = 4 * Hp
    nT = Tp // Tc

    # chunk index: forward d=0 -> t, backward d=1 -> nT-1-t
    x_map = lambda d, t: (t + d * (nT - 1 - 2 * t), 0, 0)
    lens_map = lambda d, t: (0, 0)
    w_map = lambda d, t: (d, 0, 0)
    y_map = lambda d, t: (d, t + d * (nT - 1 - 2 * t), 0, 0)
    hc_map = lambda d, t: (d, 0, 0)

    kernel = functools.partial(_bidi_lstm_kernel, Tc=Tc, Hp=Hp, nT=nT,
                               unroll=min(8, Tc))

    return pl.pallas_call(
        kernel,
        out_shape=(jax.ShapeDtypeStruct((num_dir, Tp, Bp, Hp), jnp.bfloat16),
                   jax.ShapeDtypeStruct((num_dir, Bp, Hp), jnp.float32),
                   jax.ShapeDtypeStruct((num_dir, Bp, Hp), jnp.float32)),
        grid_spec=pltpu.PrefetchScalarGridSpec(
            num_scalar_prefetch=0,
            grid=(num_dir, nT),
            in_specs=[
                pl.BlockSpec((Tc, Bp, E), x_map),       # raw input chunk
                pl.BlockSpec((Bp, 1), lens_map),        # lengths (tiny)
                pl.BlockSpec((None, E, G), w_map),      # W_ih^T (resident)
                pl.BlockSpec((None, Hp, G), w_map),     # W_hh^T (resident)
                pl.BlockSpec((None, 1, G), w_map),      # bias
            ],
            out_specs=[
                pl.BlockSpec((None, Tc, Bp, Hp), y_map),   # per-step outputs
                pl.BlockSpec((None, Bp, Hp), hc_map),      # final h
                pl.BlockSpec((None, Bp, Hp), hc_map),      # final c
            ],
            scratch_shapes=[
                pltpu.VMEM((Tc, Bp, G), jnp.float32),   # gx chunk
                pltpu.VMEM((Bp, Hp), jnp.float32),      # h carry
                pltpu.VMEM((Bp, Hp), jnp.float32),      # c carry
            ],
        ),
        compiler_params=pltpu.CompilerParams(
            dimension_semantics=("parallel", "arbitrary"),
            vmem_limit_bytes=vmem_limit_bytes),
    )(x, lens_col, wih_t, whh_t, b)


# ----------------------------------------------------------------------------
# RNNEncoder parameters (pre-padded / pre-transposed / bf16) + forward.
# ----------------------------------------------------------------------------
def _pad_gates(w, H, Hp):
    """Per-gate zero-pad the leading 4H axis of w to 4Hp (PyTorch [i,f,g,o])."""
    tail = w.shape[1:]
    w4 = w.reshape((4, H) + tail)
    pad = [(0, 0), (0, Hp - H)] + [(0, 0)] * len(tail)
    return jnp.pad(w4, pad).reshape((4 * Hp,) + tail)


def init_rnn_encoder_params(key, vocab_size, embed_size, hidden_size,
                            n_layers, bidirectional):
    num_dir = 2 if bidirectional else 1
    H = hidden_size
    Hp = _round_up(H, 128)

    params = {}
    key, k_emb = jax.random.split(key)
    params["embed"] = 0.1 * jax.random.normal(
        k_emb, (vocab_size, embed_size), jnp.float32)

    layers, raw_layers = [], []
    for layer in range(n_layers):
        in_dim = embed_size if layer == 0 else hidden_size * num_dir
        wih_l, whh_l, b_l, raw_l = [], [], [], []
        for _ in range(num_dir):
            key, k1, k2, k3, k4 = jax.random.split(key, 5)
            w_ih = 0.1 * jax.random.normal(k1, (4 * H, in_dim), jnp.float32)
            w_hh = 0.1 * jax.random.normal(k2, (4 * H, H), jnp.float32)
            b_ih = 0.1 * jax.random.normal(k3, (4 * H,), jnp.float32)
            b_hh = 0.1 * jax.random.normal(k4, (4 * H,), jnp.float32)

            wih_p = _pad_gates(w_ih, H, Hp).T.astype(jnp.bfloat16)   # (in, 4Hp)
            whh_p = jnp.pad(_pad_gates(w_hh, H, Hp),
                            ((0, 0), (0, Hp - H))).T.astype(jnp.bfloat16)
            b_p = _pad_gates(b_ih + b_hh, H, Hp).reshape(1, 4 * Hp)

            wih_l.append(wih_p)
            whh_l.append(whh_p)
            b_l.append(b_p)
            raw_l.append({"w_ih": w_ih, "w_hh": w_hh, "b": b_ih + b_hh})
        layers.append({"wih_t": jnp.stack(wih_l, 0),
                       "whh_t": jnp.stack(whh_l, 0),
                       "b": jnp.stack(b_l, 0).astype(jnp.float32)})
        raw_layers.append(raw_l)
    params["lstm"] = layers
    params["raw"] = raw_layers            # unpadded f32 copies (reference only)
    return params


def rnn_encoder_forward(params, batch, lens, *, n_layers, bidirectional,
                        hidden_size):
    """batch: (B, T) int32; lens: per-sequence lengths (sorted descending).

    Returns (output, (h_n, c_n)) mirroring the PyTorch module:
      output: (B, max(lens), H * num_dir), padded positions zero.
      h_n, c_n: (n_layers * num_dir, B, H)
    """
    num_dir = 2 if bidirectional else 1
    H = hidden_size
    Hp = _round_up(H, 128)
    lens_arr = jnp.asarray(lens, jnp.int32)

    # Embedding lookup (gather = glue).  NOTE: embed_dropout is defined but
    # never applied in the reference forward(), so it is omitted here.
    emb = params["embed"][batch]                              # (B, T, E)
    x = jnp.transpose(emb, (1, 0, 2))                         # (T, B, E)
    T, B, E = x.shape

    Bp = _round_up(B, 8)
    Tc, vmem_limit = _choose_time_chunk(T, Bp, max(E, H * num_dir), Hp)
    Tp = _round_up(T, Tc)

    lens_col = jnp.pad(lens_arr, (0, Bp - B)).reshape(Bp, 1)   # pad rows: 0
    layer_in = jnp.pad(x, ((0, Tp - T), (0, Bp - B), (0, 0))).astype(jnp.bfloat16)

    h_list, c_list = [], []
    for layer in range(n_layers):
        w = params["lstm"][layer]
        y, hn, cn = lstm_layer(layer_in, lens_col, w["wih_t"], w["whh_t"],
                               w["b"], Tc=Tc, Hp=Hp,
                               vmem_limit_bytes=vmem_limit)
        for d in range(num_dir):
            h_list.append(hn[d, :B, :H])
            c_list.append(cn[d, :B, :H])
        layer_in = (jnp.concatenate([y[d, :, :, :H] for d in range(num_dir)],
                                    axis=-1)
                    if num_dir == 2 else y[0, :, :, :H])

    max_len = int(max(lens))   # pad_packed_sequence pads to the batch max len
    output = jnp.transpose(layer_in[:, :B].astype(jnp.float32),
                           (1, 0, 2))[:, :max_len]
    h_n = jnp.stack(h_list, axis=0)                            # (L*dir, B, H)
    c_n = jnp.stack(c_list, axis=0)
    return output, (h_n, c_n)


# ----------------------------------------------------------------------------
# Pure-JAX f32 reference (packed-sequence LSTM), used only for validation.
# ----------------------------------------------------------------------------
def _reference_forward(params, batch, lens, *, n_layers, bidirectional,
                       hidden_size):
    num_dir = 2 if bidirectional else 1
    H = hidden_size
    lens_arr = jnp.asarray(lens, jnp.int32)
    emb = params["embed"][batch]
    x = jnp.transpose(emb, (1, 0, 2)).astype(jnp.float32)      # (T, B, E)
    T, B, _ = x.shape
    mask = (jnp.arange(T)[:, None] < lens_arr[None, :]).astype(jnp.float32)

    def run_dir(x_in, w_ih, w_hh, b, reverse):
        def step(carry, inp):
            h, c = carry
            x_t, m_t = inp
            g = x_t @ w_ih.T + h @ w_hh.T + b
            i = jax.nn.sigmoid(g[:, :H])
            f = jax.nn.sigmoid(g[:, H:2 * H])
            gg = jnp.tanh(g[:, 2 * H:3 * H])
            o = jax.nn.sigmoid(g[:, 3 * H:])
            c_new = f * c + i * gg
            h_new = o * jnp.tanh(c_new)
            m = m_t[:, None]
            return (m * h_new + (1 - m) * h, m * c_new + (1 - m) * c), m * h_new

        xs = (x_in[::-1], mask[::-1]) if reverse else (x_in, mask)
        (hf, cf), ys = jax.lax.scan(
            step, (jnp.zeros((B, H)), jnp.zeros((B, H))), xs)
        if reverse:
            ys = ys[::-1]
        return ys, hf, cf

    h_list, c_list = [], []
    layer_in = x
    for layer in range(n_layers):
        outs = []
        for d in range(num_dir):
            r = params["raw"][layer][d]
            y, hf, cf = run_dir(layer_in, r["w_ih"], r["w_hh"], r["b"],
                                reverse=(d == 1))
            outs.append(y)
            h_list.append(hf)
            c_list.append(cf)
        layer_in = jnp.concatenate(outs, -1) if num_dir == 2 else outs[0]
    max_len = int(max(lens))
    output = jnp.transpose(layer_in, (1, 0, 2))[:, :max_len]
    return output, (jnp.stack(h_list, 0), jnp.stack(c_list, 0))


if __name__ == "__main__":
    # Small deterministic example consistent with the module.
    vocab = list(range(50))          # len(vocab) = 50
    embed_size = 16
    hidden_size = 32
    n_layers = 2
    bidirectional = True
    dropout = 0.1                    # defined but unused in forward()

    B, T = 2, 8
    lens = [8, 5]                    # sorted descending (pack_padded requirement)

    key = jax.random.PRNGKey(0)
    key, k_tok = jax.random.split(key)
    batch = jax.random.randint(k_tok, (B, T), 0, len(vocab), dtype=jnp.int32)

    params = init_rnn_encoder_params(
        key, len(vocab), embed_size, hidden_size, n_layers, bidirectional)

    output, (h_n, c_n) = rnn_encoder_forward(
        params, batch, lens, n_layers=n_layers, bidirectional=bidirectional,
        hidden_size=hidden_size)
    jax.block_until_ready((output, h_n, c_n))

    num_dir = 2 if bidirectional else 1
    assert output.shape == (B, max(lens), hidden_size * num_dir)
    assert h_n.shape == (n_layers * num_dir, B, hidden_size)
    assert c_n.shape == (n_layers * num_dir, B, hidden_size)
    # padded positions of the shorter sequence must be exactly zero
    assert float(jnp.abs(output[1, lens[1]:]).max()) == 0.0

    # numerical check vs. pure-JAX f32 reference (bf16 matmuls -> loose tol)
    ref_out, (ref_h, ref_c) = _reference_forward(
        params, batch, lens, n_layers=n_layers, bidirectional=bidirectional,
        hidden_size=hidden_size)
    assert float(jnp.abs(output - ref_out).max()) < 3e-2
    assert float(jnp.abs(h_n - ref_h).max()) < 3e-2
    assert float(jnp.abs(c_n - ref_c).max()) < 3e-2

    print("KERNEL_OK")
</pallas_src>

<mosaic_0001>
module attributes {stable_mosaic.version = 11 : i64} {
  func.func @_bidi_lstm_kernel(%arg0: i32, %arg1: i32, %arg2: memref<8x8x16xbf16, #tpu.memory_space<vmem>>, %arg3: memref<8x1xi32, #tpu.memory_space<vmem>>, %arg4: memref<1x16x512xbf16, #tpu.memory_space<vmem>>, %arg5: memref<1x128x512xbf16, #tpu.memory_space<vmem>>, %arg6: memref<1x1x512xf32, #tpu.memory_space<vmem>>, %arg7: memref<1x8x8x128xbf16, #tpu.memory_space<vmem>>, %arg8: memref<1x8x128xf32, #tpu.memory_space<vmem>>, %arg9: memref<1x8x128xf32, #tpu.memory_space<vmem>>, %arg10: memref<8x8x512xf32, #tpu.memory_space<vmem>>, %arg11: memref<8x128xf32, #tpu.memory_space<vmem>>, %arg12: memref<8x128xf32, #tpu.memory_space<vmem>>) attributes {dimension_semantics = [#tpu.dimension_semantics<parallel>, #tpu.dimension_semantics<arbitrary>], iteration_bounds = array<i64: 2, 1>, scalar_prefetch = 0 : i64, scratch_operands = 3 : i64, tpu.core_type = #tpu.core_type<tc>, window_params = [{transform_indices = @transform_0, window_bounds = array<i64: 8, 8, 16>}, {pipeline_mode = #tpu.pipeline_mode<synchronous>, transform_indices = @transform_1, window_bounds = array<i64: 8, 1>}, {transform_indices = @transform_2, window_bounds = array<i64: 1, 16, 512>}, {transform_indices = @transform_3, window_bounds = array<i64: 1, 128, 512>}, {transform_indices = @transform_4, window_bounds = array<i64: 1, 1, 512>}, {transform_indices = @transform_5, window_bounds = array<i64: 1, 8, 8, 128>}, {transform_indices = @transform_6, window_bounds = array<i64: 1, 8, 128>}, {transform_indices = @transform_7, window_bounds = array<i64: 1, 8, 128>}]} {
    %c0_i32 = arith.constant 0 : i32
    %0 = arith.cmpi eq, %arg1, %c0_i32 : i32
    %1 = arith.extui %0 : i1 to i32
    %c0_i32_0 = arith.constant 0 : i32
    %2 = arith.cmpi ne, %1, %c0_i32_0 : i32
    scf.if %2 {
      %cst_252 = arith.constant 0.000000e+00 : f32
      %544 = vector.broadcast %cst_252 : f32 to vector<8x128xf32>
      %c0_253 = arith.constant 0 : index
      %c0_254 = arith.constant 0 : index
      %545 = vector.load %arg11[%c0_253, %c0_254] : memref<8x128xf32, #tpu.memory_space<vmem>>, vector<8x128xf32>
      tpu.vector_store %arg11[%c0_253, %c0_254], %544 {strides = array<i32>} : memref<8x128xf32, #tpu.memory_space<vmem>>, vector<8x128xf32>,
      %cst_255 = arith.constant 0.000000e+00 : f32
      %546 = vector.broadcast %cst_255 : f32 to vector<8x128xf32>
      %c0_256 = arith.constant 0 : index
      %c0_257 = arith.constant 0 : index
      %547 = vector.load %arg12[%c0_256, %c0_257] : memref<8x128xf32, #tpu.memory_space<vmem>>, vector<8x128xf32>
      tpu.vector_store %arg12[%c0_256, %c0_257], %546 {strides = array<i32>} : memref<8x128xf32, #tpu.memory_space<vmem>>, vector<8x128xf32>,
    } else {
    }
    %c0 = arith.constant 0 : index
    %c0_1 = arith.constant 0 : index
    %c0_2 = arith.constant 0 : index
    %3 = vector.load %arg2[%c0, %c0_1, %c0_2] : memref<8x8x16xbf16, #tpu.memory_space<vmem>>, vector<8x8x16xbf16>
    %4 = vector.shape_cast %3 : vector<8x8x16xbf16> to vector<64x16xbf16>
    %c0_3 = arith.constant 0 : index
    %c0_4 = arith.constant 0 : index
    %c0_5 = arith.constant 0 : index
    %5 = vector.load %arg4[%c0_3, %c0_4, %c0_5] : memref<1x16x512xbf16, #tpu.memory_space<vmem>>, vector<1x16x512xbf16>
    %6 = vector.shape_cast %5 : vector<1x16x512xbf16> to vector<16x512xbf16>
    %cst = arith.constant dense<0.000000e+00> : vector<64x512xf32>
    %7 = tpu.matmul %4, %6, %cst {dimension_numbers = #tpu.dot_dimension_numbers<[1], [0], [0], [1], [0, 0, 1, 1], [], []>} : vector<64x16xbf16>, vector<16x512xbf16>, vector<64x512xf32> -> vector<64x512xf32>
    %8 = vector.shape_cast %7 : vector<64x512xf32> to vector<8x8x512xf32>
    %c0_6 = arith.constant 0 : index
    %c0_7 = arith.constant 0 : index
    %c0_8 = arith.constant 0 : index
    %9 = vector.load %arg6[%c0_6, %c0_7, %c0_8] : memref<1x1x512xf32, #tpu.memory_space<vmem>>, vector<1x1x512xf32>
    %10 = vector.shape_cast %9 : vector<1x1x512xf32> to vector<1x512xf32>
    %11 = vector.shape_cast %10 : vector<1x512xf32> to vector<1x1x512xf32>
    %12 = vector.broadcast %11 : vector<1x1x512xf32> to vector<8x8x512xf32>
    %13 = arith.addf %8, %12 : vector<8x8x512xf32>
    %c0_9 = arith.constant 0 : index
    %c0_10 = arith.constant 0 : index
    %c0_11 = arith.constant 0 : index
    %14 = vector.load %arg10[%c0_9, %c0_10, %c0_11] : memref<8x8x512xf32, #tpu.memory_space<vmem>>, vector<8x8x512xf32>
    tpu.vector_store %arg10[%c0_9, %c0_10, %c0_11], %13 {strides = array<i32>} : memref<8x8x512xf32, #tpu.memory_space<vmem>>, vector<8x8x512xf32>,
    %c2_i32 = arith.constant 2 : i32
    %15 = arith.muli %c2_i32, %arg1 : i32
    %c0_i32_12 = arith.constant 0 : i32
    %16 = arith.subi %c0_i32_12, %15 : i32
    %17 = arith.muli %arg0, %16 : i32
    %18 = arith.addi %arg1, %17 : i32
    %c8_i32 = arith.constant 8 : i32
    %19 = arith.muli %18, %c8_i32 : i32
    %c0_13 = arith.constant 0 : index
    %c0_14 = arith.constant 0 : index
    %20 = vector.load %arg3[%c0_13, %c0_14] : memref<8x1xi32, #tpu.memory_space<vmem>>, vector<8x1xi32>
    %c0_i32_15 = arith.constant 0 : i32
    %c2_i32_16 = arith.constant 2 : i32
    %21 = arith.muli %c2_i32_16, %c0_i32_15 : i32
    %c7_i32 = arith.constant 7 : i32
    %22 = arith.subi %c7_i32, %21 : i32
    %23 = arith.muli %arg0, %22 : i32
    %24 = arith.addi %c0_i32_15, %23 : i32
    %25 = arith.index_cast %24 : i32 to index
    %c0_17 = arith.constant 0 : index
    %c0_18 = arith.constant 0 : index
    %26 = vector.load %arg10[%25, %c0_17, %c0_18] : memref<8x8x512xf32, #tpu.memory_space<vmem>>, vector<1x8x512xf32>
    %27 = vector.shape_cast %26 : vector<1x8x512xf32> to vector<8x512xf32>
    %c0_19 = arith.constant 0 : index
    %c0_20 = arith.constant 0 : index
    %28 = vector.load %arg11[%c0_19, %c0_20] : memref<8x128xf32, #tpu.memory_space<vmem>>, vector<8x128xf32>
    %c0_21 = arith.constant 0 : index
    %c0_22 = arith.constant 0 : index
    %29 = vector.load %arg12[%c0_21, %c0_22] : memref<8x128xf32, #tpu.memory_space<vmem>>, vector<8x128xf32>
    %30 = arith.truncf %28 : vector<8x128xf32> to vector<8x128xbf16>
    %c0_23 = arith.constant 0 : index
    %c0_24 = arith.constant 0 : index
    %c0_25 = arith.constant 0 : index
    %31 = vector.load %arg5[%c0_23, %c0_24, %c0_25] : memref<1x128x512xbf16, #tpu.memory_space<vmem>>, vector<1x128x512xbf16>
    %32 = vector.shape_cast %31 : vector<1x128x512xbf16> to vector<128x512xbf16>
    %cst_26 = arith.constant dense<0.000000e+00> : vector<8x512xf32>
    %33 = tpu.matmul %30, %32, %cst_26 {dimension_numbers = #tpu.dot_dimension_numbers<[1], [0], [0], [1], [0, 0, 1, 1], [], []>} : vector<8x128xbf16>, vector<128x512xbf16>, vector<8x512xf32> -> vector<8x512xf32>
    %34 = arith.addf %27, %33 : vector<8x512xf32>
    %35 = vector.extract_strided_slice %34 {offsets = [0, 0], sizes = [8, 128], strides = [1, 1]} : vector<8x512xf32> to vector<8x128xf32>
    %cst_27 = arith.constant 5.000000e-01 : f32
    %36 = vector.broadcast %cst_27 : f32 to vector<8x128xf32>
    %37 = arith.mulf %36, %35 : vector<8x128xf32>
    %38 = math.tanh %37 : vector<8x128xf32>
    %cst_28 = arith.constant 5.000000e-01 : f32
    %39 = vector.broadcast %cst_28 : f32 to vector<8x128xf32>
    %40 = arith.mulf %39, %38 : vector<8x128xf32>
    %cst_29 = arith.constant 5.000000e-01 : f32
    %41 = vector.broadcast %cst_29 : f32 to vector<8x128xf32>
    %42 = arith.addf %40, %41 : vector<8x128xf32>
    %43 = vector.extract_strided_slice %34 {offsets = [0, 128], sizes = [8, 128], strides = [1, 1]} : vector<8x512xf32> to vector<8x128xf32>
    %cst_30 = arith.constant 5.000000e-01 : f32
    %44 = vector.broadcast %cst_30 : f32 to vector<8x128xf32>
    %45 = arith.mulf %44, %43 : vector<8x128xf32>
    %46 = math.tanh %45 : vector<8x128xf32>
    %cst_31 = arith.constant 5.000000e-01 : f32
    %47 = vector.broadcast %cst_31 : f32 to vector<8x128xf32>
    %48 = arith.mulf %47, %46 : vector<8x128xf32>
    %cst_32 = arith.constant 5.000000e-01 : f32
    %49 = vector.broadcast %cst_32 : f32 to vector<8x128xf32>
    %50 = arith.addf %48, %49 : vector<8x128xf32>
    %51 = vector.extract_strided_slice %34 {offsets = [0, 256], sizes = [8, 128], strides = [1, 1]} : vector<8x512xf32> to vector<8x128xf32>
    %52 = math.tanh %51 : vector<8x128xf32>
    %53 = vector.extract_strided_slice %34 {offsets = [0, 384], sizes = [8, 128], strides = [1, 1]} : vector<8x512xf32> to vector<8x128xf32>
    %cst_33 = arith.constant 5.000000e-01 : f32
    %54 = vector.broadcast %cst_33 : f32 to vector<8x128xf32>
    %55 = arith.mulf %54, %53 : vector<8x128xf32>
    %56 = math.tanh %55 : vector<8x128xf32>
    %cst_34 = arith.constant 5.000000e-01 : f32
    %57 = vector.broadcast %cst_34 : f32 to vector<8x128xf32>
    %58 = arith.mulf %57, %56 : vector<8x128xf32>
    %cst_35 = arith.constant 5.000000e-01 : f32
    %59 = vector.broadcast %cst_35 : f32 to vector<8x128xf32>
    %60 = arith.addf %58, %59 : vector<8x128xf32>
    %61 = arith.mulf %50, %29 : vector<8x128xf32>
    %62 = arith.mulf %42, %52 : vector<8x128xf32>
    %63 = arith.addf %61, %62 : vector<8x128xf32>
    %64 = math.tanh %63 : vector<8x128xf32>
    %65 = arith.mulf %60, %64 : vector<8x128xf32>
    %66 = arith.addi %19, %24 : i32
    %67 = vector.broadcast %66 : i32 to vector<8x1xi32>
    %68 = arith.cmpi slt, %67, %20 : vector<8x1xi32>
    %69 = vector.shape_cast %68 : vector<8x1xi1> to vector<8x1xi1>
    %70 = vector.broadcast %69 : vector<8x1xi1> to vector<8x128xi1>
    %71 = arith.select %70, %65, %28 : vector<8x128xi1>, vector<8x128xf32>
    %c0_36 = arith.constant 0 : index
    %c0_37 = arith.constant 0 : index
    %72 = vector.load %arg11[%c0_36, %c0_37] : memref<8x128xf32, #tpu.memory_space<vmem>>, vector<8x128xf32>
    tpu.vector_store %arg11[%c0_36, %c0_37], %71 {strides = array<i32>} : memref<8x128xf32, #tpu.memory_space<vmem>>, vector<8x128xf32>,
    %73 = vector.shape_cast %68 : vector<8x1xi1> to vector<8x1xi1>
    %74 = vector.broadcast %73 : vector<8x1xi1> to vector<8x128xi1>
    %75 = arith.select %74, %63, %29 : vector<8x128xi1>, vector<8x128xf32>
    %c0_38 = arith.constant 0 : index
    %c0_39 = arith.constant 0 : index
    %76 = vector.load %arg12[%c0_38, %c0_39] : memref<8x128xf32, #tpu.memory_space<vmem>>, vector<8x128xf32>
    tpu.vector_store %arg12[%c0_38, %c0_39], %75 {strides = array<i32>} : memref<8x128xf32, #tpu.memory_space<vmem>>, vector<8x128xf32>,
    %cst_40 = arith.constant 0.000000e+00 : f32
    %77 = vector.shape_cast %68 : vector<8x1xi1> to vector<8x1xi1>
    %78 = vector.broadcast %77 : vector<8x1xi1> to vector<8x128xi1>
    %79 = vector.broadcast %cst_40 : f32 to vector<8x128xf32>
    %80 = arith.select %78, %65, %79 : vector<8x128xi1>, vector<8x128xf32>
    %81 = arith.truncf %80 : vector<8x128xf32> to vector<8x128xbf16>
    %c0_41 = arith.constant 0 : index
    %82 = arith.index_cast %24 : i32 to index
    %c0_42 = arith.constant 0 : index
    %c0_43 = arith.constant 0 : index
    %83 = vector.load %arg7[%c0_41, %82, %c0_42, %c0_43] : memref<1x8x8x128xbf16, #tpu.memory_space<vmem>>, vector<1x1x8x128xbf16>
    %84 = vector.shape_cast %83 : vector<1x1x8x128xbf16> to vector<8x128xbf16>
    %85 = vector.shape_cast %81 : vector<8x128xbf16> to vector<1x1x8x128xbf16>
    tpu.vector_store %arg7[%c0_41, %82, %c0_42, %c0_43], %85 {strides = array<i32>} : memref<1x8x8x128xbf16, #tpu.memory_space<vmem>>, vector<1x1x8x128xbf16>,
    %c1_i32 = arith.constant 1 : i32
    %c2_i32_44 = arith.constant 2 : i32
    %86 = arith.muli %c2_i32_44, %c1_i32 : i32
    %c7_i32_45 = arith.constant 7 : i32
    %87 = arith.subi %c7_i32_45, %86 : i32
    %88 = arith.muli %arg0, %87 : i32
    %89 = arith.addi %c1_i32, %88 : i32
    %90 = arith.index_cast %89 : i32 to index
    %c0_46 = arith.constant 0 : index
    %c0_47 = arith.constant 0 : index
    %91 = vector.load %arg10[%90, %c0_46, %c0_47] : memref<8x8x512xf32, #tpu.memory_space<vmem>>, vector<1x8x512xf32>
    %92 = vector.shape_cast %91 : vector<1x8x512xf32> to vector<8x512xf32>
    %c0_48 = arith.constant 0 : index
    %c0_49 = arith.constant 0 : index
    %93 = vector.load %arg11[%c0_48, %c0_49] : memref<8x128xf32, #tpu.memory_space<vmem>>, vector<8x128xf32>
    %c0_50 = arith.constant 0 : index
    %c0_51 = arith.constant 0 : index
    %94 = vector.load %arg12[%c0_50, %c0_51] : memref<8x128xf32, #tpu.memory_space<vmem>>, vector<8x128xf32>
    %95 = arith.truncf %93 : vector<8x128xf32> to vector<8x128xbf16>
    %c0_52 = arith.constant 0 : index
    %c0_53 = arith.constant 0 : index
    %c0_54 = arith.constant 0 : index
    %96 = vector.load %arg5[%c0_52, %c0_53, %c0_54] : memref<1x128x512xbf16, #tpu.memory_space<vmem>>, vector<1x128x512xbf16>
    %97 = vector.shape_cast %96 : vector<1x128x512xbf16> to vector<128x512xbf16>
    %cst_55 = arith.constant dense<0.000000e+00> : vector<8x512xf32>
    %98 = tpu.matmul %95, %97, %cst_55 {dimension_numbers = #tpu.dot_dimension_numbers<[1], [0], [0], [1], [0, 0, 1, 1], [], []>} : vector<8x128xbf16>, vector<128x512xbf16>, vector<8x512xf32> -> vector<8x512xf32>
    %99 = arith.addf %92, %98 : vector<8x512xf32>
    %100 = vector.extract_strided_slice %99 {offsets = [0, 0], sizes = [8, 128], strides = [1, 1]} : vector<8x512xf32> to vector<8x128xf32>
    %cst_56 = arith.constant 5.000000e-01 : f32
    %101 = vector.broadcast %cst_56 : f32 to vector<8x128xf32>
    %102 = arith.mulf %101, %100 : vector<8x128xf32>
    %103 = math.tanh %102 : vector<8x128xf32>
    %cst_57 = arith.constant 5.000000e-01 : f32
    %104 = vector.broadcast %cst_57 : f32 to vector<8x128xf32>
    %105 = arith.mulf %104, %103 : vector<8x128xf32>
    %cst_58 = arith.constant 5.000000e-01 : f32
    %106 = vector.broadcast %cst_58 : f32 to vector<8x128xf32>
    %107 = arith.addf %105, %106 : vector<8x128xf32>
    %108 = vector.extract_strided_slice %99 {offsets = [0, 128], sizes = [8, 128], strides = [1, 1]} : vector<8x512xf32> to vector<8x128xf32>
    %cst_59 = arith.constant 5.000000e-01 : f32
    %109 = vector.broadcast %cst_59 : f32 to vector<8x128xf32>
    %110 = arith.mulf %109, %108 : vector<8x128xf32>
    %111 = math.tanh %110 : vector<8x128xf32>
    %cst_60 = arith.constant 5.000000e-01 : f32
    %112 = vector.broadcast %cst_60 : f32 to vector<8x128xf32>
    %113 = arith.mulf %112, %111 : vector<8x128xf32>
    %cst_61 = arith.constant 5.000000e-01 : f32
    %114 = vector.broadcast %cst_61 : f32 to vector<8x128xf32>
    %115 = arith.addf %113, %114 : vector<8x128xf32>
    %116 = vector.extract_strided_slice %99 {offsets = [0, 256], sizes = [8, 128], strides = [1, 1]} : vector<8x512xf32> to vector<8x128xf32>
    %117 = math.tanh %116 : vector<8x128xf32>
    %118 = vector.extract_strided_slice %99 {offsets = [0, 384], sizes = [8, 128], strides = [1, 1]} : vector<8x512xf32> to vector<8x128xf32>
    %cst_62 = arith.constant 5.000000e-01 : f32
    %119 = vector.broadcast %cst_62 : f32 to vector<8x128xf32>
    %120 = arith.mulf %119, %118 : vector<8x128xf32>
    %121 = math.tanh %120 : vector<8x128xf32>
    %cst_63 = arith.constant 5.000000e-01 : f32
    %122 = vector.broadcast %cst_63 : f32 to vector<8x128xf32>
    %123 = arith.mulf %122, %121 : vector<8x128xf32>
    %cst_64 = arith.constant 5.000000e-01 : f32
    %124 = vector.broadcast %cst_64 : f32 to vector<8x128xf32>
    %125 = arith.addf %123, %124 : vector<8x128xf32>
    %126 = arith.mulf %115, %94 : vector<8x128xf32>
    %127 = arith.mulf %107, %117 : vector<8x128xf32>
    %128 = arith.addf %126, %127 : vector<8x128xf32>
    %129 = math.tanh %128 : vector<8x128xf32>
    %130 = arith.mulf %125, %129 : vector<8x128xf32>
    %131 = arith.addi %19, %89 : i32
    %132 = vector.broadcast %131 : i32 to vector<8x1xi32>
    %133 = arith.cmpi slt, %132, %20 : vector<8x1xi32>
    %134 = vector.shape_cast %133 : vector<8x1xi1> to vector<8x1xi1>
    %135 = vector.broadcast %134 : vector<8x1xi1> to vector<8x128xi1>
    %136 = arith.select %135, %130, %93 : vector<8x128xi1>, vector<8x128xf32>
    %c0_65 = arith.constant 0 : index
    %c0_66 = arith.constant 0 : index
    %137 = vector.load %arg11[%c0_65, %c0_66] : memref<8x128xf32, #tpu.memory_space<vmem>>, vector<8x128xf32>
    tpu.vector_store %arg11[%c0_65, %c0_66], %136 {strides = array<i32>} : memref<8x128xf32, #tpu.memory_space<vmem>>, vector<8x128xf32>,
    %138 = vector.shape_cast %133 : vector<8x1xi1> to vector<8x1xi1>
    %139 = vector.broadcast %138 : vector<8x1xi1> to vector<8x128xi1>
    %140 = arith.select %139, %128, %94 : vector<8x128xi1>, vector<8x128xf32>
    %c0_67 = arith.constant 0 : index
    %c0_68 = arith.constant 0 : index
    %141 = vector.load %arg12[%c0_67, %c0_68] : memref<8x128xf32, #tpu.memory_space<vmem>>, vector<8x128xf32>
    tpu.vector_store %arg12[%c0_67, %c0_68], %140 {strides = array<i32>} : memref<8x128xf32, #tpu.memory_space<vmem>>, vector<8x128xf32>,
    %cst_69 = arith.constant 0.000000e+00 : f32
    %142 = vector.shape_cast %133 : vector<8x1xi1> to vector<8x1xi1>
    %143 = vector.broadcast %142 : vector<8x1xi1> to vector<8x128xi1>
    %144 = vector.broadcast %cst_69 : f32 to vector<8x128xf32>
    %145 = arith.select %143, %130, %144 : vector<8x128xi1>, vector<8x128xf32>
    %146 = arith.truncf %145 : vector<8x128xf32> to vector<8x128xbf16>
    %c0_70 = arith.constant 0 : index
    %147 = arith.index_cast %89 : i32 to index
    %c0_71 = arith.constant 0 : index
    %c0_72 = arith.constant 0 : index
    %148 = vector.load %arg7[%c0_70, %147, %c0_71, %c0_72] : memref<1x8x8x128xbf16, #tpu.memory_space<vmem>>, vector<1x1x8x128xbf16>
    %149 = vector.shape_cast %148 : vector<1x1x8x128xbf16> to vector<8x128xbf16>
    %150 = vector.shape_cast %146 : vector<8x128xbf16> to vector<1x1x8x128xbf16>
    tpu.vector_store %arg7[%c0_70, %147, %c0_71, %c0_72], %150 {strides = array<i32>} : memref<1x8x8x128xbf16, #tpu.memory_space<vmem>>, vector<1x1x8x128xbf16>,
    %c2_i32_73 = arith.constant 2 : i32
    %c2_i32_74 = arith.constant 2 : i32
    %151 = arith.muli %c2_i32_74, %c2_i32_73 : i32
    %c7_i32_75 = arith.constant 7 : i32
    %152 = arith.subi %c7_i32_75, %151 : i32
    %153 = arith.muli %arg0, %152 : i32
    %154 = arith.addi %c2_i32_73, %153 : i32
    %155 = arith.index_cast %154 : i32 to index
    %c0_76 = arith.constant 0 : index
    %c0_77 = arith.constant 0 : index
    %156 = vector.load %arg10[%155, %c0_76, %c0_77] : memref<8x8x512xf32, #tpu.memory_space<vmem>>, vector<1x8x512xf32>
    %157 = vector.shape_cast %156 : vector<1x8x512xf32> to vector<8x512xf32>
    %c0_78 = arith.constant 0 : index
    %c0_79 = arith.constant 0 : index
    %158 = vector.load %arg11[%c0_78, %c0_79] : memref<8x128xf32, #tpu.memory_space<vmem>>, vector<8x128xf32>
    %c0_80 = arith.constant 0 : index
    %c0_81 = arith.constant 0 : index
    %159 = vector.load %arg12[%c0_80, %c0_81] : memref<8x128xf32, #tpu.memory_space<vmem>>, vector<8x128xf32>
    %160 = arith.truncf %158 : vector<8x128xf32> to vector<8x128xbf16>
    %c0_82 = arith.constant 0 : index
    %c0_83 = arith.constant 0 : index
    %c0_84 = arith.constant 0 : index
    %161 = vector.load %arg5[%c0_82, %c0_83, %c0_84] : memref<1x128x512xbf16, #tpu.memory_space<vmem>>, vector<1x128x512xbf16>
    %162 = vector.shape_cast %161 : vector<1x128x512xbf16> to vector<128x512xbf16>
    %cst_85 = arith.constant dense<0.000000e+00> : vector<8x512xf32>
    %163 = tpu.matmul %160, %162, %cst_85 {dimension_numbers = #tpu.dot_dimension_numbers<[1], [0], [0], [1], [0, 0, 1, 1], [], []>} : vector<8x128xbf16>, vector<128x512xbf16>, vector<8x512xf32> -> vector<8x512xf32>
    %164 = arith.addf %157, %163 : vector<8x512xf32>
    %165 = vector.extract_strided_slice %164 {offsets = [0, 0], sizes = [8, 128], strides = [1, 1]} : vector<8x512xf32> to vector<8x128xf32>
    %cst_86 = arith.constant 5.000000e-01 : f32
    %166 = vector.broadcast %cst_86 : f32 to vector<8x128xf32>
    %167 = arith.mulf %166, %165 : vector<8x128xf32>
    %168 = math.tanh %167 : vector<8x128xf32>
    %cst_87 = arith.constant 5.000000e-01 : f32
    %169 = vector.broadcast %cst_87 : f32 to vector<8x128xf32>
    %170 = arith.mulf %169, %168 : vector<8x128xf32>
    %cst_88 = arith.constant 5.000000e-01 : f32
    %171 = vector.broadcast %cst_88 : f32 to vector<8x128xf32>
    %172 = arith.addf %170, %171 : vector<8x128xf32>
    %173 = vector.extract_strided_slice %164 {offsets = [0, 128], sizes = [8, 128], strides = [1, 1]} : vector<8x512xf32> to vector<8x128xf32>
    %cst_89 = arith.constant 5.000000e-01 : f32
    %174 = vector.broadcast %cst_89 : f32 to vector<8x128xf32>
    %175 = arith.mulf %174, %173 : vector<8x128xf32>
    %176 = math.tanh %175 : vector<8x128xf32>
    %cst_90 = arith.constant 5.000000e-01 : f32
    %177 = vector.broadcast %cst_90 : f32 to vector<8x128xf32>
    %178 = arith.mulf %177, %176 : vector<8x128xf32>
    %cst_91 = arith.constant 5.000000e-01 : f32
    %179 = vector.broadcast %cst_91 : f32 to vector<8x128xf32>
    %180 = arith.addf %178, %179 : vector<8x128xf32>
    %181 = vector.extract_strided_slice %164 {offsets = [0, 256], sizes = [8, 128], strides = [1, 1]} : vector<8x512xf32> to vector<8x128xf32>
    %182 = math.tanh %181 : vector<8x128xf32>
    %183 = vector.extract_strided_slice %164 {offsets = [0, 384], sizes = [8, 128], strides = [1, 1]} : vector<8x512xf32> to vector<8x128xf32>
    %cst_92 = arith.constant 5.000000e-01 : f32
    %184 = vector.broadcast %cst_92 : f32 to vector<8x128xf32>
    %185 = arith.mulf %184, %183 : vector<8x128xf32>
    %186 = math.tanh %185 : vector<8x128xf32>
    %cst_93 = arith.constant 5.000000e-01 : f32
    %187 = vector.broadcast %cst_93 : f32 to vector<8x128xf32>
    %188 = arith.mulf %187, %186 : vector<8x128xf32>
    %cst_94 = arith.constant 5.000000e-01 : f32
    %189 = vector.broadcast %cst_94 : f32 to vector<8x128xf32>
    %190 = arith.addf %188, %189 : vector<8x128xf32>
    %191 = arith.mulf %180, %159 : vector<8x128xf32>
    %192 = arith.mulf %172, %182 : vector<8x128xf32>
    %193 = arith.addf %191, %192 : vector<8x128xf32>
    %194 = math.tanh %193 : vector<8x128xf32>
    %195 = arith.mulf %190, %194 : vector<8x128xf32>
    %196 = arith.addi %19, %154 : i32
    %197 = vector.broadcast %196 : i32 to vector<8x1xi32>
    %198 = arith.cmpi slt, %197, %20 : vector<8x1xi32>
    %199 = vector.shape_cast %198 : vector<8x1xi1> to vector<8x1xi1>
    %200 = vector.broadcast %199 : vector<8x1xi1> to vector<8x128xi1>
    %201 = arith.select %200, %195, %158 : vector<8x128xi1>, vector<8x128xf32>
    %c0_95 = arith.constant 0 : index
    %c0_96 = arith.constant 0 : index
    %202 = vector.load %arg11[%c0_95, %c0_96] : memref<8x128xf32, #tpu.memory_space<vmem>>, vector<8x128xf32>
    tpu.vector_store %arg11[%c0_95, %c0_96], %201 {strides = array<i32>} : memref<8x128xf32, #tpu.memory_space<vmem>>, vector<8x128xf32>,
    %203 = vector.shape_cast %198 : vector<8x1xi1> to vector<8x1xi1>
    %204 = vector.broadcast %203 : vector<8x1xi1> to vector<8x128xi1>
    %205 = arith.select %204, %193, %159 : vector<8x128xi1>, vector<8x128xf32>
    %c0_97 = arith.constant 0 : index
    %c0_98 = arith.constant 0 : index
    %206 = vector.load %arg12[%c0_97, %c0_98] : memref<8x128xf32, #tpu.memory_space<vmem>>, vector<8x128xf32>
    tpu.vector_store %arg12[%c0_97, %c0_98], %205 {strides = array<i32>} : memref<8x128xf32, #tpu.memory_space<vmem>>, vector<8x128xf32>,
    %cst_99 = arith.constant 0.000000e+00 : f32
    %207 = vector.shape_cast %198 : vector<8x1xi1> to vector<8x1xi1>
    %208 = vector.broadcast %207 : vector<8x1xi1> to vector<8x128xi1>
    %209 = vector.broadcast %cst_99 : f32 to vector<8x128xf32>
    %210 = arith.select %208, %195, %209 : vector<8x128xi1>, vector<8x128xf32>
    %211 = arith.truncf %210 : vector<8x128xf32> to vector<8x128xbf16>
    %c0_100 = arith.constant 0 : index
    %212 = arith.index_cast %154 : i32 to index
    %c0_101 = arith.constant 0 : index
    %c0_102 = arith.constant 0 : index
    %213 = vector.load %arg7[%c0_100, %212, %c0_101, %c0_102] : memref<1x8x8x128xbf16, #tpu.memory_space<vmem>>, vector<1x1x8x128xbf16>
    %214 = vector.shape_cast %213 : vector<1x1x8x128xbf16> to vector<8x128xbf16>
    %215 = vector.shape_cast %211 : vector<8x128xbf16> to vector<1x1x8x128xbf16>
    tpu.vector_store %arg7[%c0_100, %212, %c0_101, %c0_102], %215 {strides = array<i32>} : memref<1x8x8x128xbf16, #tpu.memory_space<vmem>>, vector<1x1x8x128xbf16>,
    %c3_i32 = arith.constant 3 : i32
    %c2_i32_103 = arith.constant 2 : i32
    %216 = arith.muli %c2_i32_103, %c3_i32 : i32
    %c7_i32_104 = arith.constant 7 : i32
    %217 = arith.subi %c7_i32_104, %216 : i32
    %218 = arith.muli %arg0, %217 : i32
    %219 = arith.addi %c3_i32, %218 : i32
    %220 = arith.index_cast %219 : i32 to index
    %c0_105 = arith.constant 0 : index
    %c0_106 = arith.constant 0 : index
    %221 = vector.load %arg10[%220, %c0_105, %c0_106] : memref<8x8x512xf32, #tpu.memory_space<vmem>>, vector<1x8x512xf32>
    %222 = vector.shape_cast %221 : vector<1x8x512xf32> to vector<8x512xf32>
    %c0_107 = arith.constant 0 : index
    %c0_108 = arith.constant 0 : index
    %223 = vector.load %arg11[%c0_107, %c0_108] : memref<8x128xf32, #tpu.memory_space<vmem>>, vector<8x128xf32>
    %c0_109 = arith.constant 0 : index
    %c0_110 = arith.constant 0 : index
    %224 = vector.load %arg12[%c0_109, %c0_110] : memref<8x128xf32, #tpu.memory_space<vmem>>, vector<8x128xf32>
    %225 = arith.truncf %223 : vector<8x128xf32> to vector<8x128xbf16>
    %c0_111 = arith.constant 0 : index
    %c0_112 = arith.constant 0 : index
    %c0_113 = arith.constant 0 : index
    %226 = vector.load %arg5[%c0_111, %c0_112, %c0_113] : memref<1x128x512xbf16, #tpu.memory_space<vmem>>, vector<1x128x512xbf16>
    %227 = vector.shape_cast %226 : vector<1x128x512xbf16> to vector<128x512xbf16>
    %cst_114 = arith.constant dense<0.000000e+00> : vector<8x512xf32>
    %228 = tpu.matmul %225, %227, %cst_114 {dimension_numbers = #tpu.dot_dimension_numbers<[1], [0], [0], [1], [0, 0, 1, 1], [], []>} : vector<8x128xbf16>, vector<128x512xbf16>, vector<8x512xf32> -> vector<8x512xf32>
    %229 = arith.addf %222, %228 : vector<8x512xf32>
    %230 = vector.extract_strided_slice %229 {offsets = [0, 0], sizes = [8, 128], strides = [1, 1]} : vector<8x512xf32> to vector<8x128xf32>
    %cst_115 = arith.constant 5.000000e-01 : f32
    %231 = vector.broadcast %cst_115 : f32 to vector<8x128xf32>
    %232 = arith.mulf %231, %230 : vector<8x128xf32>
    %233 = math.tanh %232 : vector<8x128xf32>
    %cst_116 = arith.constant 5.000000e-01 : f32
    %234 = vector.broadcast %cst_116 : f32 to vector<8x128xf32>
    %235 = arith.mulf %234, %233 : vector<8x128xf32>
    %cst_117 = arith.constant 5.000000e-01 : f32
    %236 = vector.broadcast %cst_117 : f32 to vector<8x128xf32>
    %237 = arith.addf %235, %236 : vector<8x128xf32>
    %238 = vector.extract_strided_slice %229 {offsets = [0, 128], sizes = [8, 128], strides = [1, 1]} : vector<8x512xf32> to vector<8x128xf32>
    %cst_118 = arith.constant 5.000000e-01 : f32
    %239 = vector.broadcast %cst_118 : f32 to vector<8x128xf32>
    %240 = arith.mulf %239, %238 : vector<8x128xf32>
    %241 = math.tanh %240 : vector<8x128xf32>
    %cst_119 = arith.constant 5.000000e-01 : f32
    %242 = vector.broadcast %cst_119 : f32 to vector<8x128xf32>
    %243 = arith.mulf %242, %241 : vector<8x128xf32>
    %cst_120 = arith.constant 5.000000e-01 : f32
    %244 = vector.broadcast %cst_120 : f32 to vector<8x128xf32>
    %245 = arith.addf %243, %244 : vector<8x128xf32>
    %246 = vector.extract_strided_slice %229 {offsets = [0, 256], sizes = [8, 128], strides = [1, 1]} : vector<8x512xf32> to vector<8x128xf32>
    %247 = math.tanh %246 : vector<8x128xf32>
    %248 = vector.extract_strided_slice %229 {offsets = [0, 384], sizes = [8, 128], strides = [1, 1]} : vector<8x512xf32> to vector<8x128xf32>
    %cst_121 = arith.constant 5.000000e-01 : f32
    %249 = vector.broadcast %cst_121 : f32 to vector<8x128xf32>
    %250 = arith.mulf %249, %248 : vector<8x128xf32>
    %251 = math.tanh %250 : vector<8x128xf32>
    %cst_122 = arith.constant 5.000000e-01 : f32
    %252 = vector.broadcast %cst_122 : f32 to vector<8x128xf32>
    %253 = arith.mulf %252, %251 : vector<8x128xf32>
    %cst_123 = arith.constant 5.000000e-01 : f32
    %254 = vector.broadcast %cst_123 : f32 to vector<8x128xf32>
    %255 = arith.addf %253, %254 : vector<8x128xf32>
    %256 = arith.mulf %245, %224 : vector<8x128xf32>
    %257 = arith.mulf %237, %247 : vector<8x128xf32>
    %258 = arith.addf %256, %257 : vector<8x128xf32>
    %259 = math.tanh %258 : vector<8x128xf32>
    %260 = arith.mulf %255, %259 : vector<8x128xf32>
    %261 = arith.addi %19, %219 : i32
    %262 = vector.broadcast %261 : i32 to vector<8x1xi32>
    %263 = arith.cmpi slt, %262, %20 : vector<8x1xi32>
    %264 = vector.shape_cast %263 : vector<8x1xi1> to vector<8x1xi1>
    %265 = vector.broadcast %264 : vector<8x1xi1> to vector<8x128xi1>
    %266 = arith.select %265, %260, %223 : vector<8x128xi1>, vector<8x128xf32>
    %c0_124 = arith.constant 0 : index
    %c0_125 = arith.constant 0 : index
    %267 = vector.load %arg11[%c0_124, %c0_125] : memref<8x128xf32, #tpu.memory_space<vmem>>, vector<8x128xf32>
    tpu.vector_store %arg11[%c0_124, %c0_125], %266 {strides = array<i32>} : memref<8x128xf32, #tpu.memory_space<vmem>>, vector<8x128xf32>,
    %268 = vector.shape_cast %263 : vector<8x1xi1> to vector<8x1xi1>
    %269 = vector.broadcast %268 : vector<8x1xi1> to vector<8x128xi1>
    %270 = arith.select %269, %258, %224 : vector<8x128xi1>, vector<8x128xf32>
    %c0_126 = arith.constant 0 : index
    %c0_127 = arith.constant 0 : index
    %271 = vector.load %arg12[%c0_126, %c0_127] : memref<8x128xf32, #tpu.memory_space<vmem>>, vector<8x128xf32>
    tpu.vector_store %arg12[%c0_126, %c0_127], %270 {strides = array<i32>} : memref<8x128xf32, #tpu.memory_space<vmem>>, vector<8x128xf32>,
    %cst_128 = arith.constant 0.000000e+00 : f32
    %272 = vector.shape_cast %263 : vector<8x1xi1> to vector<8x1xi1>
    %273 = vector.broadcast %272 : vector<8x1xi1> to vector<8x128xi1>
    %274 = vector.broadcast %cst_128 : f32 to vector<8x128xf32>
    %275 = arith.select %273, %260, %274 : vector<8x128xi1>, vector<8x128xf32>
    %276 = arith.truncf %275 : vector<8x128xf32> to vector<8x128xbf16>
    %c0_129 = arith.constant 0 : index
    %277 = arith.index_cast %219 : i32 to index
    %c0_130 = arith.constant 0 : index
    %c0_131 = arith.constant 0 : index
    %278 = vector.load %arg7[%c0_129, %277, %c0_130, %c0_131] : memref<1x8x8x128xbf16, #tpu.memory_space<vmem>>, vector<1x1x8x128xbf16>
    %279 = vector.shape_cast %278 : vector<1x1x8x128xbf16> to vector<8x128xbf16>
    %280 = vector.shape_cast %276 : vector<8x128xbf16> to vector<1x1x8x128xbf16>
    tpu.vector_store %arg7[%c0_129, %277, %c0_130, %c0_131], %280 {strides = array<i32>} : memref<1x8x8x128xbf16, #tpu.memory_space<vmem>>, vector<1x1x8x128xbf16>,
    %c4_i32 = arith.constant 4 : i32
    %c2_i32_132 = arith.constant 2 : i32
    %281 = arith.muli %c2_i32_132, %c4_i32 : i32
    %c7_i32_133 = arith.constant 7 : i32
    %282 = arith.subi %c7_i32_133, %281 : i32
    %283 = arith.muli %arg0, %282 : i32
    %284 = arith.addi %c4_i32, %283 : i32
    %285 = arith.index_cast %284 : i32 to index
    %c0_134 = arith.constant 0 : index
    %c0_135 = arith.constant 0 : index
    %286 = vector.load %arg10[%285, %c0_134, %c0_135] : memref<8x8x512xf32, #tpu.memory_space<vmem>>, vector<1x8x512xf32>
    %287 = vector.shape_cast %286 : vector<1x8x512xf32> to vector<8x512xf32>
    %c0_136 = arith.constant 0 : index
    %c0_137 = arith.constant 0 : index
    %288 = vector.load %arg11[%c0_136, %c0_137] : memref<8x128xf32, #tpu.memory_space<vmem>>, vector<8x128xf32>
    %c0_138 = arith.constant 0 : index
    %c0_139 = arith.constant 0 : index
    %289 = vector.load %arg12[%c0_138, %c0_139] : memref<8x128xf32, #tpu.memory_space<vmem>>, vector<8x128xf32>
    %290 = arith.truncf %288 : vector<8x128xf32> to vector<8x128xbf16>
    %c0_140 = arith.constant 0 : index
    %c0_141 = arith.constant 0 : index
    %c0_142 = arith.constant 0 : index
    %291 = vector.load %arg5[%c0_140, %c0_141, %c0_142] : memref<1x128x512xbf16, #tpu.memory_space<vmem>>, vector<1x128x512xbf16>
    %292 = vector.shape_cast %291 : vector<1x128x512xbf16> to vector<128x512xbf16>
    %cst_143 = arith.constant dense<0.000000e+00> : vector<8x512xf32>
    %293 = tpu.matmul %290, %292, %cst_143 {dimension_numbers = #tpu.dot_dimension_numbers<[1], [0], [0], [1], [0, 0, 1, 1], [], []>} : vector<8x128xbf16>, vector<128x512xbf16>, vector<8x512xf32> -> vector<8x512xf32>
    %294 = arith.addf %287, %293 : vector<8x512xf32>
    %295 = vector.extract_strided_slice %294 {offsets = [0, 0], sizes = [8, 128], strides = [1, 1]} : vector<8x512xf32> to vector<8x128xf32>
    %cst_144 = arith.constant 5.000000e-01 : f32
    %296 = vector.broadcast %cst_144 : f32 to vector<8x128xf32>
    %297 = arith.mulf %296, %295 : vector<8x128xf32>
    %298 = math.tanh %297 : vector<8x128xf32>
    %cst_145 = arith.constant 5.000000e-01 : f32
    %299 = vector.broadcast %cst_145 : f32 to vector<8x128xf32>
    %300 = arith.mulf %299, %298 : vector<8x128xf32>
    %cst_146 = arith.constant 5.000000e-01 : f32
    %301 = vector.broadcast %cst_146 : f32 to vector<8x128xf32>
    %302 = arith.addf %300, %301 : vector<8x128xf32>
    %303 = vector.extract_strided_slice %294 {offsets = [0, 128], sizes = [8, 128], strides = [1, 1]} : vector<8x512xf32> to vector<8x128xf32>
    %cst_147 = arith.constant 5.000000e-01 : f32
    %304 = vector.broadcast %cst_147 : f32 to vector<8x128xf32>
    %305 = arith.mulf %304, %303 : vector<8x128xf32>
    %306 = math.tanh %305 : vector<8x128xf32>
    %cst_148 = arith.constant 5.000000e-01 : f32
    %307 = vector.broadcast %cst_148 : f32 to vector<8x128xf32>
    %308 = arith.mulf %307, %306 : vector<8x128xf32>
    %cst_149 = arith.constant 5.000000e-01 : f32
    %309 = vector.broadcast %cst_149 : f32 to vector<8x128xf32>
    %310 = arith.addf %308, %309 : vector<8x128xf32>
    %311 = vector.extract_strided_slice %294 {offsets = [0, 256], sizes = [8, 128], strides = [1, 1]} : vector<8x512xf32> to vector<8x128xf32>
    %312 = math.tanh %311 : vector<8x128xf32>
    %313 = vector.extract_strided_slice %294 {offsets = [0, 384], sizes = [8, 128], strides = [1, 1]} : vector<8x512xf32> to vector<8x128xf32>
    %cst_150 = arith.constant 5.000000e-01 : f32
    %314 = vector.broadcast %cst_150 : f32 to vector<8x128xf32>
    %315 = arith.mulf %314, %313 : vector<8x128xf32>
    %316 = math.tanh %315 : vector<8x128xf32>
    %cst_151 = arith.constant 5.000000e-01 : f32
    %317 = vector.broadcast %cst_151 : f32 to vector<8x128xf32>
    %318 = arith.mulf %317, %316 : vector<8x128xf32>
    %cst_152 = arith.constant 5.000000e-01 : f32
    %319 = vector.broadcast %cst_152 : f32 to vector<8x128xf32>
    %320 = arith.addf %318, %319 : vector<8x128xf32>
    %321 = arith.mulf %310, %289 : vector<8x128xf32>
    %322 = arith.mulf %302, %312 : vector<8x128xf32>
    %323 = arith.addf %321, %322 : vector<8x128xf32>
    %324 = math.tanh %323 : vector<8x128xf32>
    %325 = arith.mulf %320, %324 : vector<8x128xf32>
    %326 = arith.addi %19, %284 : i32
    %327 = vector.broadcast %326 : i32 to vector<8x1xi32>
    %328 = arith.cmpi slt, %327, %20 : vector<8x1xi32>
    %329 = vector.shape_cast %328 : vector<8x1xi1> to vector<8x1xi1>
    %330 = vector.broadcast %329 : vector<8x1xi1> to vector<8x128xi1>
    %331 = arith.select %330, %325, %288 : vector<8x128xi1>, vector<8x128xf32>
    %c0_153 = arith.constant 0 : index
    %c0_154 = arith.constant 0 : index
    %332 = vector.load %arg11[%c0_153, %c0_154] : memref<8x128xf32, #tpu.memory_space<vmem>>, vector<8x128xf32>
    tpu.vector_store %arg11[%c0_153, %c0_154], %331 {strides = array<i32>} : memref<8x128xf32, #tpu.memory_space<vmem>>, vector<8x128xf32>,
    %333 = vector.shape_cast %328 : vector<8x1xi1> to vector<8x1xi1>
    %334 = vector.broadcast %333 : vector<8x1xi1> to vector<8x128xi1>
    %335 = arith.select %334, %323, %289 : vector<8x128xi1>, vector<8x128xf32>
    %c0_155 = arith.constant 0 : index
    %c0_156 = arith.constant 0 : index
    %336 = vector.load %arg12[%c0_155, %c0_156] : memref<8x128xf32, #tpu.memory_space<vmem>>, vector<8x128xf32>
    tpu.vector_store %arg12[%c0_155, %c0_156], %335 {strides = array<i32>} : memref<8x128xf32, #tpu.memory_space<vmem>>, vector<8x128xf32>,
    %cst_157 = arith.constant 0.000000e+00 : f32
    %337 = vector.shape_cast %328 : vector<8x1xi1> to vector<8x1xi1>
    %338 = vector.broadcast %337 : vector<8x1xi1> to vector<8x128xi1>
    %339 = vector.broadcast %cst_157 : f32 to vector<8x128xf32>
    %340 = arith.select %338, %325, %339 : vector<8x128xi1>, vector<8x128xf32>
    %341 = arith.truncf %340 : vector<8x128xf32> to vector<8x128xbf16>
    %c0_158 = arith.constant 0 : index
    %342 = arith.index_cast %284 : i32 to index
    %c0_159 = arith.constant 0 : index
    %c0_160 = arith.constant 0 : index
    %343 = vector.load %arg7[%c0_158, %342, %c0_159, %c0_160] : memref<1x8x8x128xbf16, #tpu.memory_space<vmem>>, vector<1x1x8x128xbf16>
    %344 = vector.shape_cast %343 : vector<1x1x8x128xbf16> to vector<8x128xbf16>
    %345 = vector.shape_cast %341 : vector<8x128xbf16> to vector<1x1x8x128xbf16>
    tpu.vector_store %arg7[%c0_158, %342, %c0_159, %c0_160], %345 {strides = array<i32>} : memref<1x8x8x128xbf16, #tpu.memory_space<vmem>>, vector<1x1x8x128xbf16>,
    %c5_i32 = arith.constant 5 : i32
    %c2_i32_161 = arith.constant 2 : i32
    %346 = arith.muli %c2_i32_161, %c5_i32 : i32
    %c7_i32_162 = arith.constant 7 : i32
    %347 = arith.subi %c7_i32_162, %346 : i32
    %348 = arith.muli %arg0, %347 : i32
    %349 = arith.addi %c5_i32, %348 : i32
    %350 = arith.index_cast %349 : i32 to index
    %c0_163 = arith.constant 0 : index
    %c0_164 = arith.constant 0 : index
    %351 = vector.load %arg10[%350, %c0_163, %c0_164] : memref<8x8x512xf32, #tpu.memory_space<vmem>>, vector<1x8x512xf32>
    %352 = vector.shape_cast %351 : vector<1x8x512xf32> to vector<8x512xf32>
    %c0_165 = arith.constant 0 : index
    %c0_166 = arith.constant 0 : index
    %353 = vector.load %arg11[%c0_165, %c0_166] : memref<8x128xf32, #tpu.memory_space<vmem>>, vector<8x128xf32>
    %c0_167 = arith.constant 0 : index
    %c0_168 = arith.constant 0 : index
    %354 = vector.load %arg12[%c0_167, %c0_168] : memref<8x128xf32, #tpu.memory_space<vmem>>, vector<8x128xf32>
    %355 = arith.truncf %353 : vector<8x128xf32> to vector<8x128xbf16>
    %c0_169 = arith.constant 0 : index
    %c0_170 = arith.constant 0 : index
    %c0_171 = arith.constant 0 : index
    %356 = vector.load %arg5[%c0_169, %c0_170, %c0_171] : memref<1x128x512xbf16, #tpu.memory_space<vmem>>, vector<1x128x512xbf16>
    %357 = vector.shape_cast %356 : vector<1x128x512xbf16> to vector<128x512xbf16>
    %cst_172 = arith.constant dense<0.000000e+00> : vector<8x512xf32>
    %358 = tpu.matmul %355, %357, %cst_172 {dimension_numbers = #tpu.dot_dimension_numbers<[1], [0], [0], [1], [0, 0, 1, 1], [], []>} : vector<8x128xbf16>, vector<128x512xbf16>, vector<8x512xf32> -> vector<8x512xf32>
    %359 = arith.addf %352, %358 : vector<8x512xf32>
    %360 = vector.extract_strided_slice %359 {offsets = [0, 0], sizes = [8, 128], strides = [1, 1]} : vector<8x512xf32> to vector<8x128xf32>
    %cst_173 = arith.constant 5.000000e-01 : f32
    %361 = vector.broadcast %cst_173 : f32 to vector<8x128xf32>
    %362 = arith.mulf %361, %360 : vector<8x128xf32>
    %363 = math.tanh %362 : vector<8x128xf32>
    %cst_174 = arith.constant 5.000000e-01 : f32
    %364 = vector.broadcast %cst_174 : f32 to vector<8x128xf32>
    %365 = arith.mulf %364, %363 : vector<8x128xf32>
    %cst_175 = arith.constant 5.000000e-01 : f32
    %366 = vector.broadcast %cst_175 : f32 to vector<8x128xf32>
    %367 = arith.addf %365, %366 : vector<8x128xf32>
    %368 = vector.extract_strided_slice %359 {offsets = [0, 128], sizes = [8, 128], strides = [1, 1]} : vector<8x512xf32> to vector<8x128xf32>
    %cst_176 = arith.constant 5.000000e-01 : f32
    %369 = vector.broadcast %cst_176 : f32 to vector<8x128xf32>
    %370 = arith.mulf %369, %368 : vector<8x128xf32>
    %371 = math.tanh %370 : vector<8x128xf32>
    %cst_177 = arith.constant 5.000000e-01 : f32
    %372 = vector.broadcast %cst_177 : f32 to vector<8x128xf32>
    %373 = arith.mulf %372, %371 : vector<8x128xf32>
    %cst_178 = arith.constant 5.000000e-01 : f32
    %374 = vector.broadcast %cst_178 : f32 to vector<8x128xf32>
    %375 = arith.addf %373, %374 : vector<8x128xf32>
    %376 = vector.extract_strided_slice %359 {offsets = [0, 256], sizes = [8, 128], strides = [1, 1]} : vector<8x512xf32> to vector<8x128xf32>
    %377 = math.tanh %376 : vector<8x128xf32>
    %378 = vector.extract_strided_slice %359 {offsets = [0, 384], sizes = [8, 128], strides = [1, 1]} : vector<8x512xf32> to vector<8x128xf32>
    %cst_179 = arith.constant 5.000000e-01 : f32
    %379 = vector.broadcast %cst_179 : f32 to vector<8x128xf32>
    %380 = arith.mulf %379, %378 : vector<8x128xf32>
    %381 = math.tanh %380 : vector<8x128xf32>
    %cst_180 = arith.constant 5.000000e-01 : f32
    %382 = vector.broadcast %cst_180 : f32 to vector<8x128xf32>
    %383 = arith.mulf %382, %381 : vector<8x128xf32>
    %cst_181 = arith.constant 5.000000e-01 : f32
    %384 = vector.broadcast %cst_181 : f32 to vector<8x128xf32>
    %385 = arith.addf %383, %384 : vector<8x128xf32>
    %386 = arith.mulf %375, %354 : vector<8x128xf32>
    %387 = arith.mulf %367, %377 : vector<8x128xf32>
    %388 = arith.addf %386, %387 : vector<8x128xf32>
    %389 = math.tanh %388 : vector<8x128xf32>
    %390 = arith.mulf %385, %389 : vector<8x128xf32>
    %391 = arith.addi %19, %349 : i32
    %392 = vector.broadcast %391 : i32 to vector<8x1xi32>
    %393 = arith.cmpi slt, %392, %20 : vector<8x1xi32>
    %394 = vector.shape_cast %393 : vector<8x1xi1> to vector<8x1xi1>
    %395 = vector.broadcast %394 : vector<8x1xi1> to vector<8x128xi1>
    %396 = arith.select %395, %390, %353 : vector<8x128xi1>, vector<8x128xf32>
    %c0_182 = arith.constant 0 : index
    %c0_183 = arith.constant 0 : index
    %397 = vector.load %arg11[%c0_182, %c0_183] : memref<8x128xf32, #tpu.memory_space<vmem>>, vector<8x128xf32>
    tpu.vector_store %arg11[%c0_182, %c0_183], %396 {strides = array<i32>} : memref<8x128xf32, #tpu.memory_space<vmem>>, vector<8x128xf32>,
    %398 = vector.shape_cast %393 : vector<8x1xi1> to vector<8x1xi1>
    %399 = vector.broadcast %398 : vector<8x1xi1> to vector<8x128xi1>
    %400 = arith.select %399, %388, %354 : vector<8x128xi1>, vector<8x128xf32>
    %c0_184 = arith.constant 0 : index
    %c0_185 = arith.constant 0 : index
    %401 = vector.load %arg12[%c0_184, %c0_185] : memref<8x128xf32, #tpu.memory_space<vmem>>, vector<8x128xf32>
    tpu.vector_store %arg12[%c0_184, %c0_185], %400 {strides = array<i32>} : memref<8x128xf32, #tpu.memory_space<vmem>>, vector<8x128xf32>,
    %cst_186 = arith.constant 0.000000e+00 : f32
    %402 = vector.shape_cast %393 : vector<8x1xi1> to vector<8x1xi1>
    %403 = vector.broadcast %402 : vector<8x1xi1> to vector<8x128xi1>
    %404 = vector.broadcast %cst_186 : f32 to vector<8x128xf32>
    %405 = arith.select %403, %390, %404 : vector<8x128xi1>, vector<8x128xf32>
    %406 = arith.truncf %405 : vector<8x128xf32> to vector<8x128xbf16>
    %c0_187 = arith.constant 0 : index
    %407 = arith.index_cast %349 : i32 to index
    %c0_188 = arith.constant 0 : index
    %c0_189 = arith.constant 0 : index
    %408 = vector.load %arg7[%c0_187, %407, %c0_188, %c0_189] : memref<1x8x8x128xbf16, #tpu.memory_space<vmem>>, vector<1x1x8x128xbf16>
    %409 = vector.shape_cast %408 : vector<1x1x8x128xbf16> to vector<8x128xbf16>
    %410 = vector.shape_cast %406 : vector<8x128xbf16> to vector<1x1x8x128xbf16>
    tpu.vector_store %arg7[%c0_187, %407, %c0_188, %c0_189], %410 {strides = array<i32>} : memref<1x8x8x128xbf16, #tpu.memory_space<vmem>>, vector<1x1x8x128xbf16>,
    %c6_i32 = arith.constant 6 : i32
    %c2_i32_190 = arith.constant 2 : i32
    %411 = arith.muli %c2_i32_190, %c6_i32 : i32
    %c7_i32_191 = arith.constant 7 : i32
    %412 = arith.subi %c7_i32_191, %411 : i32
    %413 = arith.muli %arg0, %412 : i32
    %414 = arith.addi %c6_i32, %413 : i32
    %415 = arith.index_cast %414 : i32 to index
    %c0_192 = arith.constant 0 : index
    %c0_193 = arith.constant 0 : index
    %416 = vector.load %arg10[%415, %c0_192, %c0_193] : memref<8x8x512xf32, #tpu.memory_space<vmem>>, vector<1x8x512xf32>
    %417 = vector.shape_cast %416 : vector<1x8x512xf32> to vector<8x512xf32>
    %c0_194 = arith.constant 0 : index
    %c0_195 = arith.constant 0 : index
    %418 = vector.load %arg11[%c0_194, %c0_195] : memref<8x128xf32, #tpu.memory_space<vmem>>, vector<8x128xf32>
    %c0_196 = arith.constant 0 : index
    %c0_197 = arith.constant 0 : index
    %419 = vector.load %arg12[%c0_196, %c0_197] : memref<8x128xf32, #tpu.memory_space<vmem>>, vector<8x128xf32>
    %420 = arith.truncf %418 : vector<8x128xf32> to vector<8x128xbf16>
    %c0_198 = arith.constant 0 : index
    %c0_199 = arith.constant 0 : index
    %c0_200 = arith.constant 0 : index
    %421 = vector.load %arg5[%c0_198, %c0_199, %c0_200] : memref<1x128x512xbf16, #tpu.memory_space<vmem>>, vector<1x128x512xbf16>
    %422 = vector.shape_cast %421 : vector<1x128x512xbf16> to vector<128x512xbf16>
    %cst_201 = arith.constant dense<0.000000e+00> : vector<8x512xf32>
    %423 = tpu.matmul %420, %422, %cst_201 {dimension_numbers = #tpu.dot_dimension_numbers<[1], [0], [0], [1], [0, 0, 1, 1], [], []>} : vector<8x128xbf16>, vector<128x512xbf16>, vector<8x512xf32> -> vector<8x512xf32>
    %424 = arith.addf %417, %423 : vector<8x512xf32>
    %425 = vector.extract_strided_slice %424 {offsets = [0, 0], sizes = [8, 128], strides = [1, 1]} : vector<8x512xf32> to vector<8x128xf32>
    %cst_202 = arith.constant 5.000000e-01 : f32
    %426 = vector.broadcast %cst_202 : f32 to vector<8x128xf32>
    %427 = arith.mulf %426, %425 : vector<8x128xf32>
    %428 = math.tanh %427 : vector<8x128xf32>
    %cst_203 = arith.constant 5.000000e-01 : f32
    %429 = vector.broadcast %cst_203 : f32 to vector<8x128xf32>
    %430 = arith.mulf %429, %428 : vector<8x128xf32>
    %cst_204 = arith.constant 5.000000e-01 : f32
    %431 = vector.broadcast %cst_204 : f32 to vector<8x128xf32>
    %432 = arith.addf %430, %431 : vector<8x128xf32>
    %433 = vector.extract_strided_slice %424 {offsets = [0, 128], sizes = [8, 128], strides = [1, 1]} : vector<8x512xf32> to vector<8x128xf32>
    %cst_205 = arith.constant 5.000000e-01 : f32
    %434 = vector.broadcast %cst_205 : f32 to vector<8x128xf32>
    %435 = arith.mulf %434, %433 : vector<8x128xf32>
    %436 = math.tanh %435 : vector<8x128xf32>
    %cst_206 = arith.constant 5.000000e-01 : f32
    %437 = vector.broadcast %cst_206 : f32 to vector<8x128xf32>
    %438 = arith.mulf %437, %436 : vector<8x128xf32>
    %cst_207 = arith.constant 5.000000e-01 : f32
    %439 = vector.broadcast %cst_207 : f32 to vector<8x128xf32>
    %440 = arith.addf %438, %439 : vector<8x128xf32>
    %441 = vector.extract_strided_slice %424 {offsets = [0, 256], sizes = [8, 128], strides = [1, 1]} : vector<8x512xf32> to vector<8x128xf32>
    %442 = math.tanh %441 : vector<8x128xf32>
    %443 = vector.extract_strided_slice %424 {offsets = [0, 384], sizes = [8, 128], strides = [1, 1]} : vector<8x512xf32> to vector<8x128xf32>
    %cst_208 = arith.constant 5.000000e-01 : f32
    %444 = vector.broadcast %cst_208 : f32 to vector<8x128xf32>
    %445 = arith.mulf %444, %443 : vector<8x128xf32>
    %446 = math.tanh %445 : vector<8x128xf32>
    %cst_209 = arith.constant 5.000000e-01 : f32
    %447 = vector.broadcast %cst_209 : f32 to vector<8x128xf32>
    %448 = arith.mulf %447, %446 : vector<8x128xf32>
    %cst_210 = arith.constant 5.000000e-01 : f32
    %449 = vector.broadcast %cst_210 : f32 to vector<8x128xf32>
    %450 = arith.addf %448, %449 : vector<8x128xf32>
    %451 = arith.mulf %440, %419 : vector<8x128xf32>
    %452 = arith.mulf %432, %442 : vector<8x128xf32>
    %453 = arith.addf %451, %452 : vector<8x128xf32>
    %454 = math.tanh %453 : vector<8x128xf32>
    %455 = arith.mulf %450, %454 : vector<8x128xf32>
    %456 = arith.addi %19, %414 : i32
    %457 = vector.broadcast %456 : i32 to vector<8x1xi32>
    %458 = arith.cmpi slt, %457, %20 : vector<8x1xi32>
    %459 = vector.shape_cast %458 : vector<8x1xi1> to vector<8x1xi1>
    %460 = vector.broadcast %459 : vector<8x1xi1> to vector<8x128xi1>
    %461 = arith.select %460, %455, %418 : vector<8x128xi1>, vector<8x128xf32>
    %c0_211 = arith.constant 0 : index
    %c0_212 = arith.constant 0 : index
    %462 = vector.load %arg11[%c0_211, %c0_212] : memref<8x128xf32, #tpu.memory_space<vmem>>, vector<8x128xf32>
    tpu.vector_store %arg11[%c0_211, %c0_212], %461 {strides = array<i32>} : memref<8x128xf32, #tpu.memory_space<vmem>>, vector<8x128xf32>,
    %463 = vector.shape_cast %458 : vector<8x1xi1> to vector<8x1xi1>
    %464 = vector.broadcast %463 : vector<8x1xi1> to vector<8x128xi1>
    %465 = arith.select %464, %453, %419 : vector<8x128xi1>, vector<8x128xf32>
    %c0_213 = arith.constant 0 : index
    %c0_214 = arith.constant 0 : index
    %466 = vector.load %arg12[%c0_213, %c0_214] : memref<8x128xf32, #tpu.memory_space<vmem>>, vector<8x128xf32>
    tpu.vector_store %arg12[%c0_213, %c0_214], %465 {strides = array<i32>} : memref<8x128xf32, #tpu.memory_space<vmem>>, vector<8x128xf32>,
    %cst_215 = arith.constant 0.000000e+00 : f32
    %467 = vector.shape_cast %458 : vector<8x1xi1> to vector<8x1xi1>
    %468 = vector.broadcast %467 : vector<8x1xi1> to vector<8x128xi1>
    %469 = vector.broadcast %cst_215 : f32 to vector<8x128xf32>
    %470 = arith.select %468, %455, %469 : vector<8x128xi1>, vector<8x128xf32>
    %471 = arith.truncf %470 : vector<8x128xf32> to vector<8x128xbf16>
    %c0_216 = arith.constant 0 : index
    %472 = arith.index_cast %414 : i32 to index
    %c0_217 = arith.constant 0 : index
    %c0_218 = arith.constant 0 : index
    %473 = vector.load %arg7[%c0_216, %472, %c0_217, %c0_218] : memref<1x8x8x128xbf16, #tpu.memory_space<vmem>>, vector<1x1x8x128xbf16>
    %474 = vector.shape_cast %473 : vector<1x1x8x128xbf16> to vector<8x128xbf16>
    %475 = vector.shape_cast %471 : vector<8x128xbf16> to vector<1x1x8x128xbf16>
    tpu.vector_store %arg7[%c0_216, %472, %c0_217, %c0_218], %475 {strides = array<i32>} : memref<1x8x8x128xbf16, #tpu.memory_space<vmem>>, vector<1x1x8x128xbf16>,
    %c7_i32_219 = arith.constant 7 : i32
    %c2_i32_220 = arith.constant 2 : i32
    %476 = arith.muli %c2_i32_220, %c7_i32_219 : i32
    %c7_i32_221 = arith.constant 7 : i32
    %477 = arith.subi %c7_i32_221, %476 : i32
    %478 = arith.muli %arg0, %477 : i32
    %479 = arith.addi %c7_i32_219, %478 : i32
    %480 = arith.index_cast %479 : i32 to index
    %c0_222 = arith.constant 0 : index
    %c0_223 = arith.constant 0 : index
    %481 = vector.load %arg10[%480, %c0_222, %c0_223] : memref<8x8x512xf32, #tpu.memory_space<vmem>>, vector<1x8x512xf32>
    %482 = vector.shape_cast %481 : vector<1x8x512xf32> to vector<8x512xf32>
    %c0_224 = arith.constant 0 : index
    %c0_225 = arith.constant 0 : index
    %483 = vector.load %arg11[%c0_224, %c0_225] : memref<8x128xf32, #tpu.memory_space<vmem>>, vector<8x128xf32>
    %c0_226 = arith.constant 0 : index
    %c0_227 = arith.constant 0 : index
    %484 = vector.load %arg12[%c0_226, %c0_227] : memref<8x128xf32, #tpu.memory_space<vmem>>, vector<8x128xf32>
    %485 = arith.truncf %483 : vector<8x128xf32> to vector<8x128xbf16>
    %c0_228 = arith.constant 0 : index
    %c0_229 = arith.constant 0 : index
    %c0_230 = arith.constant 0 : index
    %486 = vector.load %arg5[%c0_228, %c0_229, %c0_230] : memref<1x128x512xbf16, #tpu.memory_space<vmem>>, vector<1x128x512xbf16>
    %487 = vector.shape_cast %486 : vector<1x128x512xbf16> to vector<128x512xbf16>
    %cst_231 = arith.constant dense<0.000000e+00> : vector<8x512xf32>
    %488 = tpu.matmul %485, %487, %cst_231 {dimension_numbers = #tpu.dot_dimension_numbers<[1], [0], [0], [1], [0, 0, 1, 1], [], []>} : vector<8x128xbf16>, vector<128x512xbf16>, vector<8x512xf32> -> vector<8x512xf32>
    %489 = arith.addf %482, %488 : vector<8x512xf32>
    %490 = vector.extract_strided_slice %489 {offsets = [0, 0], sizes = [8, 128], strides = [1, 1]} : vector<8x512xf32> to vector<8x128xf32>
    %cst_232 = arith.constant 5.000000e-01 : f32
    %491 = vector.broadcast %cst_232 : f32 to vector<8x128xf32>
    %492 = arith.mulf %491, %490 : vector<8x128xf32>
    %493 = math.tanh %492 : vector<8x128xf32>
    %cst_233 = arith.constant 5.000000e-01 : f32
    %494 = vector.broadcast %cst_233 : f32 to vector<8x128xf32>
    %495 = arith.mulf %494, %493 : vector<8x128xf32>
    %cst_234 = arith.constant 5.000000e-01 : f32
    %496 = vector.broadcast %cst_234 : f32 to vector<8x128xf32>
    %497 = arith.addf %495, %496 : vector<8x128xf32>
    %498 = vector.extract_strided_slice %489 {offsets = [0, 128], sizes = [8, 128], strides = [1, 1]} : vector<8x512xf32> to vector<8x128xf32>
    %cst_235 = arith.constant 5.000000e-01 : f32
    %499 = vector.broadcast %cst_235 : f32 to vector<8x128xf32>
    %500 = arith.mulf %499, %498 : vector<8x128xf32>
    %501 = math.tanh %500 : vector<8x128xf32>
    %cst_236 = arith.constant 5.000000e-01 : f32
    %502 = vector.broadcast %cst_236 : f32 to vector<8x128xf32>
    %503 = arith.mulf %502, %501 : vector<8x128xf32>
    %cst_237 = arith.constant 5.000000e-01 : f32
    %504 = vector.broadcast %cst_237 : f32 to vector<8x128xf32>
    %505 = arith.addf %503, %504 : vector<8x128xf32>
    %506 = vector.extract_strided_slice %489 {offsets = [0, 256], sizes = [8, 128], strides = [1, 1]} : vector<8x512xf32> to vector<8x128xf32>
    %507 = math.tanh %506 : vector<8x128xf32>
    %508 = vector.extract_strided_slice %489 {offsets = [0, 384], sizes = [8, 128], strides = [1, 1]} : vector<8x512xf32> to vector<8x128xf32>
    %cst_238 = arith.constant 5.000000e-01 : f32
    %509 = vector.broadcast %cst_238 : f32 to vector<8x128xf32>
    %510 = arith.mulf %509, %508 : vector<8x128xf32>
    %511 = math.tanh %510 : vector<8x128xf32>
    %cst_239 = arith.constant 5.000000e-01 : f32
    %512 = vector.broadcast %cst_239 : f32 to vector<8x128xf32>
    %513 = arith.mulf %512, %511 : vector<8x128xf32>
    %cst_240 = arith.constant 5.000000e-01 : f32
    %514 = vector.broadcast %cst_240 : f32 to vector<8x128xf32>
    %515 = arith.addf %513, %514 : vector<8x128xf32>
    %516 = arith.mulf %505, %484 : vector<8x128xf32>
    %517 = arith.mulf %497, %507 : vector<8x128xf32>
    %518 = arith.addf %516, %517 : vector<8x128xf32>
    %519 = math.tanh %518 : vector<8x128xf32>
    %520 = arith.mulf %515, %519 : vector<8x128xf32>
    %521 = arith.addi %19, %479 : i32
    %522 = vector.broadcast %521 : i32 to vector<8x1xi32>
    %523 = arith.cmpi slt, %522, %20 : vector<8x1xi32>
    %524 = vector.shape_cast %523 : vector<8x1xi1> to vector<8x1xi1>
    %525 = vector.broadcast %524 : vector<8x1xi1> to vector<8x128xi1>
    %526 = arith.select %525, %520, %483 : vector<8x128xi1>, vector<8x128xf32>
    %c0_241 = arith.constant 0 : index
    %c0_242 = arith.constant 0 : index
    %527 = vector.load %arg11[%c0_241, %c0_242] : memref<8x128xf32, #tpu.memory_space<vmem>>, vector<8x128xf32>
    tpu.vector_store %arg11[%c0_241, %c0_242], %526 {strides = array<i32>} : memref<8x128xf32, #tpu.memory_space<vmem>>, vector<8x128xf32>,
    %528 = vector.shape_cast %523 : vector<8x1xi1> to vector<8x1xi1>
    %529 = vector.broadcast %528 : vector<8x1xi1> to vector<8x128xi1>
    %530 = arith.select %529, %518, %484 : vector<8x128xi1>, vector<8x128xf32>
    %c0_243 = arith.constant 0 : index
    %c0_244 = arith.constant 0 : index
    %531 = vector.load %arg12[%c0_243, %c0_244] : memref<8x128xf32, #tpu.memory_space<vmem>>, vector<8x128xf32>
    tpu.vector_store %arg12[%c0_243, %c0_244], %530 {strides = array<i32>} : memref<8x128xf32, #tpu.memory_space<vmem>>, vector<8x128xf32>,
    %cst_245 = arith.constant 0.000000e+00 : f32
    %532 = vector.shape_cast %523 : vector<8x1xi1> to vector<8x1xi1>
    %533 = vector.broadcast %532 : vector<8x1xi1> to vector<8x128xi1>
    %534 = vector.broadcast %cst_245 : f32 to vector<8x128xf32>
    %535 = arith.select %533, %520, %534 : vector<8x128xi1>, vector<8x128xf32>
    %536 = arith.truncf %535 : vector<8x128xf32> to vector<8x128xbf16>
    %c0_246 = arith.constant 0 : index
    %537 = arith.index_cast %479 : i32 to index
    %c0_247 = arith.constant 0 : index
    %c0_248 = arith.constant 0 : index
    %538 = vector.load %arg7[%c0_246, %537, %c0_247, %c0_248] : memref<1x8x8x128xbf16, #tpu.memory_space<vmem>>, vector<1x1x8x128xbf16>
    %539 = vector.shape_cast %538 : vector<1x1x8x128xbf16> to vector<8x128xbf16>
    %540 = vector.shape_cast %536 : vector<8x128xbf16> to vector<1x1x8x128xbf16>
    tpu.vector_store %arg7[%c0_246, %537, %c0_247, %c0_248], %540 {strides = array<i32>} : memref<1x8x8x128xbf16, #tpu.memory_space<vmem>>, vector<1x1x8x128xbf16>,
    %c8_i32_249 = arith.constant 8 : i32
    %c0_i32_250 = arith.constant 0 : i32
    %541 = arith.cmpi eq, %arg1, %c0_i32_250 : i32
    %542 = arith.extui %541 : i1 to i32
    %c0_i32_251 = arith.constant 0 : i32
    %543 = arith.cmpi ne, %542, %c0_i32_251 : i32
    scf.if %543 {
      %c0_252 = arith.constant 0 : index
      %c0_253 = arith.constant 0 : index
      %544 = vector.load %arg11[%c0_252, %c0_253] : memref<8x128xf32, #tpu.memory_space<vmem>>, vector<8x128xf32>
      %c0_254 = arith.constant 0 : index
      %c0_255 = arith.constant 0 : index
      %c0_256 = arith.constant 0 : index
      %545 = vector.load %arg8[%c0_254, %c0_255, %c0_256] : memref<1x8x128xf32, #tpu.memory_space<vmem>>, vector<1x8x128xf32>
      %546 = vector.shape_cast %545 : vector<1x8x128xf32> to vector<8x128xf32>
      %547 = vector.shape_cast %544 : vector<8x128xf32> to vector<1x8x128xf32>
      tpu.vector_store %arg8[%c0_254, %c0_255, %c0_256], %547 {strides = array<i32>} : memref<1x8x128xf32, #tpu.memory_space<vmem>>, vector<1x8x128xf32>,
      %c0_257 = arith.constant 0 : index
      %c0_258 = arith.constant 0 : index
      %548 = vector.load %arg12[%c0_257, %c0_258] : memref<8x128xf32, #tpu.memory_space<vmem>>, vector<8x128xf32>
      %c0_259 = arith.constant 0 : index
      %c0_260 = arith.constant 0 : index
      %c0_261 = arith.constant 0 : index
      %549 = vector.load %arg9[%c0_259, %c0_260, %c0_261] : memref<1x8x128xf32, #tpu.memory_space<vmem>>, vector<1x8x128xf32>
      %550 = vector.shape_cast %549 : vector<1x8x128xf32> to vector<8x128xf32>
      %551 = vector.shape_cast %548 : vector<8x128xf32> to vector<1x8x128xf32>
      tpu.vector_store %arg9[%c0_259, %c0_260, %c0_261], %551 {strides = array<i32>} : memref<1x8x128xf32, #tpu.memory_space<vmem>>, vector<1x8x128xf32>,
    } else {
    }
    return
  }
  func.func @transform_0(%arg0: i32, %arg1: i32) -> (i32, i32, i32) {
    %c2_i32 = arith.constant 2 : i32
    %0 = arith.muli %c2_i32, %arg1 : i32
    %c0_i32 = arith.constant 0 : i32
    %1 = arith.subi %c0_i32, %0 : i32
    %2 = arith.muli %arg0, %1 : i32
    %3 = arith.addi %arg1, %2 : i32
    %c0_i32_0 = arith.constant 0 : i32
    %c0_i32_1 = arith.constant 0 : i32
    %c0_i32_2 = arith.constant 0 : i32
    return %3, %c0_i32_0, %c0_i32_1 : i32, i32, i32
  }
  func.func @transform_1(%arg0: i32, %arg1: i32) -> (i32, i32) {
    %c0_i32 = arith.constant 0 : i32
    %c0_i32_0 = arith.constant 0 : i32
    %c0_i32_1 = arith.constant 0 : i32
    return %c0_i32, %c0_i32_0 : i32, i32
  }
  func.func @transform_2(%arg0: i32, %arg1: i32) -> (i32, i32, i32) {
    %c0_i32 = arith.constant 0 : i32
    %c0_i32_0 = arith.constant 0 : i32
    %c0_i32_1 = arith.constant 0 : i32
    return %arg0, %c0_i32, %c0_i32_0 : i32, i32, i32
  }
  func.func @transform_3(%arg0: i32, %arg1: i32) -> (i32, i32, i32) {
    %c0_i32 = arith.constant 0 : i32
    %c0_i32_0 = arith.constant 0 : i32
    %c0_i32_1 = arith.constant 0 : i32
    return %arg0, %c0_i32, %c0_i32_0 : i32, i32, i32
  }
  func.func @transform_4(%arg0: i32, %arg1: i32) -> (i32, i32, i32) {
    %c0_i32 = arith.constant 0 : i32
    %c0_i32_0 = arith.constant 0 : i32
    %c0_i32_1 = arith.constant 0 : i32
    return %arg0, %c0_i32, %c0_i32_0 : i32, i32, i32
  }
  func.func @transform_5(%arg0: i32, %arg1: i32) -> (i32, i32, i32, i32) {
    %c2_i32 = arith.constant 2 : i32
    %0 = arith.muli %c2_i32, %arg1 : i32
    %c0_i32 = arith.constant 0 : i32
    %1 = arith.subi %c0_i32, %0 : i32
    %2 = arith.muli %arg0, %1 : i32
    %3 = arith.addi %arg1, %2 : i32
    %c0_i32_0 = arith.constant 0 : i32
    %c0_i32_1 = arith.constant 0 : i32
    %c0_i32_2 = arith.constant 0 : i32
    return %arg0, %3, %c0_i32_0, %c0_i32_1 : i32, i32, i32, i32
  }
  func.func @transform_6(%arg0: i32, %arg1: i32) -> (i32, i32, i32) {
    %c0_i32 = arith.constant 0 : i32
    %c0_i32_0 = arith.constant 0 : i32
    %c0_i32_1 = arith.constant 0 : i32
    return %arg0, %c0_i32, %c0_i32_0 : i32, i32, i32
  }
  func.func @transform_7(%arg0: i32, %arg1: i32) -> (i32, i32, i32) {
    %c0_i32 = arith.constant 0 : i32
    %c0_i32_0 = arith.constant 0 : i32
    %c0_i32_1 = arith.constant 0 : i32
    return %arg0, %c0_i32, %c0_i32_0 : i32, i32, i32
  }
}

</mosaic_0001>

<llo_original>
// kernel: tpu_custom_call.1
$region0: #{tpu_custom_call.1}
  #allocation0 [shape = 'u32[]', space=smem, size = 0x4, offset = 0x4, fixed_abs, tag = 'smem constant byte address 0x4 - core index']
  #allocation1 [shape = 'u32[144,128]{1,0:T(1,128)}', space=vmem, size = 0x12000, scoped, tag = 'internal scratch']
  #allocation2 [shape = 'f32[8,8,512]{2,1,0:T(8,128)}', space=vmem, size = 0x20000, scoped, tag = 'scratch operand']
  #allocation3 [shape = 'f32[8,128]{1,0:T(8,128)}', space=vmem, size = 0x1000, scoped, tag = 'scratch operand']
  #allocation4 [shape = 'f32[8,128]{1,0:T(8,128)}', space=vmem, size = 0x1000, scoped, tag = 'scratch operand']
  %s0 = inlined_call_operand.hbm [shape: bf16[8,8,16], index: 0, kind: input, shape index: {}]
  %s1 = inlined_call_operand.vmem [shape: s32[8,1], index: 1, kind: input, shape index: {}]
  %s2 = inlined_call_operand.hbm [shape: bf16[2,16,512], index: 2, kind: input, shape index: {}]
  %s3 = inlined_call_operand.hbm [shape: bf16[2,128,512], index: 3, kind: input, shape index: {}]
  %s4 = inlined_call_operand.vmem [shape: f32[2,1,512], index: 4, kind: input, shape index: {}]
  %s5 = inlined_call_operand.hbm [shape: bf16[2,8,8,128], index: 5, kind: output, shape index: {0}]
  %s6 = inlined_call_operand.hbm [shape: f32[2,8,128], index: 6, kind: output, shape index: {1}]
  %s7 = inlined_call_operand.hbm [shape: f32[2,8,128], index: 7, kind: output, shape index: {2}]
  %8 = xla_tuple %s5, %s6, %s7
  %s9 = sld [smem:[#allocation0]]
  $region89: #{tpu_custom_call.1} parent=0
    _
  %s11 = ssub.s32 1, %s9
  %s12 = scalar_select 0, %s11, %s9
  $region1: #{tpu_custom_call.1} parent=0
    #allocation5 [shape = 'u8[32768]{0}', space=vmem, size = 0x8000, scoped, tag = 'input window, operand 0']
    #allocation6 [shape = 's32[2]{0}', space=sflag, size = 0x8, scoped, tag = 'scoped memory for tpu_custom_call.1']
    #allocation7 [shape = 's32[2]{0}', space=sflag, size = 0x8, scoped, tag = 'scoped memory for tpu_custom_call.1']
    #allocation8 [shape = 'u8[32768]{0}', space=vmem, size = 0x8000, scoped, tag = 'input window, operand 2']
    #allocation9 [shape = 's32[2]{0}', space=sflag, size = 0x8, scoped, tag = 'scoped memory for tpu_custom_call.1']
    #allocation10 [shape = 'u8[262144]{0}', space=vmem, size = 0x40000, scoped, tag = 'input window, operand 3']
    #allocation11 [shape = 'u8[32768]{0}', space=vmem, size = 0x8000, scoped, tag = 'output window, operand 0']
    #allocation12 [shape = 'u8[8192]{0}', space=vmem, size = 0x2000, scoped, tag = 'output window, operand 1']
    #allocation13 [shape = 's32[2]{0}', space=sflag, size = 0x8, scoped, tag = 'scoped memory for tpu_custom_call.1']
    #allocation14 [shape = 'u8[8192]{0}', space=vmem, size = 0x2000, scoped, tag = 'output window, operand 2']
    %13 = vsyncpa [#allocation6], 0
    %s14 = scalar_lea.sflag [#allocation6], 1
    %15 = vsyncpa %s14, 0
    %16 = vsyncpa [#allocation9], 0
    %s17 = scalar_lea.sflag [#allocation9], 1
    %18 = vsyncpa %s17, 0
    %19 = vsyncpa [#allocation7], 0
    %s20 = scalar_lea.sflag [#allocation7], 1
    %21 = vsyncpa %s20, 0
    %22 = vsyncpa [#allocation13], 0
    %s23 = scalar_lea.sflag [#allocation13], 1
    %24 = vsyncpa %s23, 0
    loop: start=0, step=1, limit=4
    $region2: #{tpu_custom_call.1} parent=1 // loop_pre_header
      _
    $region3: #{tpu_custom_call.1} parent=1 // loop_header
      %s26 = sphi 0, %s30
      %p27 = scmp.ge.s32.totalorder %s26, 4
      %s33 = sphi 0, %s45
      %s34 = sphi 0, %s41
      %s35 = sphi 0, %s33
      %s36 = sphi 0, %s34
      %s37 = sphi 0, %s35
      %s38 = sphi 0, %s36
      %s56 = sphi 0, %s58
      %s59 = sphi 0, %s56
      %s60 = sphi 0, %s59
      %s76 = sphi 0, %s60
      %s80 = sphi 0, %s80
      %s82 = sphi 0, %s80
      %s83 = sphi 0, %s82
      %s97 = sphi 0, %s83
      %s103 = sphi 0, %s105
      %s106 = sphi 0, %s103
      %s107 = sphi 0, %s106
      %s123 = sphi 0, %s107
      %s129 = sphi 0, %s131
      %s132 = sphi 0, %s129
      %s133 = sphi 0, %s132
      %s149 = sphi 0, %s133
      %s155 = sphi 0, %s157
      %s158 = sphi 0, %s155
      %s159 = sphi 0, %s158
      %s175 = sphi 0, %s159
      %s191 = sphi 0, %s193
      %s194 = sphi 0, %s191
      %s195 = sphi 0, %s194
      %s211 = sphi 0, %s195
      %s217 = sphi 0, %s219
      %s220 = sphi 0, %s217
      %s221 = sphi 0, %s220
      %s237 = sphi 0, %s221
      %s243 = sphi 0, %s245
      %s246 = sphi 0, %s243
      %s247 = sphi 0, %s246
      %s263 = sphi 0, %s247
    $region4: #{tpu_custom_call.1} parent=1 // loop_header_branch
      %29 = sbr.rel (%p27) target = $region8
    $region5: #{tpu_custom_call.1} parent=1 // loop_body
      %s31 = ssub.s32 %s26, 1
      %s32 = ssub.s32 %s26, 2
      %s39 = sadd.s32 1, %s34
      %p40 = scmp.ge.s32.totalorder %s39, 1
      %s41 = scalar_select %p40, 0, %s39
      %s42 = sadd.s32 1, %s33
      %s43 = scalar_select %p40, %s42, %s33
      %p44 = scmp.ge.s32.totalorder %s43, 2
      %s45 = scalar_select %p44, 0, %s43
      %s46 = smul.u32 %s34, 2
      %s47 = ssub.s32 0, %s46
      %s48 = smul.u32 %s33, %s47
      %s49 = sadd.s32 %s34, %s48
      %s50 = smul.u32 %s41, 2
      %s51 = ssub.s32 0, %s50
      %s52 = smul.u32 %s45, %s51
      %s53 = sadd.s32 %s41, %s52
      %s54 = ssub.s32 %s49, %s53
      %p55 = scmp.eq.s32.totalorder %s54, 0
      %s57 = sadd.s32 %s56, 1
      %s58 = scalar_select %p55, %s56, %s57
      %p61 = pneg %p55
      %p62 = scmp.eq.s32.totalorder %s26, 1
      %p63 = por %p61, %p62
      %p64 = scmp.ne.s32.totalorder %s56, %s59
      %p65 = scmp.eq.s32.totalorder %s26, 0
      %p66 = por %p64, %p65
      %p67 = scmp.ne.s32.totalorder %s56, %s59
      %p68 = scmp.eq.s32.totalorder %s31, 1
      %p69 = por %p67, %p68
      %p70 = scmp.ne.s32.totalorder %s59, %s60
      %p71 = scmp.eq.s32.totalorder %s31, 0
      %p72 = por %p70, %p71
      %p73 = scmp.ne.s32.totalorder %s59, %s60
      %p74 = scmp.eq.s32.totalorder %s32, 1
      %p75 = por %p73, %p74
      %p77 = scmp.ne.s32.totalorder %s60, %s76
      %p78 = scmp.eq.s32.totalorder %s32, 0
      %p79 = por %p77, %p78
      %s81 = sadd.s32 %s80, 1
      %p84 = scmp.eq.s32.totalorder %s26, 1
      %p85 = scmp.ne.s32.totalorder %s80, %s82
      %p86 = scmp.eq.s32.totalorder %s26, 0
      %p87 = por %p85, %p86
      %p88 = scmp.ne.s32.totalorder %s80, %s82
      %p89 = scmp.eq.s32.totalorder %s31, 1
      %p90 = por %p88, %p89
      %p91 = scmp.ne.s32.totalorder %s82, %s83
      %p92 = scmp.eq.s32.totalorder %s31, 0
      %p93 = por %p91, %p92
      %p94 = scmp.ne.s32.totalorder %s82, %s83
      %p95 = scmp.eq.s32.totalorder %s32, 1
      %p96 = por %p94, %p95
      %p98 = scmp.ne.s32.totalorder %s83, %s97
      %p99 = scmp.eq.s32.totalorder %s32, 0
      %p100 = por %p98, %p99
      %s101 = ssub.s32 %s33, %s45
      %p102 = scmp.eq.s32.totalorder %s101, 0
      %s104 = sadd.s32 %s103, 1
      %s105 = scalar_select %p102, %s103, %s104
      %p108 = pneg %p102
      %p109 = scmp.eq.s32.totalorder %s26, 1
      %p110 = por %p108, %p109
      %p111 = scmp.ne.s32.totalorder %s103, %s106
      %p112 = scmp.eq.s32.totalorder %s26, 0
      %p113 = por %p111, %p112
      %p114 = scmp.ne.s32.totalorder %s103, %s106
      %p115 = scmp.eq.s32.totalorder %s31, 1
      %p116 = por %p114, %p115
      %p117 = scmp.ne.s32.totalorder %s106, %s107
      %p118 = scmp.eq.s32.totalorder %s31, 0
      %p119 = por %p117, %p118
      %p120 = scmp.ne.s32.totalorder %s106, %s107
      %p121 = scmp.eq.s32.totalorder %s32, 1
      %p122 = por %p120, %p121
      %p124 = scmp.ne.s32.totalorder %s107, %s123
      %p125 = scmp.eq.s32.totalorder %s32, 0
      %p126 = por %p124, %p125
      %s127 = ssub.s32 %s33, %s45
      %p128 = scmp.eq.s32.totalorder %s127, 0
      %s130 = sadd.s32 %s129, 1
      %s131 = scalar_select %p128, %s129, %s130
      %p134 = pneg %p128
      %p135 = scmp.eq.s32.totalorder %s26, 1
      %p136 = por %p134, %p135
      %p137 = scmp.ne.s32.totalorder %s129, %s132
      %p138 = scmp.eq.s32.totalorder %s26, 0
      %p139 = por %p137, %p138
      %p140 = scmp.ne.s32.totalorder %s129, %s132
      %p141 = scmp.eq.s32.totalorder %s31, 1
      %p142 = por %p140, %p141
      %p143 = scmp.ne.s32.totalorder %s132, %s133
      %p144 = scmp.eq.s32.totalorder %s31, 0
      %p145 = por %p143, %p144
      %p146 = scmp.ne.s32.totalorder %s132, %s133
      %p147 = scmp.eq.s32.totalorder %s32, 1
      %p148 = por %p146, %p147
      %p150 = scmp.ne.s32.totalorder %s133, %s149
      %p151 = scmp.eq.s32.totalorder %s32, 0
      %p152 = por %p150, %p151
      %s153 = ssub.s32 %s33, %s45
      %p154 = scmp.eq.s32.totalorder %s153, 0
      %s156 = sadd.s32 %s155, 1
      %s157 = scalar_select %p154, %s155, %s156
      %p160 = pneg %p154
      %p161 = scmp.eq.s32.totalorder %s26, 1
      %p162 = por %p160, %p161
      %p163 = scmp.ne.s32.totalorder %s155, %s158
      %p164 = scmp.eq.s32.totalorder %s26, 0
      %p165 = por %p163, %p164
      %p166 = scmp.ne.s32.totalorder %s155, %s158
      %p167 = scmp.eq.s32.totalorder %s31, 1
      %p168 = por %p166, %p167
      %p169 = scmp.ne.s32.totalorder %s158, %s159
      %p170 = scmp.eq.s32.totalorder %s31, 0
      %p171 = por %p169, %p170
      %p172 = scmp.ne.s32.totalorder %s158, %s159
      %p173 = scmp.eq.s32.totalorder %s32, 1
      %p174 = por %p172, %p173
      %p176 = scmp.ne.s32.totalorder %s159, %s175
      %p177 = scmp.eq.s32.totalorder %s32, 0
      %p178 = por %p176, %p177
      %s179 = smul.u32 %s34, 2
      %s180 = ssub.s32 0, %s179
      %s181 = smul.u32 %s33, %s180
      %s182 = sadd.s32 %s34, %s181
      %s183 = smul.u32 %s41, 2
      %s184 = ssub.s32 0, %s183
      %s185 = smul.u32 %s45, %s184
      %s186 = sadd.s32 %s41, %s185
      %s187 = ssub.s32 %s33, %s45
      %s188 = ssub.s32 %s182, %s186
      %s189 = sor.u32 %s187, %s188
      %p190 = scmp.eq.s32.totalorder %s189, 0
      %s192 = sadd.s32 %s191, 1
      %s193 = scalar_select %p190, %s191, %s192
      %p196 = pneg %p190
      %p197 = scmp.eq.s32.totalorder %s26, 1
      %p198 = por %p196, %p197
      %p199 = scmp.ne.s32.totalorder %s191, %s194
      %p200 = scmp.eq.s32.totalorder %s26, 0
      %p201 = por %p199, %p200
      %p202 = scmp.ne.s32.totalorder %s191, %s194
      %p203 = scmp.eq.s32.totalorder %s31, 1
      %p204 = por %p202, %p203
      %p205 = scmp.ne.s32.totalorder %s194, %s195
      %p206 = scmp.eq.s32.totalorder %s31, 0
      %p207 = por %p205, %p206
      %p208 = scmp.ne.s32.totalorder %s194, %s195
      %p209 = scmp.eq.s32.totalorder %s32, 1
      %p210 = por %p208, %p209
      %p212 = scmp.ne.s32.totalorder %s195, %s211
      %p213 = scmp.eq.s32.totalorder %s32, 0
      %p214 = por %p212, %p213
      %s215 = ssub.s32 %s33, %s45
      %p216 = scmp.eq.s32.totalorder %s215, 0
      %s218 = sadd.s32 %s217, 1
      %s219 = scalar_select %p216, %s217, %s218
      %p222 = pneg %p216
      %p223 = scmp.eq.s32.totalorder %s26, 1
      %p224 = por %p222, %p223
      %p225 = scmp.ne.s32.totalorder %s217, %s220
      %p226 = scmp.eq.s32.totalorder %s26, 0
      %p227 = por %p225, %p226
      %p228 = scmp.ne.s32.totalorder %s217, %s220
      %p229 = scmp.eq.s32.totalorder %s31, 1
      %p230 = por %p228, %p229
      %p231 = scmp.ne.s32.totalorder %s220, %s221
      %p232 = scmp.eq.s32.totalorder %s31, 0
      %p233 = por %p231, %p232
      %p234 = scmp.ne.s32.totalorder %s220, %s221
      %p235 = scmp.eq.s32.totalorder %s32, 1
      %p236 = por %p234, %p235
      %p238 = scmp.ne.s32.totalorder %s221, %s237
      %p239 = scmp.eq.s32.totalorder %s32, 0
      %p240 = por %p238, %p239
      %s241 = ssub.s32 %s33, %s45
      %p242 = scmp.eq.s32.totalorder %s241, 0
      %s244 = sadd.s32 %s243, 1
      %s245 = scalar_select %p242, %s243, %s244
      %p248 = pneg %p242
      %p249 = scmp.eq.s32.totalorder %s26, 1
      %p250 = por %p248, %p249
      %p251 = scmp.ne.s32.totalorder %s243, %s246
      %p252 = scmp.eq.s32.totalorder %s26, 0
      %p253 = por %p251, %p252
      %p254 = scmp.ne.s32.totalorder %s243, %s246
      %p255 = scmp.eq.s32.totalorder %s31, 1
      %p256 = por %p254, %p255
      %p257 = scmp.ne.s32.totalorder %s246, %s247
      %p258 = scmp.eq.s32.totalorder %s31, 0
      %p259 = por %p257, %p258
      %p260 = scmp.ne.s32.totalorder %s246, %s247
      %p261 = scmp.eq.s32.totalorder %s32, 1
      %p262 = por %p260, %p261
      %p264 = scmp.ne.s32.totalorder %s247, %s263
      %p265 = scmp.eq.s32.totalorder %s32, 0
      %p266 = por %p264, %p265
      %p267 = scmp.le.s32.totalorder 1, %s26
      %p268 = scmp.lt.s32.totalorder %s26, 3
      %p269 = pnand %p267, %p268
      %p270 = pneg %p269
      // Predicated region
      $region9: #{tpu_custom_call.1} parent=5 // pred_check
        _
      $region10: #{tpu_custom_call.1} parent=5 // pred_check_branch
        %272 = sbr.rel (%p269) target = $region12
      $region11: #{tpu_custom_call.1} parent=5 // pred_region
        %s273 = ssub.s32 %s26, 1
        // Predicated region
        $region13: #{tpu_custom_call.1} parent=11 // pred_check
          %p274 = pneg %p93
        $region14: #{tpu_custom_call.1} parent=11 // pred_check_branch
          %276 = sbr.rel (%p274) target = $region16
        $region15: #{tpu_custom_call.1} parent=11 // pred_region
          _
        $region16: #{tpu_custom_call.1} parent=11 // pred_fallthru
          _
      $region12: #{tpu_custom_call.1} parent=5 // pred_fallthru
        _
      %p277 = scmp.lt.s32.totalorder %s26, 2
      // Predicated region
      $region17: #{tpu_custom_call.1} parent=5 // pred_check
        %p278 = pneg %p277
      $region18: #{tpu_custom_call.1} parent=5 // pred_check_branch
        %280 = sbr.rel (%p278) target = $region20
      $region19: #{tpu_custom_call.1} parent=5 // pred_region
        // Predicated region
        $region21: #{tpu_custom_call.1} parent=19 // pred_check
          %p281 = pneg %p66
        $region22: #{tpu_custom_call.1} parent=19 // pred_check_branch
          %283 = sbr.rel (%p281) target = $region24
        $region23: #{tpu_custom_call.1} parent=19 // pred_region
          %s284 = sand.u32 %s56, 1
          %s285 = scalar_lea.sflag [#allocation6], %s284
          %s286 = sand.u32 %s56, 1
          %s287 = smul.addr %s286, 32
          %s288 = scalar_lea.vmem [#allocation5], %s287
          %s289 = smul.u32 %s34, 2
          %s290 = ssub.s32 0, %s289
          %s291 = smul.u32 %s33, %s290
          %s292 = sadd.s32 %s34, %s291
          %s293 = smul.u32 8, %s292
          %s295 = ssub.s32 512, 512
          %296 = vsyncadd %s285, %s295
          %s297 = smul.addr %s293, 64
          %s298 = scalar_lea.hbm %s0, %s297
          %s299 = sshll.u32 %s288, 4
          %s300 = int_to_ptr.vmem [resolvable:$true] %s299
          %305 = dma.hbm_to_vmem [thread:$0]  %s298, 512, %s300, %s285, 64, 64, 4
        $region24: #{tpu_custom_call.1} parent=19 // pred_fallthru
          _
        // Predicated region
        $region25: #{tpu_custom_call.1} parent=19 // pred_check
          %p306 = pneg %p113
        $region26: #{tpu_custom_call.1} parent=19 // pred_check_branch
          %308 = sbr.rel (%p306) target = $region28
        $region27: #{tpu_custom_call.1} parent=19 // pred_region
          %s309 = sand.u32 %s26, 1
          %s310 = scalar_lea.sflag [#allocation9], %s309
          %s311 = sand.u32 %s103, 1
          %s312 = smul.addr %s311, 32
          %s313 = scalar_lea.vmem [#allocation8], %s312
          %s315 = ssub.s32 512, 512
          %316 = vsyncadd %s310, %s315
          %s317 = smul.addr %s33, 8
          %s318 = smul.addr %s317, 64
          %s319 = scalar_lea.hbm %s2, %s318
          %s320 = sshll.u32 %s313, 4
          %s321 = int_to_ptr.vmem [resolvable:$true] %s320
          %326 = dma.hbm_to_vmem [thread:$0]  %s319, 512, %s321, %s310, 256, 256, 16
        $region28: #{tpu_custom_call.1} parent=19 // pred_fallthru
          _
        // Predicated region
        $region29: #{tpu_custom_call.1} parent=19 // pred_check
          %p327 = pneg %p139
        $region30: #{tpu_custom_call.1} parent=19 // pred_check_branch
          %329 = sbr.rel (%p327) target = $region32
        $region31: #{tpu_custom_call.1} parent=19 // pred_region
          %s330 = sand.u32 %s26, 1
          %s331 = scalar_lea.sflag [#allocation9], %s330
          %s332 = sand.u32 %s129, 1
          %s333 = smul.addr %s332, 256
          %s334 = scalar_lea.vmem [#allocation10], %s333
          %s336 = ssub.s32 4096, 4096
          %337 = vsyncadd %s331, %s336
          %s338 = smul.addr %s33, 64
          %s339 = smul.addr %s338, 64
          %s340 = scalar_lea.hbm %s3, %s339
          %s341 = sshll.u32 %s334, 4
          %s342 = int_to_ptr.vmem [resolvable:$true] %s341
          %347 = dma.hbm_to_vmem [thread:$0]  %s340, 4096, %s342, %s331, 256, 256, 16
        $region32: #{tpu_custom_call.1} parent=19 // pred_fallthru
          _
        // Predicated region
        $region33: #{tpu_custom_call.1} parent=19 // pred_check
          %p348 = pneg %p165
        $region34: #{tpu_custom_call.1} parent=19 // pred_check_branch
          %350 = sbr.rel (%p348) target = $region36
        $region35: #{tpu_custom_call.1} parent=19 // pred_region
          %p351 = scmp.lt.s32.totalorder %s33, 1
          %s352 = scalar_select %p351, %s33, 1
          %s353 = smul.addr %s352, 4
          %s354 = scalar_lea.vmem %s4, %s353
        $region36: #{tpu_custom_call.1} parent=19 // pred_fallthru
          _
      $region20: #{tpu_custom_call.1} parent=5 // pred_fallthru
        _
      %p355 = scmp.le.s32.totalorder 1, %s26
      %p356 = scmp.lt.s32.totalorder %s26, 3
      %p357 = pnand %p355, %p356
      %p358 = pneg %p357
      // Predicated region
      $region37: #{tpu_custom_call.1} parent=5 // pred_check
        _
      $region38: #{tpu_custom_call.1} parent=5 // pred_check_branch
        %360 = sbr.rel (%p357) target = $region40
      $region39: #{tpu_custom_call.1} parent=5 // pred_region
        %s361 = ssub.s32 %s26, 1
        %s362 = sand.u32 %s59, 1
        %s363 = scalar_lea.sflag [#allocation6], %s362
        %s364 = sand.u32 %s59, 1
        %s365 = smul.addr %s364, 32
        %s366 = scalar_lea.vmem [#allocation5], %s365
        // Predicated region
        $region41: #{tpu_custom_call.1} parent=39 // pred_check
          %p367 = pneg %p72
        $region42: #{tpu_custom_call.1} parent=39 // pred_check_branch
          %369 = sbr.rel (%p367) target = $region44
        $region43: #{tpu_custom_call.1} parent=39 // pred_region
          %370 = dma.done %s363, 512
        $region44: #{tpu_custom_call.1} parent=39 // pred_fallthru
          _
        %s371 = sand.u32 %s31, 1
        %s372 = scalar_lea.sflag [#allocation9], %s371
        %s373 = sand.u32 %s106, 1
        %s374 = smul.addr %s373, 32
        %s375 = scalar_lea.vmem [#allocation8], %s374
        // Predicated region
        $region45: #{tpu_custom_call.1} parent=39 // pred_check
          %p376 = pneg %p119
        $region46: #{tpu_custom_call.1} parent=39 // pred_check_branch
          %378 = sbr.rel (%p376) target = $region48
        $region47: #{tpu_custom_call.1} parent=39 // pred_region
          %379 = dma.done %s372, 512
        $region48: #{tpu_custom_call.1} parent=39 // pred_fallthru
          _
        %s380 = sand.u32 %s31, 1
        %s381 = scalar_lea.sflag [#allocation9], %s380
        %s382 = sand.u32 %s132, 1
        %s383 = smul.addr %s382, 256
        %s384 = scalar_lea.vmem [#allocation10], %s383
        // Predicated region
        $region49: #{tpu_custom_call.1} parent=39 // pred_check
          %p385 = pneg %p145
        $region50: #{tpu_custom_call.1} parent=39 // pred_check_branch
          %387 = sbr.rel (%p385) target = $region52
        $region51: #{tpu_custom_call.1} parent=39 // pred_region
          %388 = dma.done %s381, 4096
        $region52: #{tpu_custom_call.1} parent=39 // pred_fallthru
          _
        %s389 = sand.u32 %s59, 1
        %s390 = scalar_lea.sflag [#allocation6], %s389
        %s391 = sand.u32 %s59, 1
        %s392 = smul.addr %s391, 32
        %s393 = scalar_lea.vmem [#allocation5], %s392
        %p394 = pneg %p72
        %p395 = pneg %p69
        %p396 = pneg %p93
        %p397 = pneg %p90
        %s398 = sand.u32 %s31, 1
        %s399 = scalar_lea.sflag [#allocation9], %s398
        %s400 = sand.u32 %s106, 1
        %s401 = smul.addr %s400, 32
        %s402 = scalar_lea.vmem [#allocation8], %s401
        %p403 = pneg %p119
        %p404 = pneg %p116
        %s405 = sand.u32 %s31, 1
        %s406 = scalar_lea.sflag [#allocation9], %s405
        %s407 = sand.u32 %s132, 1
        %s408 = smul.addr %s407, 256
        %s409 = scalar_lea.vmem [#allocation10], %s408
        %p410 = pneg %p145
        %p411 = pneg %p142
        %p412 = scmp.lt.s32.totalorder %s35, 1
        %s413 = scalar_select %p412, %s35, 1
        %s414 = smul.addr %s413, 4
        %s415 = scalar_lea.vmem %s4, %s414
        %p416 = pneg %p171
        %p417 = pneg %p168
        %p418 = pneg %p207
        %p419 = pneg %p204
        %s420 = sand.u32 %s194, 1
        %s421 = scalar_lea.sflag [#allocation7], %s420
        %s422 = sand.u32 %s194, 1
        %s423 = smul.addr %s422, 32
        %s424 = scalar_lea.vmem [#allocation11], %s423
        %p425 = pneg %p233
        %p426 = pneg %p230
        %s427 = sand.u32 %s31, 1
        %s428 = scalar_lea.sflag [#allocation13], %s427
        %s429 = sand.u32 %s220, 1
        %s430 = smul.addr %s429, 8
        %s431 = scalar_lea.vmem [#allocation12], %s430
        %p432 = pneg %p259
        %p433 = pneg %p256
        %s434 = sand.u32 %s31, 1
        %s435 = scalar_lea.sflag [#allocation13], %s434
        %s436 = sand.u32 %s246, 1
        %s437 = smul.addr %s436, 8
        %s438 = scalar_lea.vmem [#allocation14], %s437
        %s439 = smul.u32 %s36, 2
        %s440 = ssub.s32 0, %s439
        %s441 = smul.u32 %s35, %s440
        %s442 = sadd.s32 %s36, %s441
        %s443 = smul.u32 8, %s442
        %p444 = scmp.lt.s32.totalorder %s35, 1
        %s445 = scalar_select %p444, %s35, 1
        %s446 = smul.addr %s445, 4
        %s447 = scalar_lea.vmem %s4, %s446
        %s448 = smul.u32 %s36, 2
        %s449 = ssub.s32 0, %s448
        %s450 = smul.u32 %s35, %s449
        %s451 = sadd.s32 %s36, %s450
        %s452 = smul.u32 8, %s451
        %p454 = scmp.eq.s32.totalorder %s36, 0
        // Predicated region
        $region53: #{tpu_custom_call.1} parent=39 // pred_check
          %p455 = pneg %p454
        $region54: #{tpu_custom_call.1} parent=39 // pred_check_branch
          %457 = sbr.rel (%p455) target = $region56
        $region55: #{tpu_custom_call.1} parent=39 // pred_region
          %458 = vst [vmem:[#allocation3] sm:$0xff] 0.0
          %459 = vst [vmem:[#allocation4] sm:$0xff] 0.0
        $region56: #{tpu_custom_call.1} parent=39 // pred_fallthru
          _
        %v460 = vld [vmem:[%s366] sm:$0xf]
        %v461 = vld [vmem:[%s366 + $0x4] sm:$0xf]
        %v462 = vld [vmem:[%s366 + $0x8] sm:$0xf]
        %v463 = vld [vmem:[%s366 + $0xc] sm:$0xf]
        %v464 = vld [vmem:[%s366 + $0x10] sm:$0xf]
        %v465 = vld [vmem:[%s366 + $0x14] sm:$0xf]
        %v466 = vld [vmem:[%s366 + $0x18] sm:$0xf]
        %v467 = vld [vmem:[%s366 + $0x1c] sm:$0xf]
        %v468 = vld [vmem:[%s375] sm:$0xff]
        %v469 = vld [vmem:[%s375 + $0x8] sm:$0xff]
        %v470 = vld [vmem:[%s375 + $0x10] sm:$0xff]
        %v471 = vld [vmem:[%s375 + $0x18] sm:$0xff]
        %v480 = vunpack.c.l.b16 %v460
        %v481 = vunpack.c.l.b16 %v461
        %v482 = vunpack.c.l.b16 %v462
        %v483 = vunpack.c.l.b16 %v463
        %v484 = vunpack.c.l.b16 %v464
        %v485 = vunpack.c.l.b16 %v465
        %v486 = vunpack.c.l.b16 %v466
        %v487 = vunpack.c.l.b16 %v467
        %v488 = vpack.c.b16 %v481, %v480
        %v489 = vpack.c.b16 %v483, %v482
        %v490 = vpack.c.b16 %v485, %v484
        %v491 = vpack.c.b16 %v487, %v486
        %v496 = vunpack.c.l.b16 %v468
        %v497 = vunpack.c.h.b16 %v468
        %v498 = vunpack.c.l.b16 %v469
        %v499 = vunpack.c.h.b16 %v469
        %v500 = vunpack.c.l.b16 %v470
        %v501 = vunpack.c.h.b16 %v470
        %v502 = vunpack.c.l.b16 %v471
        %v503 = vunpack.c.h.b16 %v471
        %v504 = vpack.c.b16 %v500, %v496
        %v505 = vpack.c.b16 %v501, %v497
        %v506 = vpack.c.b16 %v502, %v498
        %v507 = vpack.c.b16 %v503, %v499
        %vm512 = vcmask 130048
        %v514 = vsel %vm512, %v488, 0
        %v517 = vsel %vm512, %v489, 0
        %v520 = vsel %vm512, %v490, 0
        %v523 = vsel %vm512, %v491, 0
        %525 = vmatprep.subr.bf16.mxu0 %v505
        %526 = vmatpush1.bf16.msra.mxu0 %v504
        %527 = vmatprep.subr.bf16.mxu0 0
        %528 = vmatpush1.bf16.msra.mxu0 0
        %529 = vmatprep.subr.bf16.mxu0 0
        %530 = vmatpush1.bf16.msra.mxu0 0
        %531 = vmatprep.subr.bf16.mxu0 0
        %532 = vmatpush1.bf16.msra.mxu0 0
        %533 = vmatprep.subr.bf16.mxu0 0
        %534 = vmatpush1.bf16.msra.mxu0 0
        %535 = vmatprep.subr.bf16.mxu0 0
        %536 = vmatpush1.bf16.msra.mxu0 0
        %537 = vmatprep.subr.bf16.mxu0 0
        %538 = vmatpush1.bf16.msra.mxu0 0
        %539 = vmatprep.subr.bf16.mxu0 0
        %540 = vmatpush1.bf16.msra.mxu0 0
        %541 = vmatprep.subr.bf16.mxu0 0
        %542 = vmatpush1.bf16.msra.mxu0 0
        %543 = vmatprep.subr.bf16.mxu0 0
        %544 = vmatpush1.bf16.msra.mxu0 0
        %545 = vmatprep.subr.bf16.mxu0 0
        %546 = vmatpush1.bf16.msra.mxu0 0
        %547 = vmatprep.subr.bf16.mxu0 0
        %548 = vmatpush1.bf16.msra.mxu0 0
        %549 = vmatprep.subr.bf16.mxu0 0
        %550 = vmatpush1.bf16.msra.mxu0 0
        %551 = vmatprep.subr.bf16.mxu0 0
        %552 = vmatpush1.bf16.msra.mxu0 0
        %553 = vmatprep.subr.bf16.mxu0 0
        %554 = vmatpush1.bf16.msra.mxu0 0
        %555 = vmatprep.subr.bf16.mxu0 0
        %556 = vmatpush1.bf16.msra.mxu0 0
        %557 = vmatprep.mubr.bf16.mxu0 0
        %558 = vmatmul.mubr.bf16.gmra.mrb[0].mxu0 %v514
        %v559 = vpop.f32.mrb[0].mxu0
        %v560 = vadd.f32 0.0, %v559
        %v561 = vpop.f32.mrb[0].mxu0
        %v562 = vadd.f32 0.0, %v561
        %v563 = vpop.f32.mrb[0].mxu0
        %v564 = vadd.f32 0.0, %v563
        %v565 = vpop.f32.mrb[0].mxu0
        %v566 = vadd.f32 0.0, %v565
        %567 = vmatprep.mubr.bf16.mxu0 0
        %568 = vmatmul.mubr.bf16.gmra.mrb[0].mxu0 %v517
        %v569 = vpop.f32.mrb[0].mxu0
        %v570 = vadd.f32 0.0, %v569
        %v571 = vpop.f32.mrb[0].mxu0
        %v572 = vadd.f32 0.0, %v571
        %v573 = vpop.f32.mrb[0].mxu0
        %v574 = vadd.f32 0.0, %v573
        %v575 = vpop.f32.mrb[0].mxu0
        %v576 = vadd.f32 0.0, %v575
        %577 = vmatprep.mubr.bf16.mxu0 0
        %578 = vmatmul.mubr.bf16.gmra.mrb[0].mxu0 %v520
        %v579 = vpop.f32.mrb[0].mxu0
        %v580 = vadd.f32 0.0, %v579
        %v581 = vpop.f32.mrb[0].mxu0
        %v582 = vadd.f32 0.0, %v581
        %v583 = vpop.f32.mrb[0].mxu0
        %v584 = vadd.f32 0.0, %v583
        %v585 = vpop.f32.mrb[0].mxu0
        %v586 = vadd.f32 0.0, %v585
        %587 = vmatprep.mubr.bf16.mxu0 0
        %588 = vmatmul.mubr.bf16.gmra.mrb[0].mxu0 %v523
        %v589 = vpop.f32.mrb[0].mxu0
        %v590 = vadd.f32 0.0, %v589
        %v591 = vpop.f32.mrb[0].mxu0
        %v592 = vadd.f32 0.0, %v591
        %v593 = vpop.f32.mrb[0].mxu0
        %v594 = vadd.f32 0.0, %v593
        %v595 = vpop.f32.mrb[0].mxu0
        %v596 = vadd.f32 0.0, %v595
        %597 = vdwg.mxu0
        %598 = vmatprep.subr.bf16.mxu0 %v507
        %599 = vmatpush1.bf16.msra.mxu0 %v506
        %600 = vmatprep.subr.bf16.mxu0 0
        %601 = vmatpush1.bf16.msra.mxu0 0
        %602 = vmatprep.subr.bf16.mxu0 0
        %603 = vmatpush1.bf16.msra.mxu0 0
        %604 = vmatprep.subr.bf16.mxu0 0
        %605 = vmatpush1.bf16.msra.mxu0 0
        %606 = vmatprep.subr.bf16.mxu0 0
        %607 = vmatpush1.bf16.msra.mxu0 0
        %608 = vmatprep.subr.bf16.mxu0 0
        %609 = vmatpush1.bf16.msra.mxu0 0
        %610 = vmatprep.subr.bf16.mxu0 0
        %611 = vmatpush1.bf16.msra.mxu0 0
        %612 = vmatprep.subr.bf16.mxu0 0
        %613 = vmatpush1.bf16.msra.mxu0 0
        %614 = vmatprep.subr.bf16.mxu0 0
        %615 = vmatpush1.bf16.msra.mxu0 0
        %616 = vmatprep.subr.bf16.mxu0 0
        %617 = vmatpush1.bf16.msra.mxu0 0
        %618 = vmatprep.subr.bf16.mxu0 0
        %619 = vmatpush1.bf16.msra.mxu0 0
        %620 = vmatprep.subr.bf16.mxu0 0
        %621 = vmatpush1.bf16.msra.mxu0 0
        %622 = vmatprep.subr.bf16.mxu0 0
        %623 = vmatpush1.bf16.msra.mxu0 0
        %624 = vmatprep.subr.bf16.mxu0 0
        %625 = vmatpush1.bf16.msra.mxu0 0
        %626 = vmatprep.subr.bf16.mxu0 0
        %627 = vmatpush1.bf16.msra.mxu0 0
        %628 = vmatprep.subr.bf16.mxu0 0
        %629 = vmatpush1.bf16.msra.mxu0 0
        %630 = vmatprep.mubr.bf16.mxu0 0
        %631 = vmatmul.mubr.bf16.gmra.mrb[0].mxu0 %v514
        %v632 = vpop.f32.mrb[0].mxu0
        %v633 = vadd.f32 0.0, %v632
        %v634 = vpop.f32.mrb[0].mxu0
        %v635 = vadd.f32 0.0, %v634
        %v636 = vpop.f32.mrb[0].mxu0
        %v637 = vadd.f32 0.0, %v636
        %v638 = vpop.f32.mrb[0].mxu0
        %v639 = vadd.f32 0.0, %v638
        %640 = vmatprep.mubr.bf16.mxu0 0
        %641 = vmatmul.mubr.bf16.gmra.mrb[0].mxu0 %v517
        %v642 = vpop.f32.mrb[0].mxu0
        %v643 = vadd.f32 0.0, %v642
        %v644 = vpop.f32.mrb[0].mxu0
        %v645 = vadd.f32 0.0, %v644
        %v646 = vpop.f32.mrb[0].mxu0
        %v647 = vadd.f32 0.0, %v646
        %v648 = vpop.f32.mrb[0].mxu0
        %v649 = vadd.f32 0.0, %v648
        %650 = vmatprep.mubr.bf16.mxu0 0
        %651 = vmatmul.mubr.bf16.gmra.mrb[0].mxu0 %v520
        %v652 = vpop.f32.mrb[0].mxu0
        %v653 = vadd.f32 0.0, %v652
        %v654 = vpop.f32.mrb[0].mxu0
        %v655 = vadd.f32 0.0, %v654
        %v656 = vpop.f32.mrb[0].mxu0
        %v657 = vadd.f32 0.0, %v656
        %v658 = vpop.f32.mrb[0].mxu0
        %v659 = vadd.f32 0.0, %v658
        %660 = vmatprep.mubr.bf16.mxu0 0
        %661 = vmatmul.mubr.bf16.gmra.mrb[0].mxu0 %v523
        %v662 = vpop.f32.mrb[0].mxu0
        %v663 = vadd.f32 0.0, %v662
        %v664 = vpop.f32.mrb[0].mxu0
        %v665 = vadd.f32 0.0, %v664
        %v666 = vpop.f32.mrb[0].mxu0
        %v667 = vadd.f32 0.0, %v666
        %v668 = vpop.f32.mrb[0].mxu0
        %v669 = vadd.f32 0.0, %v668
        %670 = vdwg.mxu0
        %v671 = vld [vmem:[%s447] sm:$0xf]
        %v673 = vlaneseq
        %v674 = vshrl.u32 %v673, 7
        %v675 = vsub.s32 0, %v674
        %v676 = vrot.slane %v671, %v675
        %v677 = vlaneseq
        %v678 = vshrl.u32 %v677, 7
        %v679 = vsub.s32 1, %v678
        %v680 = vrot.slane %v671, %v679
        %v681 = vlaneseq
        %v682 = vshrl.u32 %v681, 7
        %v683 = vsub.s32 2, %v682
        %v684 = vrot.slane %v671, %v683
        %v685 = vlaneseq
        %v686 = vshrl.u32 %v685, 7
        %v687 = vsub.s32 3, %v686
        %v688 = vrot.slane %v671, %v687
        %v693 = vadd.f32 %v560, %v676
        %v694 = vadd.f32 %v562, %v680
        %v695 = vadd.f32 %v633, %v684
        %v696 = vadd.f32 %v635, %v688
        %v697 = vadd.f32 %v564, %v676
        %v698 = vadd.f32 %v566, %v680
        %v699 = vadd.f32 %v637, %v684
        %v700 = vadd.f32 %v639, %v688
        %v701 = vadd.f32 %v570, %v676
        %v702 = vadd.f32 %v572, %v680
        %v703 = vadd.f32 %v643, %v684
        %v704 = vadd.f32 %v645, %v688
        %v705 = vadd.f32 %v574, %v676
        %v706 = vadd.f32 %v576, %v680
        %v707 = vadd.f32 %v647, %v684
        %v708 = vadd.f32 %v649, %v688
        %v709 = vadd.f32 %v580, %v676
        %v710 = vadd.f32 %v582, %v680
        %v711 = vadd.f32 %v653, %v684
        %v712 = vadd.f32 %v655, %v688
        %v713 = vadd.f32 %v584, %v676
        %v714 = vadd.f32 %v586, %v680
        %v715 = vadd.f32 %v657, %v684
        %v716 = vadd.f32 %v659, %v688
        %v717 = vadd.f32 %v590, %v676
        %v718 = vadd.f32 %v592, %v680
        %v719 = vadd.f32 %v663, %v684
        %v720 = vadd.f32 %v665, %v688
        %v721 = vadd.f32 %v594, %v676
        %v722 = vadd.f32 %v596, %v680
        %v723 = vadd.f32 %v667, %v684
        %v724 = vadd.f32 %v669, %v688
        %725 = vst [vmem:[#allocation2] sm:$0xff] %v693
        %726 = vst [vmem:[#allocation2 + $0x8] sm:$0xff] %v694
        %727 = vst [vmem:[#allocation2 + $0x10] sm:$0xff] %v695
        %728 = vst [vmem:[#allocation2 + $0x18] sm:$0xff] %v696
        %729 = vst [vmem:[#allocation2 + $0x20] sm:$0xff] %v697
        %730 = vst [vmem:[#allocation2 + $0x28] sm:$0xff] %v698
        %731 = vst [vmem:[#allocation2 + $0x30] sm:$0xff] %v699
        %732 = vst [vmem:[#allocation2 + $0x38] sm:$0xff] %v700
        %733 = vst [vmem:[#allocation2 + $0x40] sm:$0xff] %v701
        %734 = vst [vmem:[#allocation2 + $0x48] sm:$0xff] %v702
        %735 = vst [vmem:[#allocation2 + $0x50] sm:$0xff] %v703
        %736 = vst [vmem:[#allocation2 + $0x58] sm:$0xff] %v704
        %737 = vst [vmem:[#allocation2 + $0x60] sm:$0xff] %v705
        %738 = vst [vmem:[#allocation2 + $0x68] sm:$0xff] %v706
        %739 = vst [vmem:[#allocation2 + $0x70] sm:$0xff] %v707
        %740 = vst [vmem:[#allocation2 + $0x78] sm:$0xff] %v708
        %741 = vst [vmem:[#allocation2 + $0x80] sm:$0xff] %v709
        %742 = vst [vmem:[#allocation2 + $0x88] sm:$0xff] %v710
        %743 = vst [vmem:[#allocation2 + $0x90] sm:$0xff] %v711
        %744 = vst [vmem:[#allocation2 + $0x98] sm:$0xff] %v712
        %745 = vst [vmem:[#allocation2 + $0xa0] sm:$0xff] %v713
        %746 = vst [vmem:[#allocation2 + $0xa8] sm:$0xff] %v714
        %747 = vst [vmem:[#allocation2 + $0xb0] sm:$0xff] %v715
        %748 = vst [vmem:[#allocation2 + $0xb8] sm:$0xff] %v716
        %749 = vst [vmem:[#allocation2 + $0xc0] sm:$0xff] %v717
        %750 = vst [vmem:[#allocation2 + $0xc8] sm:$0xff] %v718
        %751 = vst [vmem:[#allocation2 + $0xd0] sm:$0xff] %v719
        %752 = vst [vmem:[#allocation2 + $0xd8] sm:$0xff] %v720
        %753 = vst [vmem:[#allocation2 + $0xe0] sm:$0xff] %v721
        %754 = vst [vmem:[#allocation2 + $0xe8] sm:$0xff] %v722
        %755 = vst [vmem:[#allocation2 + $0xf0] sm:$0xff] %v723
        %756 = vst [vmem:[#allocation2 + $0xf8] sm:$0xff] %v724
        %s757 = smul.u32 %s36, 2
        %s758 = ssub.s32 0, %s757
        %s759 = smul.u32 %s35, %s758
        %s760 = sadd.s32 %s36, %s759
        %s761 = smul.u32 %s760, 8
        %v762 = vld [vmem:[%s1] sm:$0xff]
        %s763 = smul.u32 %s35, 7
        %s764 = smul.u32 %s763, 4
        %s765 = smul.addr %s764, 8
        %s766 = scalar_lea.vmem [#allocation2], %s765
        %v767 = vld [vmem:[%s766] sm:$0xff]
        %v768 = vld [vmem:[%s766 + $0x8] sm:$0xff]
        %v769 = vld [vmem:[%s766 + $0x10] sm:$0xff]
        %v770 = vld [vmem:[%s766 + $0x18] sm:$0xff]
        %v771 = vld [vmem:[#allocation3] sm:$0xff]
        %v772 = vld [vmem:[#allocation4] sm:$0xff]
        %v773 = vpack.c.bf16 %v771, %v771
        %v774 = vld [vmem:[%s384] sm:$0xff]
        %v775 = vld [vmem:[%s384 + $0x8] sm:$0xff]
        %v776 = vld [vmem:[%s384 + $0x10] sm:$0xff]
        %v777 = vld [vmem:[%s384 + $0x18] sm:$0xff]
        %v778 = vld [vmem:[%s384 + $0x20] sm:$0xff]
        %v779 = vld [vmem:[%s384 + $0x28] sm:$0xff]
        %v780 = vld [vmem:[%s384 + $0x30] sm:$0xff]
        %v781 = vld [vmem:[%s384 + $0x38] sm:$0xff]
        %v782 = vld [vmem:[%s384 + $0x40] sm:$0xff]
        %v783 = vld [vmem:[%s384 + $0x48] sm:$0xff]
        %v784 = vld [vmem:[%s384 + $0x50] sm:$0xff]
        %v785 = vld [vmem:[%s384 + $0x58] sm:$0xff]
        %v786 = vld [vmem:[%s384 + $0x60] sm:$0xff]
        %v787 = vld [vmem:[%s384 + $0x68] sm:$0xff]
        %v788 = vld [vmem:[%s384 + $0x70] sm:$0xff]
        %v789 = vld [vmem:[%s384 + $0x78] sm:$0xff]
        %v790 = vld [vmem:[%s384 + $0x80] sm:$0xff]
        %v791 = vld [vmem:[%s384 + $0x88] sm:$0xff]
        %v792 = vld [vmem:[%s384 + $0x90] sm:$0xff]
        %v793 = vld [vmem:[%s384 + $0x98] sm:$0xff]
        %v794 = vld [vmem:[%s384 + $0xa0] sm:$0xff]
        %v795 = vld [vmem:[%s384 + $0xa8] sm:$0xff]
        %v796 = vld [vmem:[%s384 + $0xb0] sm:$0xff]
        %v797 = vld [vmem:[%s384 + $0xb8] sm:$0xff]
        %v798 = vld [vmem:[%s384 + $0xc0] sm:$0xff]
        %v799 = vld [vmem:[%s384 + $0xc8] sm:$0xff]
        %v800 = vld [vmem:[%s384 + $0xd0] sm:$0xff]
        %v801 = vld [vmem:[%s384 + $0xd8] sm:$0xff]
        %v802 = vld [vmem:[%s384 + $0xe0] sm:$0xff]
        %v803 = vld [vmem:[%s384 + $0xe8] sm:$0xff]
        %v804 = vld [vmem:[%s384 + $0xf0] sm:$0xff]
        %v805 = vld [vmem:[%s384 + $0xf8] sm:$0xff]
        %v838 = vunpack.c.l.b16 %v774
        %v839 = vunpack.c.h.b16 %v774
        %v840 = vunpack.c.l.b16 %v775
        %v841 = vunpack.c.h.b16 %v775
        %v842 = vunpack.c.l.b16 %v776
        %v843 = vunpack.c.h.b16 %v776
        %v844 = vunpack.c.l.b16 %v777
        %v845 = vunpack.c.h.b16 %v777
        %v846 = vunpack.c.l.b16 %v778
        %v847 = vunpack.c.h.b16 %v778
        %v848 = vunpack.c.l.b16 %v779
        %v849 = vunpack.c.h.b16 %v779
        %v850 = vunpack.c.l.b16 %v780
        %v851 = vunpack.c.h.b16 %v780
        %v852 = vunpack.c.l.b16 %v781
        %v853 = vunpack.c.h.b16 %v781
        %v854 = vunpack.c.l.b16 %v782
        %v855 = vunpack.c.h.b16 %v782
        %v856 = vunpack.c.l.b16 %v783
        %v857 = vunpack.c.h.b16 %v783
        %v858 = vunpack.c.l.b16 %v784
        %v859 = vunpack.c.h.b16 %v784
        %v860 = vunpack.c.l.b16 %v785
        %v861 = vunpack.c.h.b16 %v785
        %v862 = vunpack.c.l.b16 %v786
        %v863 = vunpack.c.h.b16 %v786
        %v864 = vunpack.c.l.b16 %v787
        %v865 = vunpack.c.h.b16 %v787
        %v866 = vunpack.c.l.b16 %v788
        %v867 = vunpack.c.h.b16 %v788
        %v868 = vunpack.c.l.b16 %v789
        %v869 = vunpack.c.h.b16 %v789
        %v870 = vunpack.c.l.b16 %v790
        %v871 = vunpack.c.h.b16 %v790
        %v872 = vunpack.c.l.b16 %v791
        %v873 = vunpack.c.h.b16 %v791
        %v874 = vunpack.c.l.b16 %v792
        %v875 = vunpack.c.h.b16 %v792
        %v876 = vunpack.c.l.b16 %v793
        %v877 = vunpack.c.h.b16 %v793
        %v878 = vunpack.c.l.b16 %v794
        %v879 = vunpack.c.h.b16 %v794
        %v880 = vunpack.c.l.b16 %v795
        %v881 = vunpack.c.h.b16 %v795
        %v882 = vunpack.c.l.b16 %v796
        %v883 = vunpack.c.h.b16 %v796
        %v884 = vunpack.c.l.b16 %v797
        %v885 = vunpack.c.h.b16 %v797
        %v886 = vunpack.c.l.b16 %v798
        %v887 = vunpack.c.h.b16 %v798
        %v888 = vunpack.c.l.b16 %v799
        %v889 = vunpack.c.h.b16 %v799
        %v890 = vunpack.c.l.b16 %v800
        %v891 = vunpack.c.h.b16 %v800
        %v892 = vunpack.c.l.b16 %v801
        %v893 = vunpack.c.h.b16 %v801
        %v894 = vunpack.c.l.b16 %v802
        %v895 = vunpack.c.h.b16 %v802
        %v896 = vunpack.c.l.b16 %v803
        %v897 = vunpack.c.h.b16 %v803
        %v898 = vunpack.c.l.b16 %v804
        %v899 = vunpack.c.h.b16 %v804
        %v900 = vunpack.c.l.b16 %v805
        %v901 = vunpack.c.h.b16 %v805
        %v902 = vpack.c.b16 %v842, %v838
        %v903 = vpack.c.b16 %v843, %v839
        %v904 = vpack.c.b16 %v844, %v840
        %v905 = vpack.c.b16 %v845, %v841
        %v906 = vpack.c.b16 %v850, %v846
        %v907 = vpack.c.b16 %v851, %v847
        %v908 = vpack.c.b16 %v852, %v848
        %v909 = vpack.c.b16 %v853, %v849
        %v910 = vpack.c.b16 %v858, %v854
        %v911 = vpack.c.b16 %v859, %v855
        %v912 = vpack.c.b16 %v860, %v856
        %v913 = vpack.c.b16 %v861, %v857
        %v914 = vpack.c.b16 %v866, %v862
        %v915 = vpack.c.b16 %v867, %v863
        %v916 = vpack.c.b16 %v868, %v864
        %v917 = vpack.c.b16 %v869, %v865
        %v918 = vpack.c.b16 %v874, %v870
        %v919 = vpack.c.b16 %v875, %v871
        %v920 = vpack.c.b16 %v876, %v872
        %v921 = vpack.c.b16 %v877, %v873
        %v922 = vpack.c.b16 %v882, %v878
        %v923 = vpack.c.b16 %v883, %v879
        %v924 = vpack.c.b16 %v884, %v880
        %v925 = vpack.c.b16 %v885, %v881
        %v926 = vpack.c.b16 %v890, %v886
        %v927 = vpack.c.b16 %v891, %v887
        %v928 = vpack.c.b16 %v892, %v888
        %v929 = vpack.c.b16 %v893, %v889
        %v930 = vpack.c.b16 %v898, %v894
        %v931 = vpack.c.b16 %v899, %v895
        %v932 = vpack.c.b16 %v900, %v896
        %v933 = vpack.c.b16 %v901, %v897
        %966 = vmatprep.subr.bf16.mxu0 %v903
        %967 = vmatpush1.bf16.msra.mxu0 %v902
        %968 = vmatprep.subr.bf16.mxu0 %v907
        %969 = vmatpush1.bf16.msra.mxu0 %v906
        %970 = vmatprep.subr.bf16.mxu0 %v911
        %971 = vmatpush1.bf16.msra.mxu0 %v910
        %972 = vmatprep.subr.bf16.mxu0 %v915
        %973 = vmatpush1.bf16.msra.mxu0 %v914
        %974 = vmatprep.subr.bf16.mxu0 %v919
        %975 = vmatpush1.bf16.msra.mxu0 %v918
        %976 = vmatprep.subr.bf16.mxu0 %v923
        %977 = vmatpush1.bf16.msra.mxu0 %v922
        %978 = vmatprep.subr.bf16.mxu0 %v927
        %979 = vmatpush1.bf16.msra.mxu0 %v926
        %980 = vmatprep.subr.bf16.mxu0 %v931
        %981 = vmatpush1.bf16.msra.mxu0 %v930
        %982 = vmatprep.subr.bf16.mxu0 0
        %983 = vmatpush1.bf16.msra.mxu0 0
        %984 = vmatprep.subr.bf16.mxu0 0
        %985 = vmatpush1.bf16.msra.mxu0 0
        %986 = vmatprep.subr.bf16.mxu0 0
        %987 = vmatpush1.bf16.msra.mxu0 0
        %988 = vmatprep.subr.bf16.mxu0 0
        %989 = vmatpush1.bf16.msra.mxu0 0
        %990 = vmatprep.subr.bf16.mxu0 0
        %991 = vmatpush1.bf16.msra.mxu0 0
        %992 = vmatprep.subr.bf16.mxu0 0
        %993 = vmatpush1.bf16.msra.mxu0 0
        %994 = vmatprep.subr.bf16.mxu0 0
        %995 = vmatpush1.bf16.msra.mxu0 0
        %996 = vmatprep.subr.bf16.mxu0 0
        %997 = vmatpush1.bf16.msra.mxu0 0
        %998 = vmatprep.mubr.bf16.mxu0 0
        %999 = vmatmul.mubr.bf16.gmra.mrb[0].mxu0 %v773
        %v1000 = vpop.f32.mrb[0].mxu0
        %v1001 = vadd.f32 0.0, %v1000
        %v1002 = vpop.f32.mrb[0].mxu0
        %v1003 = vadd.f32 0.0, %v1002
        %v1004 = vpop.f32.mrb[0].mxu0
        %v1005 = vpop.f32.mrb[0].mxu0
        %1006 = vdwg.mxu0
        %1007 = vmatprep.subr.bf16.mxu0 %v905
        %1008 = vmatpush1.bf16.msra.mxu0 %v904
        %1009 = vmatprep.subr.bf16.mxu0 %v909
        %1010 = vmatpush1.bf16.msra.mxu0 %v908
        %1011 = vmatprep.subr.bf16.mxu0 %v913
        %1012 = vmatpush1.bf16.msra.mxu0 %v912
        %1013 = vmatprep.subr.bf16.mxu0 %v917
        %1014 = vmatpush1.bf16.msra.mxu0 %v916
        %1015 = vmatprep.subr.bf16.mxu0 %v921
        %1016 = vmatpush1.bf16.msra.mxu0 %v920
        %1017 = vmatprep.subr.bf16.mxu0 %v925
        %1018 = vmatpush1.bf16.msra.mxu0 %v924
        %1019 = vmatprep.subr.bf16.mxu0 %v929
        %1020 = vmatpush1.bf16.msra.mxu0 %v928
        %1021 = vmatprep.subr.bf16.mxu0 %v933
        %1022 = vmatpush1.bf16.msra.mxu0 %v932
        %1023 = vmatprep.subr.bf16.mxu0 0
        %1024 = vmatpush1.bf16.msra.mxu0 0
        %1025 = vmatprep.subr.bf16.mxu0 0
        %1026 = vmatpush1.bf16.msra.mxu0 0
        %1027 = vmatprep.subr.bf16.mxu0 0
        %1028 = vmatpush1.bf16.msra.mxu0 0
        %1029 = vmatprep.subr.bf16.mxu0 0
        %1030 = vmatpush1.bf16.msra.mxu0 0
        %1031 = vmatprep.subr.bf16.mxu0 0
        %1032 = vmatpush1.bf16.msra.mxu0 0
        %1033 = vmatprep.subr.bf16.mxu0 0
        %1034 = vmatpush1.bf16.msra.mxu0 0
        %1035 = vmatprep.subr.bf16.mxu0 0
        %1036 = vmatpush1.bf16.msra.mxu0 0
        %1037 = vmatprep.subr.bf16.mxu0 0
        %1038 = vmatpush1.bf16.msra.mxu0 0
        %1039 = vmatprep.mubr.bf16.mxu0 0
        %1040 = vmatmul.mubr.bf16.gmra.mrb[0].mxu0 %v773
        %v1041 = vpop.f32.mrb[0].mxu0
        %v1042 = vadd.f32 0.0, %v1041
        %v1043 = vpop.f32.mrb[0].mxu0
        %v1044 = vadd.f32 0.0, %v1043
        %v1045 = vpop.f32.mrb[0].mxu0
        %v1046 = vpop.f32.mrb[0].mxu0
        %1047 = vdwg.mxu0
        %v1048 = vadd.f32 %v767, %v1001
        %v1049 = vadd.f32 %v768, %v1003
        %v1050 = vadd.f32 %v769, %v1042
        %v1051 = vadd.f32 %v770, %v1044
        %v1052 = vmul.f32 %v1048, 0.5
        %v1053 = vtanh.pop %v1052
        %v1054 = vmul.f32 %v1053, 0.5
        %v1055 = vadd.f32 %v1054, 0.5
        %v1056 = vmul.f32 %v1049, 0.5
        %v1057 = vtanh.pop %v1056
        %v1058 = vmul.f32 %v1057, 0.5
        %v1059 = vadd.f32 %v1058, 0.5
        %v1060 = vtanh.pop %v1050
        %v1061 = vmul.f32 %v1051, 0.5
        %v1062 = vtanh.pop %v1061
        %v1063 = vmul.f32 %v1062, 0.5
        %v1064 = vadd.f32 %v1063, 0.5
        %v1065 = vmul.f32 %v1059, %v772
        %v1066 = vmul.f32 %v1055, %v1060
        %v1067 = vadd.f32 %v1065, %v1066
        %v1068 = vtanh.pop %v1067
        %v1069 = vmul.f32 %v1064, %v1068
        %s1070 = sadd.s32 %s761, %s763
        %v1071 = vstv %s1070
        %vm1072 = vcmp.lt.s32.totalorder %v1071, %v762
        %v1073 = vsel %vm1072, 1, 0
        %1074 = vset.pattern.permute.xlu0 0
        %1075 = vperm.xlu0 %1074, %v1073
        %v1076 = vpop.permute.xlu0 %1075
        %vm1077 = vcmp.eq.s32.totalorder %v1076, 1
        %v1078 = vsel %vm1077, %v1069, %v771
        %1079 = vst [vmem:[#allocation3] sm:$0xff] %v1078
        %v1080 = vsel %vm1077, %v1067, %v772
        %1081 = vst [vmem:[#allocation4] sm:$0xff] %v1080
        %v1082 = vsel %vm1077, %v1069, 0.0
        %v1083 = vpack.c.bf16 %v1082, %v1082
        %s1084 = smul.addr %s763, 4
        %s1085 = scalar_lea.vmem %s424, %s1084 [#allocation11]
        %1086 = vst [vmem:[%s1085] sm:$0xf] %v1083
        %s1087 = smul.u32 %s35, 5
        %s1088 = sadd.s32 %s1087, 1
        %s1089 = smul.u32 %s1088, 4
        %s1090 = smul.addr %s1089, 8
        %s1091 = scalar_lea.vmem [#allocation2], %s1090
        %v1092 = vld [vmem:[%s1091] sm:$0xff]
        %v1093 = vld [vmem:[%s1091 + $0x8] sm:$0xff]
        %v1094 = vld [vmem:[%s1091 + $0x10] sm:$0xff]
        %v1095 = vld [vmem:[%s1091 + $0x18] sm:$0xff]
        %v1096 = vld [vmem:[#allocation3] sm:$0xff]
        %v1097 = vld [vmem:[#allocation4] sm:$0xff]
        %v1098 = vpack.c.bf16 %v1096, %v1096
        %v1099 = vld [vmem:[%s384] sm:$0xff]
        %v1100 = vld [vmem:[%s384 + $0x8] sm:$0xff]
        %v1101 = vld [vmem:[%s384 + $0x10] sm:$0xff]
        %v1102 = vld [vmem:[%s384 + $0x18] sm:$0xff]
        %v1103 = vld [vmem:[%s384 + $0x20] sm:$0xff]
        %v1104 = vld [vmem:[%s384 + $0x28] sm:$0xff]
        %v1105 = vld [vmem:[%s384 + $0x30] sm:$0xff]
        %v1106 = vld [vmem:[%s384 + $0x38] sm:$0xff]
        %v1107 = vld [vmem:[%s384 + $0x40] sm:$0xff]
        %v1108 = vld [vmem:[%s384 + $0x48] sm:$0xff]
        %v1109 = vld [vmem:[%s384 + $0x50] sm:$0xff]
        %v1110 = vld [vmem:[%s384 + $0x58] sm:$0xff]
        %v1111 = vld [vmem:[%s384 + $0x60] sm:$0xff]
        %v1112 = vld [vmem:[%s384 + $0x68] sm:$0xff]
        %v1113 = vld [vmem:[%s384 + $0x70] sm:$0xff]
        %v1114 = vld [vmem:[%s384 + $0x78] sm:$0xff]
        %v1115 = vld [vmem:[%s384 + $0x80] sm:$0xff]
        %v1116 = vld [vmem:[%s384 + $0x88] sm:$0xff]
        %v1117 = vld [vmem:[%s384 + $0x90] sm:$0xff]
        %v1118 = vld [vmem:[%s384 + $0x98] sm:$0xff]
        %v1119 = vld [vmem:[%s384 + $0xa0] sm:$0xff]
        %v1120 = vld [vmem:[%s384 + $0xa8] sm:$0xff]
        %v1121 = vld [vmem:[%s384 + $0xb0] sm:$0xff]
        %v1122 = vld [vmem:[%s384 + $0xb8] sm:$0xff]
        %v1123 = vld [vmem:[%s384 + $0xc0] sm:$0xff]
        %v1124 = vld [vmem:[%s384 + $0xc8] sm:$0xff]
        %v1125 = vld [vmem:[%s384 + $0xd0] sm:$0xff]
        %v1126 = vld [vmem:[%s384 + $0xd8] sm:$0xff]
        %v1127 = vld [vmem:[%s384 + $0xe0] sm:$0xff]
        %v1128 = vld [vmem:[%s384 + $0xe8] sm:$0xff]
        %v1129 = vld [vmem:[%s384 + $0xf0] sm:$0xff]
        %v1130 = vld [vmem:[%s384 + $0xf8] sm:$0xff]
        %v1163 = vunpack.c.l.b16 %v1099
        %v1164 = vunpack.c.h.b16 %v1099
        %v1165 = vunpack.c.l.b16 %v1100
        %v1166 = vunpack.c.h.b16 %v1100
        %v1167 = vunpack.c.l.b16 %v1101
        %v1168 = vunpack.c.h.b16 %v1101
        %v1169 = vunpack.c.l.b16 %v1102
        %v1170 = vunpack.c.h.b16 %v1102
        %v1171 = vunpack.c.l.b16 %v1103
        %v1172 = vunpack.c.h.b16 %v1103
        %v1173 = vunpack.c.l.b16 %v1104
        %v1174 = vunpack.c.h.b16 %v1104
        %v1175 = vunpack.c.l.b16 %v1105
        %v1176 = vunpack.c.h.b16 %v1105
        %v1177 = vunpack.c.l.b16 %v1106
        %v1178 = vunpack.c.h.b16 %v1106
        %v1179 = vunpack.c.l.b16 %v1107
        %v1180 = vunpack.c.h.b16 %v1107
        %v1181 = vunpack.c.l.b16 %v1108
        %v1182 = vunpack.c.h.b16 %v1108
        %v1183 = vunpack.c.l.b16 %v1109
        %v1184 = vunpack.c.h.b16 %v1109
        %v1185 = vunpack.c.l.b16 %v1110
        %v1186 = vunpack.c.h.b16 %v1110
        %v1187 = vunpack.c.l.b16 %v1111
        %v1188 = vunpack.c.h.b16 %v1111
        %v1189 = vunpack.c.l.b16 %v1112
        %v1190 = vunpack.c.h.b16 %v1112
        %v1191 = vunpack.c.l.b16 %v1113
        %v1192 = vunpack.c.h.b16 %v1113
        %v1193 = vunpack.c.l.b16 %v1114
        %v1194 = vunpack.c.h.b16 %v1114
        %v1195 = vunpack.c.l.b16 %v1115
        %v1196 = vunpack.c.h.b16 %v1115
        %v1197 = vunpack.c.l.b16 %v1116
        %v1198 = vunpack.c.h.b16 %v1116
        %v1199 = vunpack.c.l.b16 %v1117
        %v1200 = vunpack.c.h.b16 %v1117
        %v1201 = vunpack.c.l.b16 %v1118
        %v1202 = vunpack.c.h.b16 %v1118
        %v1203 = vunpack.c.l.b16 %v1119
        %v1204 = vunpack.c.h.b16 %v1119
        %v1205 = vunpack.c.l.b16 %v1120
        %v1206 = vunpack.c.h.b16 %v1120
        %v1207 = vunpack.c.l.b16 %v1121
        %v1208 = vunpack.c.h.b16 %v1121
        %v1209 = vunpack.c.l.b16 %v1122
        %v1210 = vunpack.c.h.b16 %v1122
        %v1211 = vunpack.c.l.b16 %v1123
        %v1212 = vunpack.c.h.b16 %v1123
        %v1213 = vunpack.c.l.b16 %v1124
        %v1214 = vunpack.c.h.b16 %v1124
        %v1215 = vunpack.c.l.b16 %v1125
        %v1216 = vunpack.c.h.b16 %v1125
        %v1217 = vunpack.c.l.b16 %v1126
        %v1218 = vunpack.c.h.b16 %v1126
        %v1219 = vunpack.c.l.b16 %v1127
        %v1220 = vunpack.c.h.b16 %v1127
        %v1221 = vunpack.c.l.b16 %v1128
        %v1222 = vunpack.c.h.b16 %v1128
        %v1223 = vunpack.c.l.b16 %v1129
        %v1224 = vunpack.c.h.b16 %v1129
        %v1225 = vunpack.c.l.b16 %v1130
        %v1226 = vunpack.c.h.b16 %v1130
        %v1227 = vpack.c.b16 %v1167, %v1163
        %v1228 = vpack.c.b16 %v1168, %v1164
        %v1229 = vpack.c.b16 %v1169, %v1165
        %v1230 = vpack.c.b16 %v1170, %v1166
        %v1231 = vpack.c.b16 %v1175, %v1171
        %v1232 = vpack.c.b16 %v1176, %v1172
        %v1233 = vpack.c.b16 %v1177, %v1173
        %v1234 = vpack.c.b16 %v1178, %v1174
        %v1235 = vpack.c.b16 %v1183, %v1179
        %v1236 = vpack.c.b16 %v1184, %v1180
        %v1237 = vpack.c.b16 %v1185, %v1181
        %v1238 = vpack.c.b16 %v1186, %v1182
        %v1239 = vpack.c.b16 %v1191, %v1187
        %v1240 = vpack.c.b16 %v1192, %v1188
        %v1241 = vpack.c.b16 %v1193, %v1189
        %v1242 = vpack.c.b16 %v1194, %v1190
        %v1243 = vpack.c.b16 %v1199, %v1195
        %v1244 = vpack.c.b16 %v1200, %v1196
        %v1245 = vpack.c.b16 %v1201, %v1197
        %v1246 = vpack.c.b16 %v1202, %v1198
        %v1247 = vpack.c.b16 %v1207, %v1203
        %v1248 = vpack.c.b16 %v1208, %v1204
        %v1249 = vpack.c.b16 %v1209, %v1205
        %v1250 = vpack.c.b16 %v1210, %v1206
        %v1251 = vpack.c.b16 %v1215, %v1211
        %v1252 = vpack.c.b16 %v1216, %v1212
        %v1253 = vpack.c.b16 %v1217, %v1213
        %v1254 = vpack.c.b16 %v1218, %v1214
        %v1255 = vpack.c.b16 %v1223, %v1219
        %v1256 = vpack.c.b16 %v1224, %v1220
        %v1257 = vpack.c.b16 %v1225, %v1221
        %v1258 = vpack.c.b16 %v1226, %v1222
        %1291 = vmatprep.subr.bf16.mxu0 %v1228
        %1292 = vmatpush1.bf16.msra.mxu0 %v1227
        %1293 = vmatprep.subr.bf16.mxu0 %v1232
        %1294 = vmatpush1.bf16.msra.mxu0 %v1231
        %1295 = vmatprep.subr.bf16.mxu0 %v1236
        %1296 = vmatpush1.bf16.msra.mxu0 %v1235
        %1297 = vmatprep.subr.bf16.mxu0 %v1240
        %1298 = vmatpush1.bf16.msra.mxu0 %v1239
        %1299 = vmatprep.subr.bf16.mxu0 %v1244
        %1300 = vmatpush1.bf16.msra.mxu0 %v1243
        %1301 = vmatprep.subr.bf16.mxu0 %v1248
        %1302 = vmatpush1.bf16.msra.mxu0 %v1247
        %1303 = vmatprep.subr.bf16.mxu0 %v1252
        %1304 = vmatpush1.bf16.msra.mxu0 %v1251
        %1305 = vmatprep.subr.bf16.mxu0 %v1256
        %1306 = vmatpush1.bf16.msra.mxu0 %v1255
        %1307 = vmatprep.subr.bf16.mxu0 0
        %1308 = vmatpush1.bf16.msra.mxu0 0
        %1309 = vmatprep.subr.bf16.mxu0 0
        %1310 = vmatpush1.bf16.msra.mxu0 0
        %1311 = vmatprep.subr.bf16.mxu0 0
        %1312 = vmatpush1.bf16.msra.mxu0 0
        %1313 = vmatprep.subr.bf16.mxu0 0
        %1314 = vmatpush1.bf16.msra.mxu0 0
        %1315 = vmatprep.subr.bf16.mxu0 0
        %1316 = vmatpush1.bf16.msra.mxu0 0
        %1317 = vmatprep.subr.bf16.mxu0 0
        %1318 = vmatpush1.bf16.msra.mxu0 0
        %1319 = vmatprep.subr.bf16.mxu0 0
        %1320 = vmatpush1.bf16.msra.mxu0 0
        %1321 = vmatprep.subr.bf16.mxu0 0
        %1322 = vmatpush1.bf16.msra.mxu0 0
        %1323 = vmatprep.mubr.bf16.mxu0 0
        %1324 = vmatmul.mubr.bf16.gmra.mrb[0].mxu0 %v1098
        %v1325 = vpop.f32.mrb[0].mxu0
        %v1326 = vadd.f32 0.0, %v1325
        %v1327 = vpop.f32.mrb[0].mxu0
        %v1328 = vadd.f32 0.0, %v1327
        %v1329 = vpop.f32.mrb[0].mxu0
        %v1330 = vpop.f32.mrb[0].mxu0
        %1331 = vdwg.mxu0
        %1332 = vmatprep.subr.bf16.mxu0 %v1230
        %1333 = vmatpush1.bf16.msra.mxu0 %v1229
        %1334 = vmatprep.subr.bf16.mxu0 %v1234
        %1335 = vmatpush1.bf16.msra.mxu0 %v1233
        %1336 = vmatprep.subr.bf16.mxu0 %v1238
        %1337 = vmatpush1.bf16.msra.mxu0 %v1237
        %1338 = vmatprep.subr.bf16.mxu0 %v1242
        %1339 = vmatpush1.bf16.msra.mxu0 %v1241
        %1340 = vmatprep.subr.bf16.mxu0 %v1246
        %1341 = vmatpush1.bf16.msra.mxu0 %v1245
        %1342 = vmatprep.subr.bf16.mxu0 %v1250
        %1343 = vmatpush1.bf16.msra.mxu0 %v1249
        %1344 = vmatprep.subr.bf16.mxu0 %v1254
        %1345 = vmatpush1.bf16.msra.mxu0 %v1253
        %1346 = vmatprep.subr.bf16.mxu0 %v1258
        %1347 = vmatpush1.bf16.msra.mxu0 %v1257
        %1348 = vmatprep.subr.bf16.mxu0 0
        %1349 = vmatpush1.bf16.msra.mxu0 0
        %1350 = vmatprep.subr.bf16.mxu0 0
        %1351 = vmatpush1.bf16.msra.mxu0 0
        %1352 = vmatprep.subr.bf16.mxu0 0
        %1353 = vmatpush1.bf16.msra.mxu0 0
        %1354 = vmatprep.subr.bf16.mxu0 0
        %1355 = vmatpush1.bf16.msra.mxu0 0
        %1356 = vmatprep.subr.bf16.mxu0 0
        %1357 = vmatpush1.bf16.msra.mxu0 0
        %1358 = vmatprep.subr.bf16.mxu0 0
        %1359 = vmatpush1.bf16.msra.mxu0 0
        %1360 = vmatprep.subr.bf16.mxu0 0
        %1361 = vmatpush1.bf16.msra.mxu0 0
        %1362 = vmatprep.subr.bf16.mxu0 0
        %1363 = vmatpush1.bf16.msra.mxu0 0
        %1364 = vmatprep.mubr.bf16.mxu0 0
        %1365 = vmatmul.mubr.bf16.gmra.mrb[0].mxu0 %v1098
        %v1366 = vpop.f32.mrb[0].mxu0
        %v1367 = vadd.f32 0.0, %v1366
        %v1368 = vpop.f32.mrb[0].mxu0
        %v1369 = vadd.f32 0.0, %v1368
        %v1370 = vpop.f32.mrb[0].mxu0
        %v1371 = vpop.f32.mrb[0].mxu0
        %1372 = vdwg.mxu0
        %v1373 = vadd.f32 %v1092, %v1326
        %v1374 = vadd.f32 %v1093, %v1328
        %v1375 = vadd.f32 %v1094, %v1367
        %v1376 = vadd.f32 %v1095, %v1369
        %v1377 = vmul.f32 %v1373, 0.5
        %v1378 = vtanh.pop %v1377
        %v1379 = vmul.f32 %v1378, 0.5
        %v1380 = vadd.f32 %v1379, 0.5
        %v1381 = vmul.f32 %v1374, 0.5
        %v1382 = vtanh.pop %v1381
        %v1383 = vmul.f32 %v1382, 0.5
        %v1384 = vadd.f32 %v1383, 0.5
        %v1385 = vtanh.pop %v1375
        %v1386 = vmul.f32 %v1376, 0.5
        %v1387 = vtanh.pop %v1386
        %v1388 = vmul.f32 %v1387, 0.5
        %v1389 = vadd.f32 %v1388, 0.5
        %v1390 = vmul.f32 %v1384, %v1097
        %v1391 = vmul.f32 %v1380, %v1385
        %v1392 = vadd.f32 %v1390, %v1391
        %v1393 = vtanh.pop %v1392
        %v1394 = vmul.f32 %v1389, %v1393
        %s1395 = sadd.s32 %s761, %s1088
        %v1396 = vstv %s1395
        %vm1397 = vcmp.lt.s32.totalorder %v1396, %v762
        %v1398 = vsel %vm1397, 1, 0
        %1399 = vset.pattern.permute.xlu0 0
        %1400 = vperm.xlu0 %1399, %v1398
        %v1401 = vpop.permute.xlu0 %1400
        %vm1402 = vcmp.eq.s32.totalorder %v1401, 1
        %v1403 = vsel %vm1402, %v1394, %v1096
        %1404 = vst [vmem:[#allocation3] sm:$0xff] %v1403
        %v1405 = vsel %vm1402, %v1392, %v1097
        %1406 = vst [vmem:[#allocation4] sm:$0xff] %v1405
        %v1407 = vsel %vm1402, %v1394, 0.0
        %v1408 = vpack.c.bf16 %v1407, %v1407
        %s1409 = smul.addr %s1088, 4
        %s1410 = scalar_lea.vmem %s424, %s1409 [#allocation11]
        %1411 = vst [vmem:[%s1410] sm:$0xf] %v1408
        %s1412 = smul.u32 %s35, 3
        %s1413 = sadd.s32 %s1412, 2
        %s1414 = smul.u32 %s1413, 4
        %s1415 = smul.addr %s1414, 8
        %s1416 = scalar_lea.vmem [#allocation2], %s1415
        %v1417 = vld [vmem:[%s1416] sm:$0xff]
        %v1418 = vld [vmem:[%s1416 + $0x8] sm:$0xff]
        %v1419 = vld [vmem:[%s1416 + $0x10] sm:$0xff]
        %v1420 = vld [vmem:[%s1416 + $0x18] sm:$0xff]
        %v1421 = vld [vmem:[#allocation3] sm:$0xff]
        %v1422 = vld [vmem:[#allocation4] sm:$0xff]
        %v1423 = vpack.c.bf16 %v1421, %v1421
        %v1424 = vld [vmem:[%s384] sm:$0xff]
        %v1425 = vld [vmem:[%s384 + $0x8] sm:$0xff]
        %v1426 = vld [vmem:[%s384 + $0x10] sm:$0xff]
        %v1427 = vld [vmem:[%s384 + $0x18] sm:$0xff]
        %v1428 = vld [vmem:[%s384 + $0x20] sm:$0xff]
        %v1429 = vld [vmem:[%s384 + $0x28] sm:$0xff]
        %v1430 = vld [vmem:[%s384 + $0x30] sm:$0xff]
        %v1431 = vld [vmem:[%s384 + $0x38] sm:$0xff]
        %v1432 = vld [vmem:[%s384 + $0x40] sm:$0xff]
        %v1433 = vld [vmem:[%s384 + $0x48] sm:$0xff]
        %v1434 = vld [vmem:[%s384 + $0x50] sm:$0xff]
        %v1435 = vld [vmem:[%s384 + $0x58] sm:$0xff]
        %v1436 = vld [vmem:[%s384 + $0x60] sm:$0xff]
        %v1437 = vld [vmem:[%s384 + $0x68] sm:$0xff]
        %v1438 = vld [vmem:[%s384 + $0x70] sm:$0xff]
        %v1439 = vld [vmem:[%s384 + $0x78] sm:$0xff]
        %v1440 = vld [vmem:[%s384 + $0x80] sm:$0xff]
        %v1441 = vld [vmem:[%s384 + $0x88] sm:$0xff]
        %v1442 = vld [vmem:[%s384 + $0x90] sm:$0xff]
        %v1443 = vld [vmem:[%s384 + $0x98] sm:$0xff]
        %v1444 = vld [vmem:[%s384 + $0xa0] sm:$0xff]
        %v1445 = vld [vmem:[%s384 + $0xa8] sm:$0xff]
        %v1446 = vld [vmem:[%s384 + $0xb0] sm:$0xff]
        %v1447 = vld [vmem:[%s384 + $0xb8] sm:$0xff]
        %v1448 = vld [vmem:[%s384 + $0xc0] sm:$0xff]
        %v1449 = vld [vmem:[%s384 + $0xc8] sm:$0xff]
        %v1450 = vld [vmem:[%s384 + $0xd0] sm:$0xff]
        %v1451 = vld [vmem:[%s384 + $0xd8] sm:$0xff]
        %v1452 = vld [vmem:[%s384 + $0xe0] sm:$0xff]
        %v1453 = vld [vmem:[%s384 + $0xe8] sm:$0xff]
        %v1454 = vld [vmem:[%s384 + $0xf0] sm:$0xff]
        %v1455 = vld [vmem:[%s384 + $0xf8] sm:$0xff]
        %v1488 = vunpack.c.l.b16 %v1424
        %v1489 = vunpack.c.h.b16 %v1424
        %v1490 = vunpack.c.l.b16 %v1425
        %v1491 = vunpack.c.h.b16 %v1425
        %v1492 = vunpack.c.l.b16 %v1426
        %v1493 = vunpack.c.h.b16 %v1426
        %v1494 = vunpack.c.l.b16 %v1427
        %v1495 = vunpack.c.h.b16 %v1427
        %v1496 = vunpack.c.l.b16 %v1428
        %v1497 = vunpack.c.h.b16 %v1428
        %v1498 = vunpack.c.l.b16 %v1429
        %v1499 = vunpack.c.h.b16 %v1429
        %v1500 = vunpack.c.l.b16 %v1430
        %v1501 = vunpack.c.h.b16 %v1430
        %v1502 = vunpack.c.l.b16 %v1431
        %v1503 = vunpack.c.h.b16 %v1431
        %v1504 = vunpack.c.l.b16 %v1432
        %v1505 = vunpack.c.h.b16 %v1432
        %v1506 = vunpack.c.l.b16 %v1433
        %v1507 = vunpack.c.h.b16 %v1433
        %v1508 = vunpack.c.l.b16 %v1434
        %v1509 = vunpack.c.h.b16 %v1434
        %v1510 = vunpack.c.l.b16 %v1435
        %v1511 = vunpack.c.h.b16 %v1435
        %v1512 = vunpack.c.l.b16 %v1436
        %v1513 = vunpack.c.h.b16 %v1436
        %v1514 = vunpack.c.l.b16 %v1437
        %v1515 = vunpack.c.h.b16 %v1437
        %v1516 = vunpack.c.l.b16 %v1438
        %v1517 = vunpack.c.h.b16 %v1438
        %v1518 = vunpack.c.l.b16 %v1439
        %v1519 = vunpack.c.h.b16 %v1439
        %v1520 = vunpack.c.l.b16 %v1440
        %v1521 = vunpack.c.h.b16 %v1440
        %v1522 = vunpack.c.l.b16 %v1441
        %v1523 = vunpack.c.h.b16 %v1441
        %v1524 = vunpack.c.l.b16 %v1442
        %v1525 = vunpack.c.h.b16 %v1442
        %v1526 = vunpack.c.l.b16 %v1443
        %v1527 = vunpack.c.h.b16 %v1443
        %v1528 = vunpack.c.l.b16 %v1444
        %v1529 = vunpack.c.h.b16 %v1444
        %v1530 = vunpack.c.l.b16 %v1445
        %v1531 = vunpack.c.h.b16 %v1445
        %v1532 = vunpack.c.l.b16 %v1446
        %v1533 = vunpack.c.h.b16 %v1446
        %v1534 = vunpack.c.l.b16 %v1447
        %v1535 = vunpack.c.h.b16 %v1447
        %v1536 = vunpack.c.l.b16 %v1448
        %v1537 = vunpack.c.h.b16 %v1448
        %v1538 = vunpack.c.l.b16 %v1449
        %v1539 = vunpack.c.h.b16 %v1449
        %v1540 = vunpack.c.l.b16 %v1450
        %v1541 = vunpack.c.h.b16 %v1450
        %v1542 = vunpack.c.l.b16 %v1451
        %v1543 = vunpack.c.h.b16 %v1451
        %v1544 = vunpack.c.l.b16 %v1452
        %v1545 = vunpack.c.h.b16 %v1452
        %v1546 = vunpack.c.l.b16 %v1453
        %v1547 = vunpack.c.h.b16 %v1453
        %v1548 = vunpack.c.l.b16 %v1454
        %v1549 = vunpack.c.h.b16 %v1454
        %v1550 = vunpack.c.l.b16 %v1455
        %v1551 = vunpack.c.h.b16 %v1455
        %v1552 = vpack.c.b16 %v1492, %v1488
        %v1553 = vpack.c.b16 %v1493, %v1489
        %v1554 = vpack.c.b16 %v1494, %v1490
        %v1555 = vpack.c.b16 %v1495, %v1491
        %v1556 = vpack.c.b16 %v1500, %v1496
        %v1557 = vpack.c.b16 %v1501, %v1497
        %v1558 = vpack.c.b16 %v1502, %v1498
        %v1559 = vpack.c.b16 %v1503, %v1499
        %v1560 = vpack.c.b16 %v1508, %v1504
        %v1561 = vpack.c.b16 %v1509, %v1505
        %v1562 = vpack.c.b16 %v1510, %v1506
        %v1563 = vpack.c.b16 %v1511, %v1507
        %v1564 = vpack.c.b16 %v1516, %v1512
        %v1565 = vpack.c.b16 %v1517, %v1513
        %v1566 = vpack.c.b16 %v1518, %v1514
        %v1567 = vpack.c.b16 %v1519, %v1515
        %v1568 = vpack.c.b16 %v1524, %v1520
        %v1569 = vpack.c.b16 %v1525, %v1521
        %v1570 = vpack.c.b16 %v1526, %v1522
        %v1571 = vpack.c.b16 %v1527, %v1523
        %v1572 = vpack.c.b16 %v1532, %v1528
        %v1573 = vpack.c.b16 %v1533, %v1529
        %v1574 = vpack.c.b16 %v1534, %v1530
        %v1575 = vpack.c.b16 %v1535, %v1531
        %v1576 = vpack.c.b16 %v1540, %v1536
        %v1577 = vpack.c.b16 %v1541, %v1537
        %v1578 = vpack.c.b16 %v1542, %v1538
        %v1579 = vpack.c.b16 %v1543, %v1539
        %v1580 = vpack.c.b16 %v1548, %v1544
        %v1581 = vpack.c.b16 %v1549, %v1545
        %v1582 = vpack.c.b16 %v1550, %v1546
        %v1583 = vpack.c.b16 %v1551, %v1547
        %1616 = vmatprep.subr.bf16.mxu0 %v1553
        %1617 = vmatpush1.bf16.msra.mxu0 %v1552
        %1618 = vmatprep.subr.bf16.mxu0 %v1557
        %1619 = vmatpush1.bf16.msra.mxu0 %v1556
        %1620 = vmatprep.subr.bf16.mxu0 %v1561
        %1621 = vmatpush1.bf16.msra.mxu0 %v1560
        %1622 = vmatprep.subr.bf16.mxu0 %v1565
        %1623 = vmatpush1.bf16.msra.mxu0 %v1564
        %1624 = vmatprep.subr.bf16.mxu0 %v1569
        %1625 = vmatpush1.bf16.msra.mxu0 %v1568
        %1626 = vmatprep.subr.bf16.mxu0 %v1573
        %1627 = vmatpush1.bf16.msra.mxu0 %v1572
        %1628 = vmatprep.subr.bf16.mxu0 %v1577
        %1629 = vmatpush1.bf16.msra.mxu0 %v1576
        %1630 = vmatprep.subr.bf16.mxu0 %v1581
        %1631 = vmatpush1.bf16.msra.mxu0 %v1580
        %1632 = vmatprep.subr.bf16.mxu0 0
        %1633 = vmatpush1.bf16.msra.mxu0 0
        %1634 = vmatprep.subr.bf16.mxu0 0
        %1635 = vmatpush1.bf16.msra.mxu0 0
        %1636 = vmatprep.subr.bf16.mxu0 0
        %1637 = vmatpush1.bf16.msra.mxu0 0
        %1638 = vmatprep.subr.bf16.mxu0 0
        %1639 = vmatpush1.bf16.msra.mxu0 0
        %1640 = vmatprep.subr.bf16.mxu0 0
        %1641 = vmatpush1.bf16.msra.mxu0 0
        %1642 = vmatprep.subr.bf16.mxu0 0
        %1643 = vmatpush1.bf16.msra.mxu0 0
        %1644 = vmatprep.subr.bf16.mxu0 0
        %1645 = vmatpush1.bf16.msra.mxu0 0
        %1646 = vmatprep.subr.bf16.mxu0 0
        %1647 = vmatpush1.bf16.msra.mxu0 0
        %1648 = vmatprep.mubr.bf16.mxu0 0
        %1649 = vmatmul.mubr.bf16.gmra.mrb[0].mxu0 %v1423
        %v1650 = vpop.f32.mrb[0].mxu0
        %v1651 = vadd.f32 0.0, %v1650
        %v1652 = vpop.f32.mrb[0].mxu0
        %v1653 = vadd.f32 0.0, %v1652
        %v1654 = vpop.f32.mrb[0].mxu0
        %v1655 = vpop.f32.mrb[0].mxu0
        %1656 = vdwg.mxu0
        %1657 = vmatprep.subr.bf16.mxu0 %v1555
        %1658 = vmatpush1.bf16.msra.mxu0 %v1554
        %1659 = vmatprep.subr.bf16.mxu0 %v1559
        %1660 = vmatpush1.bf16.msra.mxu0 %v1558
        %1661 = vmatprep.subr.bf16.mxu0 %v1563
        %1662 = vmatpush1.bf16.msra.mxu0 %v1562
        %1663 = vmatprep.subr.bf16.mxu0 %v1567
        %1664 = vmatpush1.bf16.msra.mxu0 %v1566
        %1665 = vmatprep.subr.bf16.mxu0 %v1571
        %1666 = vmatpush1.bf16.msra.mxu0 %v1570
        %1667 = vmatprep.subr.bf16.mxu0 %v1575
        %1668 = vmatpush1.bf16.msra.mxu0 %v1574
        %1669 = vmatprep.subr.bf16.mxu0 %v1579
        %1670 = vmatpush1.bf16.msra.mxu0 %v1578
        %1671 = vmatprep.subr.bf16.mxu0 %v1583
        %1672 = vmatpush1.bf16.msra.mxu0 %v1582
        %1673 = vmatprep.subr.bf16.mxu0 0
        %1674 = vmatpush1.bf16.msra.mxu0 0
        %1675 = vmatprep.subr.bf16.mxu0 0
        %1676 = vmatpush1.bf16.msra.mxu0 0
        %1677 = vmatprep.subr.bf16.mxu0 0
        %1678 = vmatpush1.bf16.msra.mxu0 0
        %1679 = vmatprep.subr.bf16.mxu0 0
        %1680 = vmatpush1.bf16.msra.mxu0 0
        %1681 = vmatprep.subr.bf16.mxu0 0
        %1682 = vmatpush1.bf16.msra.mxu0 0
        %1683 = vmatprep.subr.bf16.mxu0 0
        %1684 = vmatpush1.bf16.msra.mxu0 0
        %1685 = vmatprep.subr.bf16.mxu0 0
        %1686 = vmatpush1.bf16.msra.mxu0 0
        %1687 = vmatprep.subr.bf16.mxu0 0
        %1688 = vmatpush1.bf16.msra.mxu0 0
        %1689 = vmatprep.mubr.bf16.mxu0 0
        %1690 = vmatmul.mubr.bf16.gmra.mrb[0].mxu0 %v1423
        %v1691 = vpop.f32.mrb[0].mxu0
        %v1692 = vadd.f32 0.0, %v1691
        %v1693 = vpop.f32.mrb[0].mxu0
        %v1694 = vadd.f32 0.0, %v1693
        %v1695 = vpop.f32.mrb[0].mxu0
        %v1696 = vpop.f32.mrb[0].mxu0
        %1697 = vdwg.mxu0
        %v1698 = vadd.f32 %v1417, %v1651
        %v1699 = vadd.f32 %v1418, %v1653
        %v1700 = vadd.f32 %v1419, %v1692
        %v1701 = vadd.f32 %v1420, %v1694
        %v1702 = vmul.f32 %v1698, 0.5
        %v1703 = vtanh.pop %v1702
        %v1704 = vmul.f32 %v1703, 0.5
        %v1705 = vadd.f32 %v1704, 0.5
        %v1706 = vmul.f32 %v1699, 0.5
        %v1707 = vtanh.pop %v1706
        %v1708 = vmul.f32 %v1707, 0.5
        %v1709 = vadd.f32 %v1708, 0.5
        %v1710 = vtanh.pop %v1700
        %v1711 = vmul.f32 %v1701, 0.5
        %v1712 = vtanh.pop %v1711
        %v1713 = vmul.f32 %v1712, 0.5
        %v1714 = vadd.f32 %v1713, 0.5
        %v1715 = vmul.f32 %v1709, %v1422
        %v1716 = vmul.f32 %v1705, %v1710
        %v1717 = vadd.f32 %v1715, %v1716
        %v1718 = vtanh.pop %v1717
        %v1719 = vmul.f32 %v1714, %v1718
        %s1720 = sadd.s32 %s761, %s1413
        %v1721 = vstv %s1720
        %vm1722 = vcmp.lt.s32.totalorder %v1721, %v762
        %v1723 = vsel %vm1722, 1, 0
        %1724 = vset.pattern.permute.xlu0 0
        %1725 = vperm.xlu0 %1724, %v1723
        %v1726 = vpop.permute.xlu0 %1725
        %vm1727 = vcmp.eq.s32.totalorder %v1726, 1
        %v1728 = vsel %vm1727, %v1719, %v1421
        %1729 = vst [vmem:[#allocation3] sm:$0xff] %v1728
        %v1730 = vsel %vm1727, %v1717, %v1422
        %1731 = vst [vmem:[#allocation4] sm:$0xff] %v1730
        %v1732 = vsel %vm1727, %v1719, 0.0
        %v1733 = vpack.c.bf16 %v1732, %v1732
        %s1734 = smul.addr %s1413, 4
        %s1735 = scalar_lea.vmem %s424, %s1734 [#allocation11]
        %1736 = vst [vmem:[%s1735] sm:$0xf] %v1733
        %s1737 = sadd.s32 %s35, 3
        %s1738 = smul.u32 %s1737, 4
        %s1739 = smul.addr %s1738, 8
        %s1740 = scalar_lea.vmem [#allocation2], %s1739
        %v1741 = vld [vmem:[%s1740] sm:$0xff]
        %v1742 = vld [vmem:[%s1740 + $0x8] sm:$0xff]
        %v1743 = vld [vmem:[%s1740 + $0x10] sm:$0xff]
        %v1744 = vld [vmem:[%s1740 + $0x18] sm:$0xff]
        %v1745 = vld [vmem:[#allocation3] sm:$0xff]
        %v1746 = vld [vmem:[#allocation4] sm:$0xff]
        %v1747 = vpack.c.bf16 %v1745, %v1745
        %v1748 = vld [vmem:[%s384] sm:$0xff]
        %v1749 = vld [vmem:[%s384 + $0x8] sm:$0xff]
        %v1750 = vld [vmem:[%s384 + $0x10] sm:$0xff]
        %v1751 = vld [vmem:[%s384 + $0x18] sm:$0xff]
        %v1752 = vld [vmem:[%s384 + $0x20] sm:$0xff]
        %v1753 = vld [vmem:[%s384 + $0x28] sm:$0xff]
        %v1754 = vld [vmem:[%s384 + $0x30] sm:$0xff]
        %v1755 = vld [vmem:[%s384 + $0x38] sm:$0xff]
        %v1756 = vld [vmem:[%s384 + $0x40] sm:$0xff]
        %v1757 = vld [vmem:[%s384 + $0x48] sm:$0xff]
        %v1758 = vld [vmem:[%s384 + $0x50] sm:$0xff]
        %v1759 = vld [vmem:[%s384 + $0x58] sm:$0xff]
        %v1760 = vld [vmem:[%s384 + $0x60] sm:$0xff]
        %v1761 = vld [vmem:[%s384 + $0x68] sm:$0xff]
        %v1762 = vld [vmem:[%s384 + $0x70] sm:$0xff]
        %v1763 = vld [vmem:[%s384 + $0x78] sm:$0xff]
        %v1764 = vld [vmem:[%s384 + $0x80] sm:$0xff]
        %v1765 = vld [vmem:[%s384 + $0x88] sm:$0xff]
        %v1766 = vld [vmem:[%s384 + $0x90] sm:$0xff]
        %v1767 = vld [vmem:[%s384 + $0x98] sm:$0xff]
        %v1768 = vld [vmem:[%s384 + $0xa0] sm:$0xff]
        %v1769 = vld [vmem:[%s384 + $0xa8] sm:$0xff]
        %v1770 = vld [vmem:[%s384 + $0xb0] sm:$0xff]
        %v1771 = vld [vmem:[%s384 + $0xb8] sm:$0xff]
        %v1772 = vld [vmem:[%s384 + $0xc0] sm:$0xff]
        %v1773 = vld [vmem:[%s384 + $0xc8] sm:$0xff]
        %v1774 = vld [vmem:[%s384 + $0xd0] sm:$0xff]
        %v1775 = vld [vmem:[%s384 + $0xd8] sm:$0xff]
        %v1776 = vld [vmem:[%s384 + $0xe0] sm:$0xff]
        %v1777 = vld [vmem:[%s384 + $0xe8] sm:$0xff]
        %v1778 = vld [vmem:[%s384 + $0xf0] sm:$0xff]
        %v1779 = vld [vmem:[%s384 + $0xf8] sm:$0xff]
        %v1812 = vunpack.c.l.b16 %v1748
        %v1813 = vunpack.c.h.b16 %v1748
        %v1814 = vunpack.c.l.b16 %v1749
        %v1815 = vunpack.c.h.b16 %v1749
        %v1816 = vunpack.c.l.b16 %v1750
        %v1817 = vunpack.c.h.b16 %v1750
        %v1818 = vunpack.c.l.b16 %v1751
        %v1819 = vunpack.c.h.b16 %v1751
        %v1820 = vunpack.c.l.b16 %v1752
        %v1821 = vunpack.c.h.b16 %v1752
        %v1822 = vunpack.c.l.b16 %v1753
        %v1823 = vunpack.c.h.b16 %v1753
        %v1824 = vunpack.c.l.b16 %v1754
        %v1825 = vunpack.c.h.b16 %v1754
        %v1826 = vunpack.c.l.b16 %v1755
        %v1827 = vunpack.c.h.b16 %v1755
        %v1828 = vunpack.c.l.b16 %v1756
        %v1829 = vunpack.c.h.b16 %v1756
        %v1830 = vunpack.c.l.b16 %v1757
        %v1831 = vunpack.c.h.b16 %v1757
        %v1832 = vunpack.c.l.b16 %v1758
        %v1833 = vunpack.c.h.b16 %v1758
        %v1834 = vunpack.c.l.b16 %v1759
        %v1835 = vunpack.c.h.b16 %v1759
        %v1836 = vunpack.c.l.b16 %v1760
        %v1837 = vunpack.c.h.b16 %v1760
        %v1838 = vunpack.c.l.b16 %v1761
        %v1839 = vunpack.c.h.b16 %v1761
        %v1840 = vunpack.c.l.b16 %v1762
        %v1841 = vunpack.c.h.b16 %v1762
        %v1842 = vunpack.c.l.b16 %v1763
        %v1843 = vunpack.c.h.b16 %v1763
        %v1844 = vunpack.c.l.b16 %v1764
        %v1845 = vunpack.c.h.b16 %v1764
        %v1846 = vunpack.c.l.b16 %v1765
        %v1847 = vunpack.c.h.b16 %v1765
        %v1848 = vunpack.c.l.b16 %v1766
        %v1849 = vunpack.c.h.b16 %v1766
        %v1850 = vunpack.c.l.b16 %v1767
        %v1851 = vunpack.c.h.b16 %v1767
        %v1852 = vunpack.c.l.b16 %v1768
        %v1853 = vunpack.c.h.b16 %v1768
        %v1854 = vunpack.c.l.b16 %v1769
        %v1855 = vunpack.c.h.b16 %v1769
        %v1856 = vunpack.c.l.b16 %v1770
        %v1857 = vunpack.c.h.b16 %v1770
        %v1858 = vunpack.c.l.b16 %v1771
        %v1859 = vunpack.c.h.b16 %v1771
        %v1860 = vunpack.c.l.b16 %v1772
        %v1861 = vunpack.c.h.b16 %v1772
        %v1862 = vunpack.c.l.b16 %v1773
        %v1863 = vunpack.c.h.b16 %v1773
        %v1864 = vunpack.c.l.b16 %v1774
        %v1865 = vunpack.c.h.b16 %v1774
        %v1866 = vunpack.c.l.b16 %v1775
        %v1867 = vunpack.c.h.b16 %v1775
        %v1868 = vunpack.c.l.b16 %v1776
        %v1869 = vunpack.c.h.b16 %v1776
        %v1870 = vunpack.c.l.b16 %v1777
        %v1871 = vunpack.c.h.b16 %v1777
        %v1872 = vunpack.c.l.b16 %v1778
        %v1873 = vunpack.c.h.b16 %v1778
        %v1874 = vunpack.c.l.b16 %v1779
        %v1875 = vunpack.c.h.b16 %v1779
        %v1876 = vpack.c.b16 %v1816, %v1812
        %v1877 = vpack.c.b16 %v1817, %v1813
        %v1878 = vpack.c.b16 %v1818, %v1814
        %v1879 = vpack.c.b16 %v1819, %v1815
        %v1880 = vpack.c.b16 %v1824, %v1820
        %v1881 = vpack.c.b16 %v1825, %v1821
        %v1882 = vpack.c.b16 %v1826, %v1822
        %v1883 = vpack.c.b16 %v1827, %v1823
        %v1884 = vpack.c.b16 %v1832, %v1828
        %v1885 = vpack.c.b16 %v1833, %v1829
        %v1886 = vpack.c.b16 %v1834, %v1830
        %v1887 = vpack.c.b16 %v1835, %v1831
        %v1888 = vpack.c.b16 %v1840, %v1836
        %v1889 = vpack.c.b16 %v1841, %v1837
        %v1890 = vpack.c.b16 %v1842, %v1838
        %v1891 = vpack.c.b16 %v1843, %v1839
        %v1892 = vpack.c.b16 %v1848, %v1844
        %v1893 = vpack.c.b16 %v1849, %v1845
        %v1894 = vpack.c.b16 %v1850, %v1846
        %v1895 = vpack.c.b16 %v1851, %v1847
        %v1896 = vpack.c.b16 %v1856, %v1852
        %v1897 = vpack.c.b16 %v1857, %v1853
        %v1898 = vpack.c.b16 %v1858, %v1854
        %v1899 = vpack.c.b16 %v1859, %v1855
        %v1900 = vpack.c.b16 %v1864, %v1860
        %v1901 = vpack.c.b16 %v1865, %v1861
        %v1902 = vpack.c.b16 %v1866, %v1862
        %v1903 = vpack.c.b16 %v1867, %v1863
        %v1904 = vpack.c.b16 %v1872, %v1868
        %v1905 = vpack.c.b16 %v1873, %v1869
        %v1906 = vpack.c.b16 %v1874, %v1870
        %v1907 = vpack.c.b16 %v1875, %v1871
        %1940 = vmatprep.subr.bf16.mxu0 %v1877
        %1941 = vmatpush1.bf16.msra.mxu0 %v1876
        %1942 = vmatprep.subr.bf16.mxu0 %v1881
        %1943 = vmatpush1.bf16.msra.mxu0 %v1880
        %1944 = vmatprep.subr.bf16.mxu0 %v1885
        %1945 = vmatpush1.bf16.msra.mxu0 %v1884
        %1946 = vmatprep.subr.bf16.mxu0 %v1889
        %1947 = vmatpush1.bf16.msra.mxu0 %v1888
        %1948 = vmatprep.subr.bf16.mxu0 %v1893
        %1949 = vmatpush1.bf16.msra.mxu0 %v1892
        %1950 = vmatprep.subr.bf16.mxu0 %v1897
        %1951 = vmatpush1.bf16.msra.mxu0 %v1896
        %1952 = vmatprep.subr.bf16.mxu0 %v1901
        %1953 = vmatpush1.bf16.msra.mxu0 %v1900
        %1954 = vmatprep.subr.bf16.mxu0 %v1905
        %1955 = vmatpush1.bf16.msra.mxu0 %v1904
        %1956 = vmatprep.subr.bf16.mxu0 0
        %1957 = vmatpush1.bf16.msra.mxu0 0
        %1958 = vmatprep.subr.bf16.mxu0 0
        %1959 = vmatpush1.bf16.msra.mxu0 0
        %1960 = vmatprep.subr.bf16.mxu0 0
        %1961 = vmatpush1.bf16.msra.mxu0 0
        %1962 = vmatprep.subr.bf16.mxu0 0
        %1963 = vmatpush1.bf16.msra.mxu0 0
        %1964 = vmatprep.subr.bf16.mxu0 0
        %1965 = vmatpush1.bf16.msra.mxu0 0
        %1966 = vmatprep.subr.bf16.mxu0 0
        %1967 = vmatpush1.bf16.msra.mxu0 0
        %1968 = vmatprep.subr.bf16.mxu0 0
        %1969 = vmatpush1.bf16.msra.mxu0 0
        %1970 = vmatprep.subr.bf16.mxu0 0
        %1971 = vmatpush1.bf16.msra.mxu0 0
        %1972 = vmatprep.mubr.bf16.mxu0 0
        %1973 = vmatmul.mubr.bf16.gmra.mrb[0].mxu0 %v1747
        %v1974 = vpop.f32.mrb[0].mxu0
        %v1975 = vadd.f32 0.0, %v1974
        %v1976 = vpop.f32.mrb[0].mxu0
        %v1977 = vadd.f32 0.0, %v1976
        %v1978 = vpop.f32.mrb[0].mxu0
        %v1979 = vpop.f32.mrb[0].mxu0
        %1980 = vdwg.mxu0
        %1981 = vmatprep.subr.bf16.mxu0 %v1879
        %1982 = vmatpush1.bf16.msra.mxu0 %v1878
        %1983 = vmatprep.subr.bf16.mxu0 %v1883
        %1984 = vmatpush1.bf16.msra.mxu0 %v1882
        %1985 = vmatprep.subr.bf16.mxu0 %v1887
        %1986 = vmatpush1.bf16.msra.mxu0 %v1886
        %1987 = vmatprep.subr.bf16.mxu0 %v1891
        %1988 = vmatpush1.bf16.msra.mxu0 %v1890
        %1989 = vmatprep.subr.bf16.mxu0 %v1895
        %1990 = vmatpush1.bf16.msra.mxu0 %v1894
        %1991 = vmatprep.subr.bf16.mxu0 %v1899
        %1992 = vmatpush1.bf16.msra.mxu0 %v1898
        %1993 = vmatprep.subr.bf16.mxu0 %v1903
        %1994 = vmatpush1.bf16.msra.mxu0 %v1902
        %1995 = vmatprep.subr.bf16.mxu0 %v1907
        %1996 = vmatpush1.bf16.msra.mxu0 %v1906
        %1997 = vmatprep.subr.bf16.mxu0 0
        %1998 = vmatpush1.bf16.msra.mxu0 0
        %1999 = vmatprep.subr.bf16.mxu0 0
        %2000 = vmatpush1.bf16.msra.mxu0 0
        %2001 = vmatprep.subr.bf16.mxu0 0
        %2002 = vmatpush1.bf16.msra.mxu0 0
        %2003 = vmatprep.subr.bf16.mxu0 0
        %2004 = vmatpush1.bf16.msra.mxu0 0
        %2005 = vmatprep.subr.bf16.mxu0 0
        %2006 = vmatpush1.bf16.msra.mxu0 0
        %2007 = vmatprep.subr.bf16.mxu0 0
        %2008 = vmatpush1.bf16.msra.mxu0 0
        %2009 = vmatprep.subr.bf16.mxu0 0
        %2010 = vmatpush1.bf16.msra.mxu0 0
        %2011 = vmatprep.subr.bf16.mxu0 0
        %2012 = vmatpush1.bf16.msra.mxu0 0
        %2013 = vmatprep.mubr.bf16.mxu0 0
        %2014 = vmatmul.mubr.bf16.gmra.mrb[0].mxu0 %v1747
        %v2015 = vpop.f32.mrb[0].mxu0
        %v2016 = vadd.f32 0.0, %v2015
        %v2017 = vpop.f32.mrb[0].mxu0
        %v2018 = vadd.f32 0.0, %v2017
        %v2019 = vpop.f32.mrb[0].mxu0
        %v2020 = vpop.f32.mrb[0].mxu0
        %2021 = vdwg.mxu0
        %v2022 = vadd.f32 %v1741, %v1975
        %v2023 = vadd.f32 %v1742, %v1977
        %v2024 = vadd.f32 %v1743, %v2016
        %v2025 = vadd.f32 %v1744, %v2018
        %v2026 = vmul.f32 %v2022, 0.5
        %v2027 = vtanh.pop %v2026
        %v2028 = vmul.f32 %v2027, 0.5
        %v2029 = vadd.f32 %v2028, 0.5
        %v2030 = vmul.f32 %v2023, 0.5
        %v2031 = vtanh.pop %v2030
        %v2032 = vmul.f32 %v2031, 0.5
        %v2033 = vadd.f32 %v2032, 0.5
        %v2034 = vtanh.pop %v2024
        %v2035 = vmul.f32 %v2025, 0.5
        %v2036 = vtanh.pop %v2035
        %v2037 = vmul.f32 %v2036, 0.5
        %v2038 = vadd.f32 %v2037, 0.5
        %v2039 = vmul.f32 %v2033, %v1746
        %v2040 = vmul.f32 %v2029, %v2034
        %v2041 = vadd.f32 %v2039, %v2040
        %v2042 = vtanh.pop %v2041
        %v2043 = vmul.f32 %v2038, %v2042
        %s2044 = sadd.s32 %s761, %s1737
        %v2045 = vstv %s2044
        %vm2046 = vcmp.lt.s32.totalorder %v2045, %v762
        %v2047 = vsel %vm2046, 1, 0
        %2048 = vset.pattern.permute.xlu0 0
        %2049 = vperm.xlu0 %2048, %v2047
        %v2050 = vpop.permute.xlu0 %2049
        %vm2051 = vcmp.eq.s32.totalorder %v2050, 1
        %v2052 = vsel %vm2051, %v2043, %v1745
        %2053 = vst [vmem:[#allocation3] sm:$0xff] %v2052
        %v2054 = vsel %vm2051, %v2041, %v1746
        %2055 = vst [vmem:[#allocation4] sm:$0xff] %v2054
        %v2056 = vsel %vm2051, %v2043, 0.0
        %v2057 = vpack.c.bf16 %v2056, %v2056
        %s2058 = smul.addr %s1737, 4
        %s2059 = scalar_lea.vmem %s424, %s2058 [#allocation11]
        %2060 = vst [vmem:[%s2059] sm:$0xf] %v2057
        %s2061 = ssub.s32 4, %s35
        %s2062 = smul.u32 %s2061, 4
        %s2063 = smul.addr %s2062, 8
        %s2064 = scalar_lea.vmem [#allocation2], %s2063
        %v2065 = vld [vmem:[%s2064] sm:$0xff]
        %v2066 = vld [vmem:[%s2064 + $0x8] sm:$0xff]
        %v2067 = vld [vmem:[%s2064 + $0x10] sm:$0xff]
        %v2068 = vld [vmem:[%s2064 + $0x18] sm:$0xff]
        %v2069 = vld [vmem:[#allocation3] sm:$0xff]
        %v2070 = vld [vmem:[#allocation4] sm:$0xff]
        %v2071 = vpack.c.bf16 %v2069, %v2069
        %v2072 = vld [vmem:[%s384] sm:$0xff]
        %v2073 = vld [vmem:[%s384 + $0x8] sm:$0xff]
        %v2074 = vld [vmem:[%s384 + $0x10] sm:$0xff]
        %v2075 = vld [vmem:[%s384 + $0x18] sm:$0xff]
        %v2076 = vld [vmem:[%s384 + $0x20] sm:$0xff]
        %v2077 = vld [vmem:[%s384 + $0x28] sm:$0xff]
        %v2078 = vld [vmem:[%s384 + $0x30] sm:$0xff]
        %v2079 = vld [vmem:[%s384 + $0x38] sm:$0xff]
        %v2080 = vld [vmem:[%s384 + $0x40] sm:$0xff]
        %v2081 = vld [vmem:[%s384 + $0x48] sm:$0xff]
        %v2082 = vld [vmem:[%s384 + $0x50] sm:$0xff]
        %v2083 = vld [vmem:[%s384 + $0x58] sm:$0xff]
        %v2084 = vld [vmem:[%s384 + $0x60] sm:$0xff]
        %v2085 = vld [vmem:[%s384 + $0x68] sm:$0xff]
        %v2086 = vld [vmem:[%s384 + $0x70] sm:$0xff]
        %v2087 = vld [vmem:[%s384 + $0x78] sm:$0xff]
        %v2088 = vld [vmem:[%s384 + $0x80] sm:$0xff]
        %v2089 = vld [vmem:[%s384 + $0x88] sm:$0xff]
        %v2090 = vld [vmem:[%s384 + $0x90] sm:$0xff]
        %v2091 = vld [vmem:[%s384 + $0x98] sm:$0xff]
        %v2092 = vld [vmem:[%s384 + $0xa0] sm:$0xff]
        %v2093 = vld [vmem:[%s384 + $0xa8] sm:$0xff]
        %v2094 = vld [vmem:[%s384 + $0xb0] sm:$0xff]
        %v2095 = vld [vmem:[%s384 + $0xb8] sm:$0xff]
        %v2096 = vld [vmem:[%s384 + $0xc0] sm:$0xff]
        %v2097 = vld [vmem:[%s384 + $0xc8] sm:$0xff]
        %v2098 = vld [vmem:[%s384 + $0xd0] sm:$0xff]
        %v2099 = vld [vmem:[%s384 + $0xd8] sm:$0xff]
        %v2100 = vld [vmem:[%s384 + $0xe0] sm:$0xff]
        %v2101 = vld [vmem:[%s384 + $0xe8] sm:$0xff]
        %v2102 = vld [vmem:[%s384 + $0xf0] sm:$0xff]
        %v2103 = vld [vmem:[%s384 + $0xf8] sm:$0xff]
        %v2136 = vunpack.c.l.b16 %v2072
        %v2137 = vunpack.c.h.b16 %v2072
        %v2138 = vunpack.c.l.b16 %v2073
        %v2139 = vunpack.c.h.b16 %v2073
        %v2140 = vunpack.c.l.b16 %v2074
        %v2141 = vunpack.c.h.b16 %v2074
        %v2142 = vunpack.c.l.b16 %v2075
        %v2143 = vunpack.c.h.b16 %v2075
        %v2144 = vunpack.c.l.b16 %v2076
        %v2145 = vunpack.c.h.b16 %v2076
        %v2146 = vunpack.c.l.b16 %v2077
        %v2147 = vunpack.c.h.b16 %v2077
        %v2148 = vunpack.c.l.b16 %v2078
        %v2149 = vunpack.c.h.b16 %v2078
        %v2150 = vunpack.c.l.b16 %v2079
        %v2151 = vunpack.c.h.b16 %v2079
        %v2152 = vunpack.c.l.b16 %v2080
        %v2153 = vunpack.c.h.b16 %v2080
        %v2154 = vunpack.c.l.b16 %v2081
        %v2155 = vunpack.c.h.b16 %v2081
        %v2156 = vunpack.c.l.b16 %v2082
        %v2157 = vunpack.c.h.b16 %v2082
        %v2158 = vunpack.c.l.b16 %v2083
        %v2159 = vunpack.c.h.b16 %v2083
        %v2160 = vunpack.c.l.b16 %v2084
        %v2161 = vunpack.c.h.b16 %v2084
        %v2162 = vunpack.c.l.b16 %v2085
        %v2163 = vunpack.c.h.b16 %v2085
        %v2164 = vunpack.c.l.b16 %v2086
        %v2165 = vunpack.c.h.b16 %v2086
        %v2166 = vunpack.c.l.b16 %v2087
        %v2167 = vunpack.c.h.b16 %v2087
        %v2168 = vunpack.c.l.b16 %v2088
        %v2169 = vunpack.c.h.b16 %v2088
        %v2170 = vunpack.c.l.b16 %v2089
        %v2171 = vunpack.c.h.b16 %v2089
        %v2172 = vunpack.c.l.b16 %v2090
        %v2173 = vunpack.c.h.b16 %v2090
        %v2174 = vunpack.c.l.b16 %v2091
        %v2175 = vunpack.c.h.b16 %v2091
        %v2176 = vunpack.c.l.b16 %v2092
        %v2177 = vunpack.c.h.b16 %v2092
        %v2178 = vunpack.c.l.b16 %v2093
        %v2179 = vunpack.c.h.b16 %v2093
        %v2180 = vunpack.c.l.b16 %v2094
        %v2181 = vunpack.c.h.b16 %v2094
        %v2182 = vunpack.c.l.b16 %v2095
        %v2183 = vunpack.c.h.b16 %v2095
        %v2184 = vunpack.c.l.b16 %v2096
        %v2185 = vunpack.c.h.b16 %v2096
        %v2186 = vunpack.c.l.b16 %v2097
        %v2187 = vunpack.c.h.b16 %v2097
        %v2188 = vunpack.c.l.b16 %v2098
        %v2189 = vunpack.c.h.b16 %v2098
        %v2190 = vunpack.c.l.b16 %v2099
        %v2191 = vunpack.c.h.b16 %v2099
        %v2192 = vunpack.c.l.b16 %v2100
        %v2193 = vunpack.c.h.b16 %v2100
        %v2194 = vunpack.c.l.b16 %v2101
        %v2195 = vunpack.c.h.b16 %v2101
        %v2196 = vunpack.c.l.b16 %v2102
        %v2197 = vunpack.c.h.b16 %v2102
        %v2198 = vunpack.c.l.b16 %v2103
        %v2199 = vunpack.c.h.b16 %v2103
        %v2200 = vpack.c.b16 %v2140, %v2136
        %v2201 = vpack.c.b16 %v2141, %v2137
        %v2202 = vpack.c.b16 %v2142, %v2138
        %v2203 = vpack.c.b16 %v2143, %v2139
        %v2204 = vpack.c.b16 %v2148, %v2144
        %v2205 = vpack.c.b16 %v2149, %v2145
        %v2206 = vpack.c.b16 %v2150, %v2146
        %v2207 = vpack.c.b16 %v2151, %v2147
        %v2208 = vpack.c.b16 %v2156, %v2152
        %v2209 = vpack.c.b16 %v2157, %v2153
        %v2210 = vpack.c.b16 %v2158, %v2154
        %v2211 = vpack.c.b16 %v2159, %v2155
        %v2212 = vpack.c.b16 %v2164, %v2160
        %v2213 = vpack.c.b16 %v2165, %v2161
        %v2214 = vpack.c.b16 %v2166, %v2162
        %v2215 = vpack.c.b16 %v2167, %v2163
        %v2216 = vpack.c.b16 %v2172, %v2168
        %v2217 = vpack.c.b16 %v2173, %v2169
        %v2218 = vpack.c.b16 %v2174, %v2170
        %v2219 = vpack.c.b16 %v2175, %v2171
        %v2220 = vpack.c.b16 %v2180, %v2176
        %v2221 = vpack.c.b16 %v2181, %v2177
        %v2222 = vpack.c.b16 %v2182, %v2178
        %v2223 = vpack.c.b16 %v2183, %v2179
        %v2224 = vpack.c.b16 %v2188, %v2184
        %v2225 = vpack.c.b16 %v2189, %v2185
        %v2226 = vpack.c.b16 %v2190, %v2186
        %v2227 = vpack.c.b16 %v2191, %v2187
        %v2228 = vpack.c.b16 %v2196, %v2192
        %v2229 = vpack.c.b16 %v2197, %v2193
        %v2230 = vpack.c.b16 %v2198, %v2194
        %v2231 = vpack.c.b16 %v2199, %v2195
        %2264 = vmatprep.subr.bf16.mxu0 %v2201
        %2265 = vmatpush1.bf16.msra.mxu0 %v2200
        %2266 = vmatprep.subr.bf16.mxu0 %v2205
        %2267 = vmatpush1.bf16.msra.mxu0 %v2204
        %2268 = vmatprep.subr.bf16.mxu0 %v2209
        %2269 = vmatpush1.bf16.msra.mxu0 %v2208
        %2270 = vmatprep.subr.bf16.mxu0 %v2213
        %2271 = vmatpush1.bf16.msra.mxu0 %v2212
        %2272 = vmatprep.subr.bf16.mxu0 %v2217
        %2273 = vmatpush1.bf16.msra.mxu0 %v2216
        %2274 = vmatprep.subr.bf16.mxu0 %v2221
        %2275 = vmatpush1.bf16.msra.mxu0 %v2220
        %2276 = vmatprep.subr.bf16.mxu0 %v2225
        %2277 = vmatpush1.bf16.msra.mxu0 %v2224
        %2278 = vmatprep.subr.bf16.mxu0 %v2229
        %2279 = vmatpush1.bf16.msra.mxu0 %v2228
        %2280 = vmatprep.subr.bf16.mxu0 0
        %2281 = vmatpush1.bf16.msra.mxu0 0
        %2282 = vmatprep.subr.bf16.mxu0 0
        %2283 = vmatpush1.bf16.msra.mxu0 0
        %2284 = vmatprep.subr.bf16.mxu0 0
        %2285 = vmatpush1.bf16.msra.mxu0 0
        %2286 = vmatprep.subr.bf16.mxu0 0
        %2287 = vmatpush1.bf16.msra.mxu0 0
        %2288 = vmatprep.subr.bf16.mxu0 0
        %2289 = vmatpush1.bf16.msra.mxu0 0
        %2290 = vmatprep.subr.bf16.mxu0 0
        %2291 = vmatpush1.bf16.msra.mxu0 0
        %2292 = vmatprep.subr.bf16.mxu0 0
        %2293 = vmatpush1.bf16.msra.mxu0 0
        %2294 = vmatprep.subr.bf16.mxu0 0
        %2295 = vmatpush1.bf16.msra.mxu0 0
        %2296 = vmatprep.mubr.bf16.mxu0 0
        %2297 = vmatmul.mubr.bf16.gmra.mrb[0].mxu0 %v2071
        %v2298 = vpop.f32.mrb[0].mxu0
        %v2299 = vadd.f32 0.0, %v2298
        %v2300 = vpop.f32.mrb[0].mxu0
        %v2301 = vadd.f32 0.0, %v2300
        %v2302 = vpop.f32.mrb[0].mxu0
        %v2303 = vpop.f32.mrb[0].mxu0
        %2304 = vdwg.mxu0
        %2305 = vmatprep.subr.bf16.mxu0 %v2203
        %2306 = vmatpush1.bf16.msra.mxu0 %v2202
        %2307 = vmatprep.subr.bf16.mxu0 %v2207
        %2308 = vmatpush1.bf16.msra.mxu0 %v2206
        %2309 = vmatprep.subr.bf16.mxu0 %v2211
        %2310 = vmatpush1.bf16.msra.mxu0 %v2210
        %2311 = vmatprep.subr.bf16.mxu0 %v2215
        %2312 = vmatpush1.bf16.msra.mxu0 %v2214
        %2313 = vmatprep.subr.bf16.mxu0 %v2219
        %2314 = vmatpush1.bf16.msra.mxu0 %v2218
        %2315 = vmatprep.subr.bf16.mxu0 %v2223
        %2316 = vmatpush1.bf16.msra.mxu0 %v2222
        %2317 = vmatprep.subr.bf16.mxu0 %v2227
        %2318 = vmatpush1.bf16.msra.mxu0 %v2226
        %2319 = vmatprep.subr.bf16.mxu0 %v2231
        %2320 = vmatpush1.bf16.msra.mxu0 %v2230
        %2321 = vmatprep.subr.bf16.mxu0 0
        %2322 = vmatpush1.bf16.msra.mxu0 0
        %2323 = vmatprep.subr.bf16.mxu0 0
        %2324 = vmatpush1.bf16.msra.mxu0 0
        %2325 = vmatprep.subr.bf16.mxu0 0
        %2326 = vmatpush1.bf16.msra.mxu0 0
        %2327 = vmatprep.subr.bf16.mxu0 0
        %2328 = vmatpush1.bf16.msra.mxu0 0
        %2329 = vmatprep.subr.bf16.mxu0 0
        %2330 = vmatpush1.bf16.msra.mxu0 0
        %2331 = vmatprep.subr.bf16.mxu0 0
        %2332 = vmatpush1.bf16.msra.mxu0 0
        %2333 = vmatprep.subr.bf16.mxu0 0
        %2334 = vmatpush1.bf16.msra.mxu0 0
        %2335 = vmatprep.subr.bf16.mxu0 0
        %2336 = vmatpush1.bf16.msra.mxu0 0
        %2337 = vmatprep.mubr.bf16.mxu0 0
        %2338 = vmatmul.mubr.bf16.gmra.mrb[0].mxu0 %v2071
        %v2339 = vpop.f32.mrb[0].mxu0
        %v2340 = vadd.f32 0.0, %v2339
        %v2341 = vpop.f32.mrb[0].mxu0
        %v2342 = vadd.f32 0.0, %v2341
        %v2343 = vpop.f32.mrb[0].mxu0
        %v2344 = vpop.f32.mrb[0].mxu0
        %2345 = vdwg.mxu0
        %v2346 = vadd.f32 %v2065, %v2299
        %v2347 = vadd.f32 %v2066, %v2301
        %v2348 = vadd.f32 %v2067, %v2340
        %v2349 = vadd.f32 %v2068, %v2342
        %v2350 = vmul.f32 %v2346, 0.5
        %v2351 = vtanh.pop %v2350
        %v2352 = vmul.f32 %v2351, 0.5
        %v2353 = vadd.f32 %v2352, 0.5
        %v2354 = vmul.f32 %v2347, 0.5
        %v2355 = vtanh.pop %v2354
        %v2356 = vmul.f32 %v2355, 0.5
        %v2357 = vadd.f32 %v2356, 0.5
        %v2358 = vtanh.pop %v2348
        %v2359 = vmul.f32 %v2349, 0.5
        %v2360 = vtanh.pop %v2359
        %v2361 = vmul.f32 %v2360, 0.5
        %v2362 = vadd.f32 %v2361, 0.5
        %v2363 = vmul.f32 %v2357, %v2070
        %v2364 = vmul.f32 %v2353, %v2358
        %v2365 = vadd.f32 %v2363, %v2364
        %v2366 = vtanh.pop %v2365
        %v2367 = vmul.f32 %v2362, %v2366
        %s2368 = sadd.s32 %s761, %s2061
        %v2369 = vstv %s2368
        %vm2370 = vcmp.lt.s32.totalorder %v2369, %v762
        %v2371 = vsel %vm2370, 1, 0
        %2372 = vset.pattern.permute.xlu0 0
        %2373 = vperm.xlu0 %2372, %v2371
        %v2374 = vpop.permute.xlu0 %2373
        %vm2375 = vcmp.eq.s32.totalorder %v2374, 1
        %v2376 = vsel %vm2375, %v2367, %v2069
        %2377 = vst [vmem:[#allocation3] sm:$0xff] %v2376
        %v2378 = vsel %vm2375, %v2365, %v2070
        %2379 = vst [vmem:[#allocation4] sm:$0xff] %v2378
        %v2380 = vsel %vm2375, %v2367, 0.0
        %v2381 = vpack.c.bf16 %v2380, %v2380
        %s2382 = smul.addr %s2061, 4
        %s2383 = scalar_lea.vmem %s424, %s2382 [#allocation11]
        %2384 = vst [vmem:[%s2383] sm:$0xf] %v2381
        %s2385 = smul.u32 %s35, 4294967293
        %s2386 = sadd.s32 %s2385, 5
        %s2387 = smul.u32 %s2386, 4
        %s2388 = smul.addr %s2387, 8
        %s2389 = scalar_lea.vmem [#allocation2], %s2388
        %v2390 = vld [vmem:[%s2389] sm:$0xff]
        %v2391 = vld [vmem:[%s2389 + $0x8] sm:$0xff]
        %v2392 = vld [vmem:[%s2389 + $0x10] sm:$0xff]
        %v2393 = vld [vmem:[%s2389 + $0x18] sm:$0xff]
        %v2394 = vld [vmem:[#allocation3] sm:$0xff]
        %v2395 = vld [vmem:[#allocation4] sm:$0xff]
        %v2396 = vpack.c.bf16 %v2394, %v2394
        %v2397 = vld [vmem:[%s384] sm:$0xff]
        %v2398 = vld [vmem:[%s384 + $0x8] sm:$0xff]
        %v2399 = vld [vmem:[%s384 + $0x10] sm:$0xff]
        %v2400 = vld [vmem:[%s384 + $0x18] sm:$0xff]
        %v2401 = vld [vmem:[%s384 + $0x20] sm:$0xff]
        %v2402 = vld [vmem:[%s384 + $0x28] sm:$0xff]
        %v2403 = vld [vmem:[%s384 + $0x30] sm:$0xff]
        %v2404 = vld [vmem:[%s384 + $0x38] sm:$0xff]
        %v2405 = vld [vmem:[%s384 + $0x40] sm:$0xff]
        %v2406 = vld [vmem:[%s384 + $0x48] sm:$0xff]
        %v2407 = vld [vmem:[%s384 + $0x50] sm:$0xff]
        %v2408 = vld [vmem:[%s384 + $0x58] sm:$0xff]
        %v2409 = vld [vmem:[%s384 + $0x60] sm:$0xff]
        %v2410 = vld [vmem:[%s384 + $0x68] sm:$0xff]
        %v2411 = vld [vmem:[%s384 + $0x70] sm:$0xff]
        %v2412 = vld [vmem:[%s384 + $0x78] sm:$0xff]
        %v2413 = vld [vmem:[%s384 + $0x80] sm:$0xff]
        %v2414 = vld [vmem:[%s384 + $0x88] sm:$0xff]
        %v2415 = vld [vmem:[%s384 + $0x90] sm:$0xff]
        %v2416 = vld [vmem:[%s384 + $0x98] sm:$0xff]
        %v2417 = vld [vmem:[%s384 + $0xa0] sm:$0xff]
        %v2418 = vld [vmem:[%s384 + $0xa8] sm:$0xff]
        %v2419 = vld [vmem:[%s384 + $0xb0] sm:$0xff]
        %v2420 = vld [vmem:[%s384 + $0xb8] sm:$0xff]
        %v2421 = vld [vmem:[%s384 + $0xc0] sm:$0xff]
        %v2422 = vld [vmem:[%s384 + $0xc8] sm:$0xff]
        %v2423 = vld [vmem:[%s384 + $0xd0] sm:$0xff]
        %v2424 = vld [vmem:[%s384 + $0xd8] sm:$0xff]
        %v2425 = vld [vmem:[%s384 + $0xe0] sm:$0xff]
        %v2426 = vld [vmem:[%s384 + $0xe8] sm:$0xff]
        %v2427 = vld [vmem:[%s384 + $0xf0] sm:$0xff]
        %v2428 = vld [vmem:[%s384 + $0xf8] sm:$0xff]
        %v2461 = vunpack.c.l.b16 %v2397
        %v2462 = vunpack.c.h.b16 %v2397
        %v2463 = vunpack.c.l.b16 %v2398
        %v2464 = vunpack.c.h.b16 %v2398
        %v2465 = vunpack.c.l.b16 %v2399
        %v2466 = vunpack.c.h.b16 %v2399
        %v2467 = vunpack.c.l.b16 %v2400
        %v2468 = vunpack.c.h.b16 %v2400
        %v2469 = vunpack.c.l.b16 %v2401
        %v2470 = vunpack.c.h.b16 %v2401
        %v2471 = vunpack.c.l.b16 %v2402
        %v2472 = vunpack.c.h.b16 %v2402
        %v2473 = vunpack.c.l.b16 %v2403
        %v2474 = vunpack.c.h.b16 %v2403
        %v2475 = vunpack.c.l.b16 %v2404
        %v2476 = vunpack.c.h.b16 %v2404
        %v2477 = vunpack.c.l.b16 %v2405
        %v2478 = vunpack.c.h.b16 %v2405
        %v2479 = vunpack.c.l.b16 %v2406
        %v2480 = vunpack.c.h.b16 %v2406
        %v2481 = vunpack.c.l.b16 %v2407
        %v2482 = vunpack.c.h.b16 %v2407
        %v2483 = vunpack.c.l.b16 %v2408
        %v2484 = vunpack.c.h.b16 %v2408
        %v2485 = vunpack.c.l.b16 %v2409
        %v2486 = vunpack.c.h.b16 %v2409
        %v2487 = vunpack.c.l.b16 %v2410
        %v2488 = vunpack.c.h.b16 %v2410
        %v2489 = vunpack.c.l.b16 %v2411
        %v2490 = vunpack.c.h.b16 %v2411
        %v2491 = vunpack.c.l.b16 %v2412
        %v2492 = vunpack.c.h.b16 %v2412
        %v2493 = vunpack.c.l.b16 %v2413
        %v2494 = vunpack.c.h.b16 %v2413
        %v2495 = vunpack.c.l.b16 %v2414
        %v2496 = vunpack.c.h.b16 %v2414
        %v2497 = vunpack.c.l.b16 %v2415
        %v2498 = vunpack.c.h.b16 %v2415
        %v2499 = vunpack.c.l.b16 %v2416
        %v2500 = vunpack.c.h.b16 %v2416
        %v2501 = vunpack.c.l.b16 %v2417
        %v2502 = vunpack.c.h.b16 %v2417
        %v2503 = vunpack.c.l.b16 %v2418
        %v2504 = vunpack.c.h.b16 %v2418
        %v2505 = vunpack.c.l.b16 %v2419
        %v2506 = vunpack.c.h.b16 %v2419
        %v2507 = vunpack.c.l.b16 %v2420
        %v2508 = vunpack.c.h.b16 %v2420
        %v2509 = vunpack.c.l.b16 %v2421
        %v2510 = vunpack.c.h.b16 %v2421
        %v2511 = vunpack.c.l.b16 %v2422
        %v2512 = vunpack.c.h.b16 %v2422
        %v2513 = vunpack.c.l.b16 %v2423
        %v2514 = vunpack.c.h.b16 %v2423
        %v2515 = vunpack.c.l.b16 %v2424
        %v2516 = vunpack.c.h.b16 %v2424
        %v2517 = vunpack.c.l.b16 %v2425
        %v2518 = vunpack.c.h.b16 %v2425
        %v2519 = vunpack.c.l.b16 %v2426
        %v2520 = vunpack.c.h.b16 %v2426
        %v2521 = vunpack.c.l.b16 %v2427
        %v2522 = vunpack.c.h.b16 %v2427
        %v2523 = vunpack.c.l.b16 %v2428
        %v2524 = vunpack.c.h.b16 %v2428
        %v2525 = vpack.c.b16 %v2465, %v2461
        %v2526 = vpack.c.b16 %v2466, %v2462
        %v2527 = vpack.c.b16 %v2467, %v2463
        %v2528 = vpack.c.b16 %v2468, %v2464
        %v2529 = vpack.c.b16 %v2473, %v2469
        %v2530 = vpack.c.b16 %v2474, %v2470
        %v2531 = vpack.c.b16 %v2475, %v2471
        %v2532 = vpack.c.b16 %v2476, %v2472
        %v2533 = vpack.c.b16 %v2481, %v2477
        %v2534 = vpack.c.b16 %v2482, %v2478
        %v2535 = vpack.c.b16 %v2483, %v2479
        %v2536 = vpack.c.b16 %v2484, %v2480
        %v2537 = vpack.c.b16 %v2489, %v2485
        %v2538 = vpack.c.b16 %v2490, %v2486
        %v2539 = vpack.c.b16 %v2491, %v2487
        %v2540 = vpack.c.b16 %v2492, %v2488
        %v2541 = vpack.c.b16 %v2497, %v2493
        %v2542 = vpack.c.b16 %v2498, %v2494
        %v2543 = vpack.c.b16 %v2499, %v2495
        %v2544 = vpack.c.b16 %v2500, %v2496
        %v2545 = vpack.c.b16 %v2505, %v2501
        %v2546 = vpack.c.b16 %v2506, %v2502
        %v2547 = vpack.c.b16 %v2507, %v2503
        %v2548 = vpack.c.b16 %v2508, %v2504
        %v2549 = vpack.c.b16 %v2513, %v2509
        %v2550 = vpack.c.b16 %v2514, %v2510
        %v2551 = vpack.c.b16 %v2515, %v2511
        %v2552 = vpack.c.b16 %v2516, %v2512
        %v2553 = vpack.c.b16 %v2521, %v2517
        %v2554 = vpack.c.b16 %v2522, %v2518
        %v2555 = vpack.c.b16 %v2523, %v2519
        %v2556 = vpack.c.b16 %v2524, %v2520
        %2589 = vmatprep.subr.bf16.mxu0 %v2526
        %2590 = vmatpush1.bf16.msra.mxu0 %v2525
        %2591 = vmatprep.subr.bf16.mxu0 %v2530
        %2592 = vmatpush1.bf16.msra.mxu0 %v2529
        %2593 = vmatprep.subr.bf16.mxu0 %v2534
        %2594 = vmatpush1.bf16.msra.mxu0 %v2533
        %2595 = vmatprep.subr.bf16.mxu0 %v2538
        %2596 = vmatpush1.bf16.msra.mxu0 %v2537
        %2597 = vmatprep.subr.bf16.mxu0 %v2542
        %2598 = vmatpush1.bf16.msra.mxu0 %v2541
        %2599 = vmatprep.subr.bf16.mxu0 %v2546
        %2600 = vmatpush1.bf16.msra.mxu0 %v2545
        %2601 = vmatprep.subr.bf16.mxu0 %v2550
        %2602 = vmatpush1.bf16.msra.mxu0 %v2549
        %2603 = vmatprep.subr.bf16.mxu0 %v2554
        %2604 = vmatpush1.bf16.msra.mxu0 %v2553
        %2605 = vmatprep.subr.bf16.mxu0 0
        %2606 = vmatpush1.bf16.msra.mxu0 0
        %2607 = vmatprep.subr.bf16.mxu0 0
        %2608 = vmatpush1.bf16.msra.mxu0 0
        %2609 = vmatprep.subr.bf16.mxu0 0
        %2610 = vmatpush1.bf16.msra.mxu0 0
        %2611 = vmatprep.subr.bf16.mxu0 0
        %2612 = vmatpush1.bf16.msra.mxu0 0
        %2613 = vmatprep.subr.bf16.mxu0 0
        %2614 = vmatpush1.bf16.msra.mxu0 0
        %2615 = vmatprep.subr.bf16.mxu0 0
        %2616 = vmatpush1.bf16.msra.mxu0 0
        %2617 = vmatprep.subr.bf16.mxu0 0
        %2618 = vmatpush1.bf16.msra.mxu0 0
        %2619 = vmatprep.subr.bf16.mxu0 0
        %2620 = vmatpush1.bf16.msra.mxu0 0
        %2621 = vmatprep.mubr.bf16.mxu0 0
        %2622 = vmatmul.mubr.bf16.gmra.mrb[0].mxu0 %v2396
        %v2623 = vpop.f32.mrb[0].mxu0
        %v2624 = vadd.f32 0.0, %v2623
        %v2625 = vpop.f32.mrb[0].mxu0
        %v2626 = vadd.f32 0.0, %v2625
        %v2627 = vpop.f32.mrb[0].mxu0
        %v2628 = vpop.f32.mrb[0].mxu0
        %2629 = vdwg.mxu0
        %2630 = vmatprep.subr.bf16.mxu0 %v2528
        %2631 = vmatpush1.bf16.msra.mxu0 %v2527
        %2632 = vmatprep.subr.bf16.mxu0 %v2532
        %2633 = vmatpush1.bf16.msra.mxu0 %v2531
        %2634 = vmatprep.subr.bf16.mxu0 %v2536
        %2635 = vmatpush1.bf16.msra.mxu0 %v2535
        %2636 = vmatprep.subr.bf16.mxu0 %v2540
        %2637 = vmatpush1.bf16.msra.mxu0 %v2539
        %2638 = vmatprep.subr.bf16.mxu0 %v2544
        %2639 = vmatpush1.bf16.msra.mxu0 %v2543
        %2640 = vmatprep.subr.bf16.mxu0 %v2548
        %2641 = vmatpush1.bf16.msra.mxu0 %v2547
        %2642 = vmatprep.subr.bf16.mxu0 %v2552
        %2643 = vmatpush1.bf16.msra.mxu0 %v2551
        %2644 = vmatprep.subr.bf16.mxu0 %v2556
        %2645 = vmatpush1.bf16.msra.mxu0 %v2555
        %2646 = vmatprep.subr.bf16.mxu0 0
        %2647 = vmatpush1.bf16.msra.mxu0 0
        %2648 = vmatprep.subr.bf16.mxu0 0
        %2649 = vmatpush1.bf16.msra.mxu0 0
        %2650 = vmatprep.subr.bf16.mxu0 0
        %2651 = vmatpush1.bf16.msra.mxu0 0
        %2652 = vmatprep.subr.bf16.mxu0 0
        %2653 = vmatpush1.bf16.msra.mxu0 0
        %2654 = vmatprep.subr.bf16.mxu0 0
        %2655 = vmatpush1.bf16.msra.mxu0 0
        %2656 = vmatprep.subr.bf16.mxu0 0
        %2657 = vmatpush1.bf16.msra.mxu0 0
        %2658 = vmatprep.subr.bf16.mxu0 0
        %2659 = vmatpush1.bf16.msra.mxu0 0
        %2660 = vmatprep.subr.bf16.mxu0 0
        %2661 = vmatpush1.bf16.msra.mxu0 0
        %2662 = vmatprep.mubr.bf16.mxu0 0
        %2663 = vmatmul.mubr.bf16.gmra.mrb[0].mxu0 %v2396
        %v2664 = vpop.f32.mrb[0].mxu0
        %v2665 = vadd.f32 0.0, %v2664
        %v2666 = vpop.f32.mrb[0].mxu0
        %v2667 = vadd.f32 0.0, %v2666
        %v2668 = vpop.f32.mrb[0].mxu0
        %v2669 = vpop.f32.mrb[0].mxu0
        %2670 = vdwg.mxu0
        %v2671 = vadd.f32 %v2390, %v2624
        %v2672 = vadd.f32 %v2391, %v2626
        %v2673 = vadd.f32 %v2392, %v2665
        %v2674 = vadd.f32 %v2393, %v2667
        %v2675 = vmul.f32 %v2671, 0.5
        %v2676 = vtanh.pop %v2675
        %v2677 = vmul.f32 %v2676, 0.5
        %v2678 = vadd.f32 %v2677, 0.5
        %v2679 = vmul.f32 %v2672, 0.5
        %v2680 = vtanh.pop %v2679
        %v2681 = vmul.f32 %v2680, 0.5
        %v2682 = vadd.f32 %v2681, 0.5
        %v2683 = vtanh.pop %v2673
        %v2684 = vmul.f32 %v2674, 0.5
        %v2685 = vtanh.pop %v2684
        %v2686 = vmul.f32 %v2685, 0.5
        %v2687 = vadd.f32 %v2686, 0.5
        %v2688 = vmul.f32 %v2682, %v2395
        %v2689 = vmul.f32 %v2678, %v2683
        %v2690 = vadd.f32 %v2688, %v2689
        %v2691 = vtanh.pop %v2690
        %v2692 = vmul.f32 %v2687, %v2691
        %s2693 = sadd.s32 %s761, %s2386
        %v2694 = vstv %s2693
        %vm2695 = vcmp.lt.s32.totalorder %v2694, %v762
        %v2696 = vsel %vm2695, 1, 0
        %2697 = vset.pattern.permute.xlu0 0
        %2698 = vperm.xlu0 %2697, %v2696
        %v2699 = vpop.permute.xlu0 %2698
        %vm2700 = vcmp.eq.s32.totalorder %v2699, 1
        %v2701 = vsel %vm2700, %v2692, %v2394
        %2702 = vst [vmem:[#allocation3] sm:$0xff] %v2701
        %v2703 = vsel %vm2700, %v2690, %v2395
        %2704 = vst [vmem:[#allocation4] sm:$0xff] %v2703
        %v2705 = vsel %vm2700, %v2692, 0.0
        %v2706 = vpack.c.bf16 %v2705, %v2705
        %s2707 = smul.addr %s2386, 4
        %s2708 = scalar_lea.vmem %s424, %s2707 [#allocation11]
        %2709 = vst [vmem:[%s2708] sm:$0xf] %v2706
        %s2710 = smul.u32 %s35, 4294967291
        %s2711 = sadd.s32 %s2710, 6
        %s2712 = smul.u32 %s2711, 4
        %s2713 = smul.addr %s2712, 8
        %s2714 = scalar_lea.vmem [#allocation2], %s2713
        %v2715 = vld [vmem:[%s2714] sm:$0xff]
        %v2716 = vld [vmem:[%s2714 + $0x8] sm:$0xff]
        %v2717 = vld [vmem:[%s2714 + $0x10] sm:$0xff]
        %v2718 = vld [vmem:[%s2714 + $0x18] sm:$0xff]
        %v2719 = vld [vmem:[#allocation3] sm:$0xff]
        %v2720 = vld [vmem:[#allocation4] sm:$0xff]
        %v2721 = vpack.c.bf16 %v2719, %v2719
        %v2722 = vld [vmem:[%s384] sm:$0xff]
        %v2723 = vld [vmem:[%s384 + $0x8] sm:$0xff]
        %v2724 = vld [vmem:[%s384 + $0x10] sm:$0xff]
        %v2725 = vld [vmem:[%s384 + $0x18] sm:$0xff]
        %v2726 = vld [vmem:[%s384 + $0x20] sm:$0xff]
        %v2727 = vld [vmem:[%s384 + $0x28] sm:$0xff]
        %v2728 = vld [vmem:[%s384 + $0x30] sm:$0xff]
        %v2729 = vld [vmem:[%s384 + $0x38] sm:$0xff]
        %v2730 = vld [vmem:[%s384 + $0x40] sm:$0xff]
        %v2731 = vld [vmem:[%s384 + $0x48] sm:$0xff]
        %v2732 = vld [vmem:[%s384 + $0x50] sm:$0xff]
        %v2733 = vld [vmem:[%s384 + $0x58] sm:$0xff]
        %v2734 = vld [vmem:[%s384 + $0x60] sm:$0xff]
        %v2735 = vld [vmem:[%s384 + $0x68] sm:$0xff]
        %v2736 = vld [vmem:[%s384 + $0x70] sm:$0xff]
        %v2737 = vld [vmem:[%s384 + $0x78] sm:$0xff]
        %v2738 = vld [vmem:[%s384 + $0x80] sm:$0xff]
        %v2739 = vld [vmem:[%s384 + $0x88] sm:$0xff]
        %v2740 = vld [vmem:[%s384 + $0x90] sm:$0xff]
        %v2741 = vld [vmem:[%s384 + $0x98] sm:$0xff]
        %v2742 = vld [vmem:[%s384 + $0xa0] sm:$0xff]
        %v2743 = vld [vmem:[%s384 + $0xa8] sm:$0xff]
        %v2744 = vld [vmem:[%s384 + $0xb0] sm:$0xff]
        %v2745 = vld [vmem:[%s384 + $0xb8] sm:$0xff]
        %v2746 = vld [vmem:[%s384 + $0xc0] sm:$0xff]
        %v2747 = vld [vmem:[%s384 + $0xc8] sm:$0xff]
        %v2748 = vld [vmem:[%s384 + $0xd0] sm:$0xff]
        %v2749 = vld [vmem:[%s384 + $0xd8] sm:$0xff]
        %v2750 = vld [vmem:[%s384 + $0xe0] sm:$0xff]
        %v2751 = vld [vmem:[%s384 + $0xe8] sm:$0xff]
        %v2752 = vld [vmem:[%s384 + $0xf0] sm:$0xff]
        %v2753 = vld [vmem:[%s384 + $0xf8] sm:$0xff]
        %v2786 = vunpack.c.l.b16 %v2722
        %v2787 = vunpack.c.h.b16 %v2722
        %v2788 = vunpack.c.l.b16 %v2723
        %v2789 = vunpack.c.h.b16 %v2723
        %v2790 = vunpack.c.l.b16 %v2724
        %v2791 = vunpack.c.h.b16 %v2724
        %v2792 = vunpack.c.l.b16 %v2725
        %v2793 = vunpack.c.h.b16 %v2725
        %v2794 = vunpack.c.l.b16 %v2726
        %v2795 = vunpack.c.h.b16 %v2726
        %v2796 = vunpack.c.l.b16 %v2727
        %v2797 = vunpack.c.h.b16 %v2727
        %v2798 = vunpack.c.l.b16 %v2728
        %v2799 = vunpack.c.h.b16 %v2728
        %v2800 = vunpack.c.l.b16 %v2729
        %v2801 = vunpack.c.h.b16 %v2729
        %v2802 = vunpack.c.l.b16 %v2730
        %v2803 = vunpack.c.h.b16 %v2730
        %v2804 = vunpack.c.l.b16 %v2731
        %v2805 = vunpack.c.h.b16 %v2731
        %v2806 = vunpack.c.l.b16 %v2732
        %v2807 = vunpack.c.h.b16 %v2732
        %v2808 = vunpack.c.l.b16 %v2733
        %v2809 = vunpack.c.h.b16 %v2733
        %v2810 = vunpack.c.l.b16 %v2734
        %v2811 = vunpack.c.h.b16 %v2734
        %v2812 = vunpack.c.l.b16 %v2735
        %v2813 = vunpack.c.h.b16 %v2735
        %v2814 = vunpack.c.l.b16 %v2736
        %v2815 = vunpack.c.h.b16 %v2736
        %v2816 = vunpack.c.l.b16 %v2737
        %v2817 = vunpack.c.h.b16 %v2737
        %v2818 = vunpack.c.l.b16 %v2738
        %v2819 = vunpack.c.h.b16 %v2738
        %v2820 = vunpack.c.l.b16 %v2739
        %v2821 = vunpack.c.h.b16 %v2739
        %v2822 = vunpack.c.l.b16 %v2740
        %v2823 = vunpack.c.h.b16 %v2740
        %v2824 = vunpack.c.l.b16 %v2741
        %v2825 = vunpack.c.h.b16 %v2741
        %v2826 = vunpack.c.l.b16 %v2742
        %v2827 = vunpack.c.h.b16 %v2742
        %v2828 = vunpack.c.l.b16 %v2743
        %v2829 = vunpack.c.h.b16 %v2743
        %v2830 = vunpack.c.l.b16 %v2744
        %v2831 = vunpack.c.h.b16 %v2744
        %v2832 = vunpack.c.l.b16 %v2745
        %v2833 = vunpack.c.h.b16 %v2745
        %v2834 = vunpack.c.l.b16 %v2746
        %v2835 = vunpack.c.h.b16 %v2746
        %v2836 = vunpack.c.l.b16 %v2747
        %v2837 = vunpack.c.h.b16 %v2747
        %v2838 = vunpack.c.l.b16 %v2748
        %v2839 = vunpack.c.h.b16 %v2748
        %v2840 = vunpack.c.l.b16 %v2749
        %v2841 = vunpack.c.h.b16 %v2749
        %v2842 = vunpack.c.l.b16 %v2750
        %v2843 = vunpack.c.h.b16 %v2750
        %v2844 = vunpack.c.l.b16 %v2751
        %v2845 = vunpack.c.h.b16 %v2751
        %v2846 = vunpack.c.l.b16 %v2752
        %v2847 = vunpack.c.h.b16 %v2752
        %v2848 = vunpack.c.l.b16 %v2753
        %v2849 = vunpack.c.h.b16 %v2753
        %v2850 = vpack.c.b16 %v2790, %v2786
        %v2851 = vpack.c.b16 %v2791, %v2787
        %v2852 = vpack.c.b16 %v2792, %v2788
        %v2853 = vpack.c.b16 %v2793, %v2789
        %v2854 = vpack.c.b16 %v2798, %v2794
        %v2855 = vpack.c.b16 %v2799, %v2795
        %v2856 = vpack.c.b16 %v2800, %v2796
        %v2857 = vpack.c.b16 %v2801, %v2797
        %v2858 = vpack.c.b16 %v2806, %v2802
        %v2859 = vpack.c.b16 %v2807, %v2803
        %v2860 = vpack.c.b16 %v2808, %v2804
        %v2861 = vpack.c.b16 %v2809, %v2805
        %v2862 = vpack.c.b16 %v2814, %v2810
        %v2863 = vpack.c.b16 %v2815, %v2811
        %v2864 = vpack.c.b16 %v2816, %v2812
        %v2865 = vpack.c.b16 %v2817, %v2813
        %v2866 = vpack.c.b16 %v2822, %v2818
        %v2867 = vpack.c.b16 %v2823, %v2819
        %v2868 = vpack.c.b16 %v2824, %v2820
        %v2869 = vpack.c.b16 %v2825, %v2821
        %v2870 = vpack.c.b16 %v2830, %v2826
        %v2871 = vpack.c.b16 %v2831, %v2827
        %v2872 = vpack.c.b16 %v2832, %v2828
        %v2873 = vpack.c.b16 %v2833, %v2829
        %v2874 = vpack.c.b16 %v2838, %v2834
        %v2875 = vpack.c.b16 %v2839, %v2835
        %v2876 = vpack.c.b16 %v2840, %v2836
        %v2877 = vpack.c.b16 %v2841, %v2837
        %v2878 = vpack.c.b16 %v2846, %v2842
        %v2879 = vpack.c.b16 %v2847, %v2843
        %v2880 = vpack.c.b16 %v2848, %v2844
        %v2881 = vpack.c.b16 %v2849, %v2845
        %2914 = vmatprep.subr.bf16.mxu0 %v2851
        %2915 = vmatpush1.bf16.msra.mxu0 %v2850
        %2916 = vmatprep.subr.bf16.mxu0 %v2855
        %2917 = vmatpush1.bf16.msra.mxu0 %v2854
        %2918 = vmatprep.subr.bf16.mxu0 %v2859
        %2919 = vmatpush1.bf16.msra.mxu0 %v2858
        %2920 = vmatprep.subr.bf16.mxu0 %v2863
        %2921 = vmatpush1.bf16.msra.mxu0 %v2862
        %2922 = vmatprep.subr.bf16.mxu0 %v2867
        %2923 = vmatpush1.bf16.msra.mxu0 %v2866
        %2924 = vmatprep.subr.bf16.mxu0 %v2871
        %2925 = vmatpush1.bf16.msra.mxu0 %v2870
        %2926 = vmatprep.subr.bf16.mxu0 %v2875
        %2927 = vmatpush1.bf16.msra.mxu0 %v2874
        %2928 = vmatprep.subr.bf16.mxu0 %v2879
        %2929 = vmatpush1.bf16.msra.mxu0 %v2878
        %2930 = vmatprep.subr.bf16.mxu0 0
        %2931 = vmatpush1.bf16.msra.mxu0 0
        %2932 = vmatprep.subr.bf16.mxu0 0
        %2933 = vmatpush1.bf16.msra.mxu0 0
        %2934 = vmatprep.subr.bf16.mxu0 0
        %2935 = vmatpush1.bf16.msra.mxu0 0
        %2936 = vmatprep.subr.bf16.mxu0 0
        %2937 = vmatpush1.bf16.msra.mxu0 0
        %2938 = vmatprep.subr.bf16.mxu0 0
        %2939 = vmatpush1.bf16.msra.mxu0 0
        %2940 = vmatprep.subr.bf16.mxu0 0
        %2941 = vmatpush1.bf16.msra.mxu0 0
        %2942 = vmatprep.subr.bf16.mxu0 0
        %2943 = vmatpush1.bf16.msra.mxu0 0
        %2944 = vmatprep.subr.bf16.mxu0 0
        %2945 = vmatpush1.bf16.msra.mxu0 0
        %2946 = vmatprep.mubr.bf16.mxu0 0
        %2947 = vmatmul.mubr.bf16.gmra.mrb[0].mxu0 %v2721
        %v2948 = vpop.f32.mrb[0].mxu0
        %v2949 = vadd.f32 0.0, %v2948
        %v2950 = vpop.f32.mrb[0].mxu0
        %v2951 = vadd.f32 0.0, %v2950
        %v2952 = vpop.f32.mrb[0].mxu0
        %v2953 = vpop.f32.mrb[0].mxu0
        %2954 = vdwg.mxu0
        %2955 = vmatprep.subr.bf16.mxu0 %v2853
        %2956 = vmatpush1.bf16.msra.mxu0 %v2852
        %2957 = vmatprep.subr.bf16.mxu0 %v2857
        %2958 = vmatpush1.bf16.msra.mxu0 %v2856
        %2959 = vmatprep.subr.bf16.mxu0 %v2861
        %2960 = vmatpush1.bf16.msra.mxu0 %v2860
        %2961 = vmatprep.subr.bf16.mxu0 %v2865
        %2962 = vmatpush1.bf16.msra.mxu0 %v2864
        %2963 = vmatprep.subr.bf16.mxu0 %v2869
        %2964 = vmatpush1.bf16.msra.mxu0 %v2868
        %2965 = vmatprep.subr.bf16.mxu0 %v2873
        %2966 = vmatpush1.bf16.msra.mxu0 %v2872
        %2967 = vmatprep.subr.bf16.mxu0 %v2877
        %2968 = vmatpush1.bf16.msra.mxu0 %v2876
        %2969 = vmatprep.subr.bf16.mxu0 %v2881
        %2970 = vmatpush1.bf16.msra.mxu0 %v2880
        %2971 = vmatprep.subr.bf16.mxu0 0
        %2972 = vmatpush1.bf16.msra.mxu0 0
        %2973 = vmatprep.subr.bf16.mxu0 0
        %2974 = vmatpush1.bf16.msra.mxu0 0
        %2975 = vmatprep.subr.bf16.mxu0 0
        %2976 = vmatpush1.bf16.msra.mxu0 0
        %2977 = vmatprep.subr.bf16.mxu0 0
        %2978 = vmatpush1.bf16.msra.mxu0 0
        %2979 = vmatprep.subr.bf16.mxu0 0
        %2980 = vmatpush1.bf16.msra.mxu0 0
        %2981 = vmatprep.subr.bf16.mxu0 0
        %2982 = vmatpush1.bf16.msra.mxu0 0
        %2983 = vmatprep.subr.bf16.mxu0 0
        %2984 = vmatpush1.bf16.msra.mxu0 0
        %2985 = vmatprep.subr.bf16.mxu0 0
        %2986 = vmatpush1.bf16.msra.mxu0 0
        %2987 = vmatprep.mubr.bf16.mxu0 0
        %2988 = vmatmul.mubr.bf16.gmra.mrb[0].mxu0 %v2721
        %v2989 = vpop.f32.mrb[0].mxu0
        %v2990 = vadd.f32 0.0, %v2989
        %v2991 = vpop.f32.mrb[0].mxu0
        %v2992 = vadd.f32 0.0, %v2991
        %v2993 = vpop.f32.mrb[0].mxu0
        %v2994 = vpop.f32.mrb[0].mxu0
        %2995 = vdwg.mxu0
        %v2996 = vadd.f32 %v2715, %v2949
        %v2997 = vadd.f32 %v2716, %v2951
        %v2998 = vadd.f32 %v2717, %v2990
        %v2999 = vadd.f32 %v2718, %v2992
        %v3000 = vmul.f32 %v2996, 0.5
        %v3001 = vtanh.pop %v3000
        %v3002 = vmul.f32 %v3001, 0.5
        %v3003 = vadd.f32 %v3002, 0.5
        %v3004 = vmul.f32 %v2997, 0.5
        %v3005 = vtanh.pop %v3004
        %v3006 = vmul.f32 %v3005, 0.5
        %v3007 = vadd.f32 %v3006, 0.5
        %v3008 = vtanh.pop %v2998
        %v3009 = vmul.f32 %v2999, 0.5
        %v3010 = vtanh.pop %v3009
        %v3011 = vmul.f32 %v3010, 0.5
        %v3012 = vadd.f32 %v3011, 0.5
        %v3013 = vmul.f32 %v3007, %v2720
        %v3014 = vmul.f32 %v3003, %v3008
        %v3015 = vadd.f32 %v3013, %v3014
        %v3016 = vtanh.pop %v3015
        %v3017 = vmul.f32 %v3012, %v3016
        %s3018 = sadd.s32 %s761, %s2711
        %v3019 = vstv %s3018
        %vm3020 = vcmp.lt.s32.totalorder %v3019, %v762
        %v3021 = vsel %vm3020, 1, 0
        %3022 = vset.pattern.permute.xlu0 0
        %3023 = vperm.xlu0 %3022, %v3021
        %v3024 = vpop.permute.xlu0 %3023
        %vm3025 = vcmp.eq.s32.totalorder %v3024, 1
        %v3026 = vsel %vm3025, %v3017, %v2719
        %3027 = vst [vmem:[#allocation3] sm:$0xff] %v3026
        %v3028 = vsel %vm3025, %v3015, %v2720
        %3029 = vst [vmem:[#allocation4] sm:$0xff] %v3028
        %v3030 = vsel %vm3025, %v3017, 0.0
        %v3031 = vpack.c.bf16 %v3030, %v3030
        %s3032 = smul.addr %s2711, 4
        %s3033 = scalar_lea.vmem %s424, %s3032 [#allocation11]
        %3034 = vst [vmem:[%s3033] sm:$0xf] %v3031
        %s3035 = smul.u32 %s35, 4294967289
        %s3036 = sadd.s32 %s3035, 7
        %s3037 = smul.u32 %s3036, 4
        %s3038 = smul.addr %s3037, 8
        %s3039 = scalar_lea.vmem [#allocation2], %s3038
        %v3040 = vld [vmem:[%s3039] sm:$0xff]
        %v3041 = vld [vmem:[%s3039 + $0x8] sm:$0xff]
        %v3042 = vld [vmem:[%s3039 + $0x10] sm:$0xff]
        %v3043 = vld [vmem:[%s3039 + $0x18] sm:$0xff]
        %v3044 = vld [vmem:[#allocation3] sm:$0xff]
        %v3045 = vld [vmem:[#allocation4] sm:$0xff]
        %v3046 = vpack.c.bf16 %v3044, %v3044
        %v3047 = vld [vmem:[%s384] sm:$0xff]
        %v3048 = vld [vmem:[%s384 + $0x8] sm:$0xff]
        %v3049 = vld [vmem:[%s384 + $0x10] sm:$0xff]
        %v3050 = vld [vmem:[%s384 + $0x18] sm:$0xff]
        %v3051 = vld [vmem:[%s384 + $0x20] sm:$0xff]
        %v3052 = vld [vmem:[%s384 + $0x28] sm:$0xff]
        %v3053 = vld [vmem:[%s384 + $0x30] sm:$0xff]
        %v3054 = vld [vmem:[%s384 + $0x38] sm:$0xff]
        %v3055 = vld [vmem:[%s384 + $0x40] sm:$0xff]
        %v3056 = vld [vmem:[%s384 + $0x48] sm:$0xff]
        %v3057 = vld [vmem:[%s384 + $0x50] sm:$0xff]
        %v3058 = vld [vmem:[%s384 + $0x58] sm:$0xff]
        %v3059 = vld [vmem:[%s384 + $0x60] sm:$0xff]
        %v3060 = vld [vmem:[%s384 + $0x68] sm:$0xff]
        %v3061 = vld [vmem:[%s384 + $0x70] sm:$0xff]
        %v3062 = vld [vmem:[%s384 + $0x78] sm:$0xff]
        %v3063 = vld [vmem:[%s384 + $0x80] sm:$0xff]
        %v3064 = vld [vmem:[%s384 + $0x88] sm:$0xff]
        %v3065 = vld [vmem:[%s384 + $0x90] sm:$0xff]
        %v3066 = vld [vmem:[%s384 + $0x98] sm:$0xff]
        %v3067 = vld [vmem:[%s384 + $0xa0] sm:$0xff]
        %v3068 = vld [vmem:[%s384 + $0xa8] sm:$0xff]
        %v3069 = vld [vmem:[%s384 + $0xb0] sm:$0xff]
        %v3070 = vld [vmem:[%s384 + $0xb8] sm:$0xff]
        %v3071 = vld [vmem:[%s384 + $0xc0] sm:$0xff]
        %v3072 = vld [vmem:[%s384 + $0xc8] sm:$0xff]
        %v3073 = vld [vmem:[%s384 + $0xd0] sm:$0xff]
        %v3074 = vld [vmem:[%s384 + $0xd8] sm:$0xff]
        %v3075 = vld [vmem:[%s384 + $0xe0] sm:$0xff]
        %v3076 = vld [vmem:[%s384 + $0xe8] sm:$0xff]
        %v3077 = vld [vmem:[%s384 + $0xf0] sm:$0xff]
        %v3078 = vld [vmem:[%s384 + $0xf8] sm:$0xff]
        %v3111 = vunpack.c.l.b16 %v3047
        %v3112 = vunpack.c.h.b16 %v3047
        %v3113 = vunpack.c.l.b16 %v3048
        %v3114 = vunpack.c.h.b16 %v3048
        %v3115 = vunpack.c.l.b16 %v3049
        %v3116 = vunpack.c.h.b16 %v3049
        %v3117 = vunpack.c.l.b16 %v3050
        %v3118 = vunpack.c.h.b16 %v3050
        %v3119 = vunpack.c.l.b16 %v3051
        %v3120 = vunpack.c.h.b16 %v3051
        %v3121 = vunpack.c.l.b16 %v3052
        %v3122 = vunpack.c.h.b16 %v3052
        %v3123 = vunpack.c.l.b16 %v3053
        %v3124 = vunpack.c.h.b16 %v3053
        %v3125 = vunpack.c.l.b16 %v3054
        %v3126 = vunpack.c.h.b16 %v3054
        %v3127 = vunpack.c.l.b16 %v3055
        %v3128 = vunpack.c.h.b16 %v3055
        %v3129 = vunpack.c.l.b16 %v3056
        %v3130 = vunpack.c.h.b16 %v3056
        %v3131 = vunpack.c.l.b16 %v3057
        %v3132 = vunpack.c.h.b16 %v3057
        %v3133 = vunpack.c.l.b16 %v3058
        %v3134 = vunpack.c.h.b16 %v3058
        %v3135 = vunpack.c.l.b16 %v3059
        %v3136 = vunpack.c.h.b16 %v3059
        %v3137 = vunpack.c.l.b16 %v3060
        %v3138 = vunpack.c.h.b16 %v3060
        %v3139 = vunpack.c.l.b16 %v3061
        %v3140 = vunpack.c.h.b16 %v3061
        %v3141 = vunpack.c.l.b16 %v3062
        %v3142 = vunpack.c.h.b16 %v3062
        %v3143 = vunpack.c.l.b16 %v3063
        %v3144 = vunpack.c.h.b16 %v3063
        %v3145 = vunpack.c.l.b16 %v3064
        %v3146 = vunpack.c.h.b16 %v3064
        %v3147 = vunpack.c.l.b16 %v3065
        %v3148 = vunpack.c.h.b16 %v3065
        %v3149 = vunpack.c.l.b16 %v3066
        %v3150 = vunpack.c.h.b16 %v3066
        %v3151 = vunpack.c.l.b16 %v3067
        %v3152 = vunpack.c.h.b16 %v3067
        %v3153 = vunpack.c.l.b16 %v3068
        %v3154 = vunpack.c.h.b16 %v3068
        %v3155 = vunpack.c.l.b16 %v3069
        %v3156 = vunpack.c.h.b16 %v3069
        %v3157 = vunpack.c.l.b16 %v3070
        %v3158 = vunpack.c.h.b16 %v3070
        %v3159 = vunpack.c.l.b16 %v3071
        %v3160 = vunpack.c.h.b16 %v3071
        %v3161 = vunpack.c.l.b16 %v3072
        %v3162 = vunpack.c.h.b16 %v3072
        %v3163 = vunpack.c.l.b16 %v3073
        %v3164 = vunpack.c.h.b16 %v3073
        %v3165 = vunpack.c.l.b16 %v3074
        %v3166 = vunpack.c.h.b16 %v3074
        %v3167 = vunpack.c.l.b16 %v3075
        %v3168 = vunpack.c.h.b16 %v3075
        %v3169 = vunpack.c.l.b16 %v3076
        %v3170 = vunpack.c.h.b16 %v3076
        %v3171 = vunpack.c.l.b16 %v3077
        %v3172 = vunpack.c.h.b16 %v3077
        %v3173 = vunpack.c.l.b16 %v3078
        %v3174 = vunpack.c.h.b16 %v3078
        %v3175 = vpack.c.b16 %v3115, %v3111
        %v3176 = vpack.c.b16 %v3116, %v3112
        %v3177 = vpack.c.b16 %v3117, %v3113
        %v3178 = vpack.c.b16 %v3118, %v3114
        %v3179 = vpack.c.b16 %v3123, %v3119
        %v3180 = vpack.c.b16 %v3124, %v3120
        %v3181 = vpack.c.b16 %v3125, %v3121
        %v3182 = vpack.c.b16 %v3126, %v3122
        %v3183 = vpack.c.b16 %v3131, %v3127
        %v3184 = vpack.c.b16 %v3132, %v3128
        %v3185 = vpack.c.b16 %v3133, %v3129
        %v3186 = vpack.c.b16 %v3134, %v3130
        %v3187 = vpack.c.b16 %v3139, %v3135
        %v3188 = vpack.c.b16 %v3140, %v3136
        %v3189 = vpack.c.b16 %v3141, %v3137
        %v3190 = vpack.c.b16 %v3142, %v3138
        %v3191 = vpack.c.b16 %v3147, %v3143
        %v3192 = vpack.c.b16 %v3148, %v3144
        %v3193 = vpack.c.b16 %v3149, %v3145
        %v3194 = vpack.c.b16 %v3150, %v3146
        %v3195 = vpack.c.b16 %v3155, %v3151
        %v3196 = vpack.c.b16 %v3156, %v3152
        %v3197 = vpack.c.b16 %v3157, %v3153
        %v3198 = vpack.c.b16 %v3158, %v3154
        %v3199 = vpack.c.b16 %v3163, %v3159
        %v3200 = vpack.c.b16 %v3164, %v3160
        %v3201 = vpack.c.b16 %v3165, %v3161
        %v3202 = vpack.c.b16 %v3166, %v3162
        %v3203 = vpack.c.b16 %v3171, %v3167
        %v3204 = vpack.c.b16 %v3172, %v3168
        %v3205 = vpack.c.b16 %v3173, %v3169
        %v3206 = vpack.c.b16 %v3174, %v3170
        %3239 = vmatprep.subr.bf16.mxu0 %v3176
        %3240 = vmatpush1.bf16.msra.mxu0 %v3175
        %3241 = vmatprep.subr.bf16.mxu0 %v3180
        %3242 = vmatpush1.bf16.msra.mxu0 %v3179
        %3243 = vmatprep.subr.bf16.mxu0 %v3184
        %3244 = vmatpush1.bf16.msra.mxu0 %v3183
        %3245 = vmatprep.subr.bf16.mxu0 %v3188
        %3246 = vmatpush1.bf16.msra.mxu0 %v3187
        %3247 = vmatprep.subr.bf16.mxu0 %v3192
        %3248 = vmatpush1.bf16.msra.mxu0 %v3191
        %3249 = vmatprep.subr.bf16.mxu0 %v3196
        %3250 = vmatpush1.bf16.msra.mxu0 %v3195
        %3251 = vmatprep.subr.bf16.mxu0 %v3200
        %3252 = vmatpush1.bf16.msra.mxu0 %v3199
        %3253 = vmatprep.subr.bf16.mxu0 %v3204
        %3254 = vmatpush1.bf16.msra.mxu0 %v3203
        %3255 = vmatprep.subr.bf16.mxu0 0
        %3256 = vmatpush1.bf16.msra.mxu0 0
        %3257 = vmatprep.subr.bf16.mxu0 0
        %3258 = vmatpush1.bf16.msra.mxu0 0
        %3259 = vmatprep.subr.bf16.mxu0 0
        %3260 = vmatpush1.bf16.msra.mxu0 0
        %3261 = vmatprep.subr.bf16.mxu0 0
        %3262 = vmatpush1.bf16.msra.mxu0 0
        %3263 = vmatprep.subr.bf16.mxu0 0
        %3264 = vmatpush1.bf16.msra.mxu0 0
        %3265 = vmatprep.subr.bf16.mxu0 0
        %3266 = vmatpush1.bf16.msra.mxu0 0
        %3267 = vmatprep.subr.bf16.mxu0 0
        %3268 = vmatpush1.bf16.msra.mxu0 0
        %3269 = vmatprep.subr.bf16.mxu0 0
        %3270 = vmatpush1.bf16.msra.mxu0 0
        %3271 = vmatprep.mubr.bf16.mxu0 0
        %3272 = vmatmul.mubr.bf16.gmra.mrb[0].mxu0 %v3046
        %v3273 = vpop.f32.mrb[0].mxu0
        %v3274 = vadd.f32 0.0, %v3273
        %v3275 = vpop.f32.mrb[0].mxu0
        %v3276 = vadd.f32 0.0, %v3275
        %v3277 = vpop.f32.mrb[0].mxu0
        %v3278 = vpop.f32.mrb[0].mxu0
        %3279 = vdwg.mxu0
        %3280 = vmatprep.subr.bf16.mxu0 %v3178
        %3281 = vmatpush1.bf16.msra.mxu0 %v3177
        %3282 = vmatprep.subr.bf16.mxu0 %v3182
        %3283 = vmatpush1.bf16.msra.mxu0 %v3181
        %3284 = vmatprep.subr.bf16.mxu0 %v3186
        %3285 = vmatpush1.bf16.msra.mxu0 %v3185
        %3286 = vmatprep.subr.bf16.mxu0 %v3190
        %3287 = vmatpush1.bf16.msra.mxu0 %v3189
        %3288 = vmatprep.subr.bf16.mxu0 %v3194
        %3289 = vmatpush1.bf16.msra.mxu0 %v3193
        %3290 = vmatprep.subr.bf16.mxu0 %v3198
        %3291 = vmatpush1.bf16.msra.mxu0 %v3197
        %3292 = vmatprep.subr.bf16.mxu0 %v3202
        %3293 = vmatpush1.bf16.msra.mxu0 %v3201
        %3294 = vmatprep.subr.bf16.mxu0 %v3206
        %3295 = vmatpush1.bf16.msra.mxu0 %v3205
        %3296 = vmatprep.subr.bf16.mxu0 0
        %3297 = vmatpush1.bf16.msra.mxu0 0
        %3298 = vmatprep.subr.bf16.mxu0 0
        %3299 = vmatpush1.bf16.msra.mxu0 0
        %3300 = vmatprep.subr.bf16.mxu0 0
        %3301 = vmatpush1.bf16.msra.mxu0 0
        %3302 = vmatprep.subr.bf16.mxu0 0
        %3303 = vmatpush1.bf16.msra.mxu0 0
        %3304 = vmatprep.subr.bf16.mxu0 0
        %3305 = vmatpush1.bf16.msra.mxu0 0
        %3306 = vmatprep.subr.bf16.mxu0 0
        %3307 = vmatpush1.bf16.msra.mxu0 0
        %3308 = vmatprep.subr.bf16.mxu0 0
        %3309 = vmatpush1.bf16.msra.mxu0 0
        %3310 = vmatprep.subr.bf16.mxu0 0
        %3311 = vmatpush1.bf16.msra.mxu0 0
        %3312 = vmatprep.mubr.bf16.mxu0 0
        %3313 = vmatmul.mubr.bf16.gmra.mrb[0].mxu0 %v3046
        %v3314 = vpop.f32.mrb[0].mxu0
        %v3315 = vadd.f32 0.0, %v3314
        %v3316 = vpop.f32.mrb[0].mxu0
        %v3317 = vadd.f32 0.0, %v3316
        %v3318 = vpop.f32.mrb[0].mxu0
        %v3319 = vpop.f32.mrb[0].mxu0
        %3320 = vdwg.mxu0
        %v3321 = vadd.f32 %v3040, %v3274
        %v3322 = vadd.f32 %v3041, %v3276
        %v3323 = vadd.f32 %v3042, %v3315
        %v3324 = vadd.f32 %v3043, %v3317
        %v3325 = vmul.f32 %v3321, 0.5
        %v3326 = vtanh.pop %v3325
        %v3327 = vmul.f32 %v3326, 0.5
        %v3328 = vadd.f32 %v3327, 0.5
        %v3329 = vmul.f32 %v3322, 0.5
        %v3330 = vtanh.pop %v3329
        %v3331 = vmul.f32 %v3330, 0.5
        %v3332 = vadd.f32 %v3331, 0.5
        %v3333 = vtanh.pop %v3323
        %v3334 = vmul.f32 %v3324, 0.5
        %v3335 = vtanh.pop %v3334
        %v3336 = vmul.f32 %v3335, 0.5
        %v3337 = vadd.f32 %v3336, 0.5
        %v3338 = vmul.f32 %v3332, %v3045
        %v3339 = vmul.f32 %v3328, %v3333
        %v3340 = vadd.f32 %v3338, %v3339
        %v3341 = vtanh.pop %v3340
        %v3342 = vmul.f32 %v3337, %v3341
        %s3343 = sadd.s32 %s761, %s3036
        %v3344 = vstv %s3343
        %vm3345 = vcmp.lt.s32.totalorder %v3344, %v762
        %v3346 = vsel %vm3345, 1, 0
        %3347 = vset.pattern.permute.xlu0 0
        %3348 = vperm.xlu0 %3347, %v3346
        %v3349 = vpop.permute.xlu0 %3348
        %vm3350 = vcmp.eq.s32.totalorder %v3349, 1
        %v3351 = vsel %vm3350, %v3342, %v3044
        %3352 = vst [vmem:[#allocation3] sm:$0xff] %v3351
        %v3353 = vsel %vm3350, %v3340, %v3045
        %3354 = vst [vmem:[#allocation4] sm:$0xff] %v3353
        %v3355 = vsel %vm3350, %v3342, 0.0
        %v3356 = vpack.c.bf16 %v3355, %v3355
        %s3357 = smul.addr %s3036, 4
        %s3358 = scalar_lea.vmem %s424, %s3357 [#allocation11]
        %3359 = vst [vmem:[%s3358] sm:$0xf] %v3356
        // Predicated region
        $region57: #{tpu_custom_call.1} parent=39 // pred_check
          %p3360 = pneg %p454
        $region58: #{tpu_custom_call.1} parent=39 // pred_check_branch
          %3362 = sbr.rel (%p3360) target = $region60
        $region59: #{tpu_custom_call.1} parent=39 // pred_region
          %v3363 = vld [vmem:[#allocation3] sm:$0xff]
          %3364 = vst [vmem:[%s431] sm:$0xff] %v3363
          %v3365 = vld [vmem:[#allocation4] sm:$0xff]
          %3366 = vst [vmem:[%s438] sm:$0xff] %v3365
        $region60: #{tpu_custom_call.1} parent=39 // pred_fallthru
          _
        %s3367 = sand.u32 %s194, 1
        %s3368 = scalar_lea.sflag [#allocation7], %s3367
        %s3369 = sand.u32 %s194, 1
        %s3370 = smul.addr %s3369, 32
        %s3371 = scalar_lea.vmem [#allocation11], %s3370
        %s3372 = sand.u32 %s31, 1
        %s3373 = scalar_lea.sflag [#allocation13], %s3372
        %s3374 = sand.u32 %s220, 1
        %s3375 = smul.addr %s3374, 8
        %s3376 = scalar_lea.vmem [#allocation12], %s3375
        %s3377 = sand.u32 %s31, 1
        %s3378 = scalar_lea.sflag [#allocation13], %s3377
        %s3379 = sand.u32 %s246, 1
        %s3380 = smul.addr %s3379, 8
        %s3381 = scalar_lea.vmem [#allocation14], %s3380
        // Predicated region
        $region61: #{tpu_custom_call.1} parent=39 // pred_check
          %p3382 = pneg %p204
        $region62: #{tpu_custom_call.1} parent=39 // pred_check_branch
          %3384 = sbr.rel (%p3382) target = $region64
        $region63: #{tpu_custom_call.1} parent=39 // pred_region
          %s3385 = smul.u32 %s36, 2
          %s3386 = ssub.s32 0, %s3385
          %s3387 = smul.u32 %s35, %s3386
          %s3388 = sadd.s32 %s36, %s3387
          %s3389 = smul.u32 8, %s3388
          %s3391 = ssub.s32 512, 512
          %3392 = vsyncadd %s3368, %s3391
          %s3393 = smul.addr %s35, 8
          %s3394 = sadd.s32 %s3389, %s3393
          %s3395 = smul.addr %s3394, 64
          %s3396 = scalar_lea.hbm %s5, %s3395
          %s3397 = sshll.u32 %s3371, 4
          %s3398 = int_to_ptr.vmem [resolvable:$true] %s3397
          %3403 = dma.vmem_to_hbm [thread:$0]  %s3398, 512, %s3396, %s3368, 64, 64, 4
        $region64: #{tpu_custom_call.1} parent=39 // pred_fallthru
          _
        // Predicated region
        $region65: #{tpu_custom_call.1} parent=39 // pred_check
          %p3404 = pneg %p230
        $region66: #{tpu_custom_call.1} parent=39 // pred_check_branch
          %3406 = sbr.rel (%p3404) target = $region68
        $region67: #{tpu_custom_call.1} parent=39 // pred_region
          %s3408 = ssub.s32 128, 128
          %3409 = vsyncadd %s3373, %s3408
          %s3410 = smul.addr %s35, 128
          %s3411 = scalar_lea.hbm %s6, %s3410
          %s3413 = sshll.u32 %s3376, 4
          %s3414 = int_to_ptr.vmem [resolvable:$true] %s3413
          %3416 = dma.vmem_to_hbm [thread:$0]  %s3414, 128, %s3411, %s3373
        $region68: #{tpu_custom_call.1} parent=39 // pred_fallthru
          _
        // Predicated region
        $region69: #{tpu_custom_call.1} parent=39 // pred_check
          %p3417 = pneg %p256
        $region70: #{tpu_custom_call.1} parent=39 // pred_check_branch
          %3419 = sbr.rel (%p3417) target = $region72
        $region71: #{tpu_custom_call.1} parent=39 // pred_region
          %s3421 = ssub.s32 128, 128
          %3422 = vsyncadd %s3378, %s3421
          %s3423 = smul.addr %s35, 128
          %s3424 = scalar_lea.hbm %s7, %s3423
          %s3426 = sshll.u32 %s3381, 4
          %s3427 = int_to_ptr.vmem [resolvable:$true] %s3426
          %3429 = dma.vmem_to_hbm [thread:$0]  %s3427, 128, %s3424, %s3378
        $region72: #{tpu_custom_call.1} parent=39 // pred_fallthru
          _
      $region40: #{tpu_custom_call.1} parent=5 // pred_fallthru
        _
      %p3430 = scmp.le.s32.totalorder 2, %s26
      // Predicated region
      $region73: #{tpu_custom_call.1} parent=5 // pred_check
        %p3431 = pneg %p3430
      $region74: #{tpu_custom_call.1} parent=5 // pred_check_branch
        %3433 = sbr.rel (%p3431) target = $region76
      $region75: #{tpu_custom_call.1} parent=5 // pred_region
        %s3434 = ssub.s32 %s26, 2
        // Predicated region
        $region77: #{tpu_custom_call.1} parent=75 // pred_check
          %p3435 = pneg %p210
        $region78: #{tpu_custom_call.1} parent=75 // pred_check_branch
          %3437 = sbr.rel (%p3435) target = $region80
        $region79: #{tpu_custom_call.1} parent=75 // pred_region
          %s3438 = sand.u32 %s195, 1
          %s3439 = scalar_lea.sflag [#allocation7], %s3438
          %s3440 = sand.u32 %s195, 1
          %s3441 = smul.addr %s3440, 32
          %s3442 = scalar_lea.vmem [#allocation11], %s3441
          %3443 = dma.done %s3439, 512
        $region80: #{tpu_custom_call.1} parent=75 // pred_fallthru
          _
        // Predicated region
        $region81: #{tpu_custom_call.1} parent=75 // pred_check
          %p3444 = pneg %p236
        $region82: #{tpu_custom_call.1} parent=75 // pred_check_branch
          %3446 = sbr.rel (%p3444) target = $region84
        $region83: #{tpu_custom_call.1} parent=75 // pred_region
          %s3447 = sand.u32 %s32, 1
          %s3448 = scalar_lea.sflag [#allocation13], %s3447
          %s3449 = sand.u32 %s221, 1
          %s3450 = smul.addr %s3449, 8
          %s3451 = scalar_lea.vmem [#allocation12], %s3450
          %3452 = dma.done %s3448, 128
        $region84: #{tpu_custom_call.1} parent=75 // pred_fallthru
          _
        // Predicated region
        $region85: #{tpu_custom_call.1} parent=75 // pred_check
          %p3453 = pneg %p262
        $region86: #{tpu_custom_call.1} parent=75 // pred_check_branch
          %3455 = sbr.rel (%p3453) target = $region88
        $region87: #{tpu_custom_call.1} parent=75 // pred_region
          %s3456 = sand.u32 %s32, 1
          %s3457 = scalar_lea.sflag [#allocation13], %s3456
          %s3458 = sand.u32 %s247, 1
          %s3459 = smul.addr %s3458, 8
          %s3460 = scalar_lea.vmem [#allocation14], %s3459
          %3461 = dma.done %s3457, 128
        $region88: #{tpu_custom_call.1} parent=75 // pred_fallthru
          _
      $region76: #{tpu_custom_call.1} parent=5 // pred_fallthru
        _
    $region6: #{tpu_custom_call.1} parent=1 // loop_footer
      %s30 = sadd.s32 1, %s26
    $region7: #{tpu_custom_call.1} parent=1 // loop_footer_branch
      %25 = sbr.rel target = $region3
    $region8: #{tpu_custom_call.1} parent=1 // loop_exit
      _
    %3462 = vsyncpa [#allocation6], 1
    %s3463 = scalar_lea.sflag [#allocation6], 1
    %3464 = vsyncpa %s3463, 1
    %3465 = vsyncpa [#allocation9], 1
    %s3466 = scalar_lea.sflag [#allocation9], 1
    %3467 = vsyncpa %s3466, 1
    %3468 = vsyncpa [#allocation7], 1
    %s3469 = scalar_lea.sflag [#allocation7], 1
    %3470 = vsyncpa %s3469, 1
    %3471 = vsyncpa [#allocation13], 1
    %s3472 = scalar_lea.sflag [#allocation13], 1
    %3473 = vsyncpa %s3472, 1

</llo_original>
